<compile_context>
chip_gen: v7x
topology: tpu7x:2x2x1
jax: 0.10.0
libtpu: 0.0.40
codegen_flags: <defaults>
</compile_context>

<pallas_src>
import functools

import jax
import jax.numpy as jnp
from jax.experimental import pallas as pl
from jax.experimental.pallas import tpu as pltpu


# ----------------------------------------------------------------------------
# In-kernel im2col (shared by the conv kernel and the fused tail kernel)
# ----------------------------------------------------------------------------
def _im2col_patch(top_ref, body_ref, bot_ref, compute_dtype):
    """Build the (TH*W, 9*Cin) im2col patch for a 'same' 3x3 conv of one
    (TH, W) row stripe.

    top_ref/bot_ref hold the single row above/below the stripe.  Their
    index_maps clamp at the image border; they are zeroed here for the
    first/last stripe, which realizes the zero padding in H without any
    padded copy of the activation in HBM.  W zero-padding is a zero-column
    concat in VMEM.
    """
    i = pl.program_id(1)
    nt = pl.num_programs(1)
    TH, W, Cin = body_ref.shape

    body = body_ref[...].astype(compute_dtype)
    top = top_ref[...].astype(compute_dtype) * (i > 0).astype(compute_dtype)
    bot = bot_ref[...].astype(compute_dtype) * (i < nt - 1).astype(compute_dtype)

    x = jnp.concatenate([top, body, bot], axis=0)           # (TH+2, W, Cin)
    zcol = jnp.zeros((TH + 2, 1, Cin), compute_dtype)
    xp = jnp.concatenate([zcol, x, zcol], axis=1)           # (TH+2, W+2, Cin)

    # Tap order k = ky*3 + kx matches the (9*Cin, Cout) weight slab layout.
    taps = [xp[ky:ky + TH, kx:kx + W, :]
            for ky in range(3) for kx in range(3)]
    patch = jnp.concatenate(taps, axis=-1)                  # (TH, W, 9*Cin)
    return patch.reshape(TH * W, 9 * Cin)


# ----------------------------------------------------------------------------
# Kernels
# ----------------------------------------------------------------------------
def conv3x3_kernel(top_ref, body_ref, bot_ref, w_ref, b_ref, o_ref, *, relu):
    """'same' 3x3 conv of one (TH, W) row stripe, single im2col matmul.

    top/body/bot: (1|TH, W, Cin) stripe + halo rows of the unpadded input
    w_ref: (9*Cin, Cout) bf16     b_ref: (1, Cout) f32
    o_ref: (TH*W, Cout)           (flat (H*W) view -> no relayout at store)
    """
    patch = _im2col_patch(top_ref, body_ref, bot_ref, w_ref.dtype)
    acc = jnp.dot(patch, w_ref[...], preferred_element_type=jnp.float32)
    acc = acc + b_ref[...]
    if relu:
        acc = jnp.maximum(acc, 0.0)
    o_ref[...] = acc.astype(o_ref.dtype)


def conv_head_temper_kernel(top_ref, body_ref, bot_ref, lg_ref, w_ref, b_ref,
                            wh_ref, bh_ref, o_ref, *, eps):
    """Fused: last 3x3 conv + ReLU + 1x1 head (Cout=1) + temperature scaling.

    top/body/bot: stripe + halos of the previous hidden activation (bf16)
    lg_ref: (TH*W, C) f32 backbone logits
    w_ref:  (9*Cin, Chid) bf16   b_ref: (1, Chid) f32
    wh_ref: (1, Chid) f32        bh_ref: (1, 1) f32
    o_ref:  (TH*W, C) f32 tempered logits
    """
    patch = _im2col_patch(top_ref, body_ref, bot_ref, w_ref.dtype)
    h = jnp.dot(patch, w_ref[...], preferred_element_type=jnp.float32)
    h = jnp.maximum(h + b_ref[...], 0.0)                    # (TH*W, Chid) f32
    # Cout=1 head as a VPU multiply + lane reduction (no width-1 MXU matmul,
    # and the (.., 1)-wide temperature map never touches HBM).
    t = jnp.sum(h * wh_ref[...], axis=-1, keepdims=True) + bh_ref[...]
    temp = jnp.maximum(t + 1.0, 0.0) + eps                  # relu(t + 1) + eps
    inv = pl.reciprocal(temp, approx=True)                  # EUP slot
    inv = inv * (2.0 - temp * inv)                          # one Newton step
    o_ref[...] = (lg_ref[...] * inv).astype(o_ref.dtype)


# ----------------------------------------------------------------------------
# pallas_call wrappers
# ----------------------------------------------------------------------------
def _stripe_specs(H, W, Cin, tile_h):
    """Three BlockSpecs over the SAME unpadded (N, H, W, Cin) array:
    1-row top halo (clamped at row 0), body stripe, 1-row bottom halo
    (clamped at row H-1).  Border halos are zeroed inside the kernel."""
    return [
        pl.BlockSpec((None, 1, W, Cin),
                     lambda n, i: (n, jnp.maximum(i * tile_h - 1, 0), 0, 0)),
        pl.BlockSpec((None, tile_h, W, Cin), lambda n, i: (n, i, 0, 0)),
        pl.BlockSpec((None, 1, W, Cin),
                     lambda n, i: (n, jnp.minimum((i + 1) * tile_h, H - 1),
                                   0, 0)),
    ]


def conv3x3_pallas(x, w2d, b, *, relu, tile_h, out_dtype, vmem_limit_bytes):
    """x: (N,H,W,Cin), w2d: (9*Cin,Cout) bf16, b: (1,Cout) -> (N,H,W,Cout)."""
    N, H, W, Cin = x.shape
    Cout = w2d.shape[-1]
    assert H % tile_h == 0, (H, tile_h)
    assert W % 8 == 0 and (tile_h * W) % 8 == 0, (tile_h, W)
    n_tiles = H // tile_h
    kernel = functools.partial(conv3x3_kernel, relu=relu)
    out = pl.pallas_call(
        kernel,
        # Output viewed as (N, H*W, Cout): kernel stores the matmul result
        # with no relayout; HBM layout is identical (reshape below is free).
        out_shape=jax.ShapeDtypeStruct((N, H * W, Cout), out_dtype),
        grid_spec=pltpu.PrefetchScalarGridSpec(
            num_scalar_prefetch=0,
            grid=(N, n_tiles),
            in_specs=_stripe_specs(H, W, Cin, tile_h) + [
                pl.BlockSpec((9 * Cin, Cout), lambda n, i: (0, 0)),
                pl.BlockSpec((1, Cout), lambda n, i: (0, 0)),
            ],
            out_specs=pl.BlockSpec((None, tile_h * W, Cout),
                                   lambda n, i: (n, i, 0)),
        ),
        compiler_params=pltpu.CompilerParams(
            dimension_semantics=("parallel", "parallel"),
            vmem_limit_bytes=vmem_limit_bytes),
    )(x, x, x, w2d, b)
    return out.reshape(N, H, W, Cout)


def conv_head_temper_pallas(h, logits, w2d, b, w_head, b_head, *, eps, tile_h,
                            vmem_limit_bytes):
    """Fused last conv + head + temper.  h: (N,H,W,Chid_in) bf16,
    logits: (N,H,W,C) f32 -> tempered logits (N,H,W,C) f32."""
    N, H, W, Cin = h.shape
    C = logits.shape[-1]
    Chid = w2d.shape[-1]
    assert H % tile_h == 0
    n_tiles = H // tile_h
    lg_flat = logits.reshape(N, H * W, C)
    kernel = functools.partial(conv_head_temper_kernel, eps=eps)
    out = pl.pallas_call(
        kernel,
        out_shape=jax.ShapeDtypeStruct((N, H * W, C), jnp.float32),
        grid_spec=pltpu.PrefetchScalarGridSpec(
            num_scalar_prefetch=0,
            grid=(N, n_tiles),
            in_specs=_stripe_specs(H, W, Cin, tile_h) + [
                pl.BlockSpec((None, tile_h * W, C), lambda n, i: (n, i, 0)),
                pl.BlockSpec((9 * Cin, Chid), lambda n, i: (0, 0)),
                pl.BlockSpec((1, Chid), lambda n, i: (0, 0)),
                pl.BlockSpec((1, Chid), lambda n, i: (0, 0)),
                pl.BlockSpec((1, 1), lambda n, i: (0, 0)),
            ],
            out_specs=pl.BlockSpec((None, tile_h * W, C),
                                   lambda n, i: (n, i, 0)),
        ),
        compiler_params=pltpu.CompilerParams(
            dimension_semantics=("parallel", "parallel"),
            vmem_limit_bytes=vmem_limit_bytes),
    )(h, h, h, lg_flat, w2d, b, w_head, b_head)
    return out.reshape(N, H, W, C)


# ----------------------------------------------------------------------------
# VMEM sizing (layout- and generation-aware)
# ----------------------------------------------------------------------------
def _round_up(x, m):
    return ((x + m - 1) // m) * m


def _block_bytes(shape, itemsize):
    """(8,128)-padded VMEM footprint of one block (sublane tile depends on
    the element width: 8 for 4B, 16 for 2B, 32 for 1B)."""
    if len(shape) == 1:
        shape = (1,) + tuple(shape)
    sub = {4: 8, 2: 16, 1: 32}.get(itemsize, 8)
    lead = 1
    for d in shape[:-2]:
        lead *= int(d)
    return lead * _round_up(shape[-2], sub) * _round_up(shape[-1], 128) * itemsize


def _vmem_config():
    """(tile budget bytes, scoped vmem_limit_bytes) per TPU generation."""
    kind = ""
    try:
        kind = jax.devices()[0].device_kind.lower()
    except Exception:  # pragma: no cover - defensive
        pass
    if "v6" in kind:            # 128 MiB physical VMEM
        return 48 << 20, 96 << 20
    if "v5" in kind:            # 128 MiB physical VMEM (v5e: 1 vst slot)
        return 40 << 20, 80 << 20
    # v7x (64 MiB physical per TC) and unknown devices: stay conservative.
    return 20 << 20, 40 << 20


def _pick_tile_h(N, H, W, c_max, budget_bytes):
    """Largest divisor of H whose (8,128)-padded, double-buffered working set
    fits the budget, while keeping >=2 total grid steps so both v7x
    TensorCores / the megacore split stay busy."""
    def footprint(th):
        fb = 0
        fb += 2 * _block_bytes((th, W, c_max), 4)          # body stripe (dbl)
        fb += 2 * 2 * _block_bytes((1, W, c_max), 4)       # halo rows (dbl)
        fb += 2 * 2 * _block_bytes((th * W, c_max), 4)     # logits in + out (dbl)
        fb += _block_bytes((th + 2, W + 2, c_max), 2)      # padded stripe (bf16)
        fb += _block_bytes((th * W, 9 * c_max), 2)         # im2col patch (bf16)
        fb += _block_bytes((th * W, c_max), 4)             # f32 matmul result
        return fb
    divisors = [t for t in range(1, H + 1)
                if H % t == 0 and (t * W) % 8 == 0]
    fitting = [t for t in divisors if footprint(t) <= budget_bytes]
    multi = [t for t in fitting if N * (H // t) >= 2]
    pool = multi or fitting or divisors or [1]
    return max(pool)


# ----------------------------------------------------------------------------
# Parameter setup / model
# ----------------------------------------------------------------------------
def _init_conv3(key, cin, cout):
    kw, kb = jax.random.split(key)
    w_hwio = jax.random.normal(kw, (3, 3, cin, cout), jnp.float32) / jnp.sqrt(
        9.0 * cin)
    b = 0.01 * jax.random.normal(kb, (1, cout), jnp.float32)
    # bf16 weight slab for the kernels, row index = (ky*3 + kx)*Cin + c.
    w2d = w_hwio.astype(jnp.bfloat16).reshape(9 * cin, cout)
    return w_hwio, w2d, b


def _init_head(key, cin):
    # Init keeps the initial temperature near 1.5, well clear of the
    # relu(t+1)+eps clip (start close to identity scaling).
    w = 0.1 * jax.random.normal(key, (1, cin), jnp.float32) / jnp.sqrt(float(cin))
    b = jnp.full((1, 1), 0.5, jnp.float32)
    return w, b


class LTSPallas:
    """Pallas LTS.forward (use_image=False, abs_output=False), NHWC layout."""

    def __init__(self, key, *, img_channels, num_classes, filters, eps=1e-6,
                 tile_h=None):
        assert len(filters) >= 1
        self.eps = float(eps)
        self.tile_h = tile_h
        self.vmem_budget, self.vmem_limit = _vmem_config()
        keys = jax.random.split(key, len(filters) + 2)
        # Stand-in backbone: single 3x3 conv img_channels -> num_classes.
        self.backbone = _init_conv3(keys[0], img_channels, num_classes)
        # Calibrator "UNet": 3x3 conv+ReLU stack; the last conv is fused with
        # the 1x1 head + temperature scaling into a single kernel.
        self.unet_convs = []
        cin = num_classes                  # use_image=False -> cal_input = logits
        for i, f in enumerate(filters):
            self.unet_convs.append(_init_conv3(keys[1 + i], cin, f))
            cin = f
        self.head = _init_head(keys[-1], cin)
        self._c_max = max([img_channels, num_classes] + list(filters))

    def __call__(self, x):
        """x: (N, H, W, img_channels) -> tempered logits (N, H, W, num_classes)."""
        N, H, W, _ = x.shape
        th = self.tile_h or _pick_tile_h(N, H, W, self._c_max, self.vmem_budget)

        _, w2d, b = self.backbone
        logits = conv3x3_pallas(x, w2d, b, relu=False, tile_h=th,
                                out_dtype=jnp.float32,
                                vmem_limit_bytes=self.vmem_limit)
        h = logits
        for _, w2d_i, b_i in self.unet_convs[:-1]:
            # Hidden activations stored bf16 -> half the inter-layer HBM traffic.
            h = conv3x3_pallas(h, w2d_i, b_i, relu=True, tile_h=th,
                               out_dtype=jnp.bfloat16,
                               vmem_limit_bytes=self.vmem_limit)
        _, w2d_last, b_last = self.unet_convs[-1]
        w_head, b_head = self.head
        return conv_head_temper_pallas(h, logits, w2d_last, b_last, w_head,
                                       b_head, eps=self.eps, tile_h=th,
                                       vmem_limit_bytes=self.vmem_limit)


# ----------------------------------------------------------------------------
# Pure-JAX reference (XLA convs) mirroring the kernel's bf16/f32 mixed precision
# ----------------------------------------------------------------------------
def _conv3_ref(x, w_hwio, b):
    out = jax.lax.conv_general_dilated(
        x.astype(jnp.bfloat16), w_hwio.astype(jnp.bfloat16),
        window_strides=(1, 1), padding="SAME",
        dimension_numbers=("NHWC", "HWIO", "NHWC"),
        preferred_element_type=jnp.float32,
        precision=jax.lax.Precision.HIGHEST)
    return out + b.reshape(1, 1, 1, -1)


def lts_ref(model, x):
    w_hwio, _, b = model.backbone
    logits = _conv3_ref(x, w_hwio, b)                        # f32
    h = logits
    for w_hwio, _, b in model.unet_convs[:-1]:
        h = jnp.maximum(_conv3_ref(h, w_hwio, b), 0.0).astype(jnp.bfloat16)
    w_hwio, _, b = model.unet_convs[-1]
    h = jnp.maximum(_conv3_ref(h, w_hwio, b), 0.0)           # f32 (fused tail)
    w_head, b_head = model.head
    t = jnp.sum(h * w_head.reshape(1, 1, 1, -1), axis=-1,
                keepdims=True) + b_head[0, 0]
    temp = jnp.maximum(t + 1.0, 0.0) + model.eps
    return logits / temp          # (N,H,W,1) temp broadcast over channel dim


# ----------------------------------------------------------------------------
if __name__ == "__main__":
    key = jax.random.PRNGKey(0)
    k_param, k_x = jax.random.split(key)

    N, H, W = 2, 16, 16
    img_channels, num_classes = 4, 4
    filters = [16, 16]            # small stand-in for the default [64, 64, 64, 64]

    model = LTSPallas(
        k_param,
        img_channels=img_channels,
        num_classes=num_classes,
        filters=filters,
        eps=1e-6,
        tile_h=8,                 # 2 row stripes per image -> exercises halo path
    )

    # NHWC input (PyTorch NCHW equivalent: (2, 4, 16, 16))
    x = jax.random.normal(k_x, (N, H, W, img_channels), jnp.float32)

    fwd = jax.jit(model.__call__)
    out = jax.block_until_ready(fwd(x))
    assert out.shape == (N, H, W, num_classes), out.shape

    ref = jax.block_until_ready(lts_ref(model, x))
    max_err = float(jnp.max(jnp.abs(out - ref)))
    assert jnp.allclose(out, ref, atol=2e-3, rtol=2e-3), max_err

    print("KERNEL_OK")
</pallas_src>

<mosaic_0001>
module attributes {stable_mosaic.version = 11 : i64} {
  func.func @conv_head_temper_kernel(%arg0: i32, %arg1: i32, %arg2: memref<1x1x16x16xbf16, #tpu.memory_space<vmem>>, %arg3: memref<1x8x16x16xbf16, #tpu.memory_space<vmem>>, %arg4: memref<1x1x16x16xbf16, #tpu.memory_space<vmem>>, %arg5: memref<1x128x4xf32, #tpu.memory_space<vmem>>, %arg6: memref<144x16xbf16, #tpu.memory_space<vmem>>, %arg7: memref<1x16xf32, #tpu.memory_space<vmem>>, %arg8: memref<1x16xf32, #tpu.memory_space<vmem>>, %arg9: memref<1x1xf32, #tpu.memory_space<vmem>>, %arg10: memref<1x128x4xf32, #tpu.memory_space<vmem>>) attributes {dimension_semantics = [#tpu.dimension_semantics<parallel>, #tpu.dimension_semantics<parallel>], iteration_bounds = array<i64: 2, 2>, scalar_prefetch = 0 : i64, scratch_operands = 0 : i64, tpu.core_type = #tpu.core_type<tc>, window_params = [{transform_indices = @transform_0, window_bounds = array<i64: 1, 1, 16, 16>}, {transform_indices = @transform_1, window_bounds = array<i64: 1, 8, 16, 16>}, {transform_indices = @transform_2, window_bounds = array<i64: 1, 1, 16, 16>}, {transform_indices = @transform_3, window_bounds = array<i64: 1, 128, 4>}, {pipeline_mode = #tpu.pipeline_mode<synchronous>, transform_indices = @transform_4, window_bounds = array<i64: 144, 16>}, {pipeline_mode = #tpu.pipeline_mode<synchronous>, transform_indices = @transform_5, window_bounds = array<i64: 1, 16>}, {pipeline_mode = #tpu.pipeline_mode<synchronous>, transform_indices = @transform_6, window_bounds = array<i64: 1, 16>}, {pipeline_mode = #tpu.pipeline_mode<synchronous>, transform_indices = @transform_7, window_bounds = array<i64: 1, 1>}, {transform_indices = @transform_8, window_bounds = array<i64: 1, 128, 4>}]} {
    %c0 = arith.constant 0 : index
    %c0_0 = arith.constant 0 : index
    %c0_1 = arith.constant 0 : index
    %c0_2 = arith.constant 0 : index
    %0 = vector.load %arg3[%c0, %c0_0, %c0_1, %c0_2] : memref<1x8x16x16xbf16, #tpu.memory_space<vmem>>, vector<1x8x16x16xbf16>
    %1 = vector.shape_cast %0 : vector<1x8x16x16xbf16> to vector<8x16x16xbf16>
    %c0_3 = arith.constant 0 : index
    %c0_4 = arith.constant 0 : index
    %c0_5 = arith.constant 0 : index
    %c0_6 = arith.constant 0 : index
    %2 = vector.load %arg2[%c0_3, %c0_4, %c0_5, %c0_6] : memref<1x1x16x16xbf16, #tpu.memory_space<vmem>>, vector<1x1x16x16xbf16>
    %3 = vector.shape_cast %2 : vector<1x1x16x16xbf16> to vector<1x16x16xbf16>
    %c0_i32 = arith.constant 0 : i32
    %4 = arith.cmpi sgt, %arg1, %c0_i32 : i32
    %5 = arith.extui %4 : i1 to i32
    %6 = arith.sitofp %5 : i32 to f32
    %7 = arith.truncf %6 : f32 to bf16
    %8 = vector.broadcast %7 : bf16 to vector<1x16x16xbf16>
    %9 = arith.mulf %3, %8 : vector<1x16x16xbf16>
    %c0_7 = arith.constant 0 : index
    %c0_8 = arith.constant 0 : index
    %c0_9 = arith.constant 0 : index
    %c0_10 = arith.constant 0 : index
    %10 = vector.load %arg4[%c0_7, %c0_8, %c0_9, %c0_10] : memref<1x1x16x16xbf16, #tpu.memory_space<vmem>>, vector<1x1x16x16xbf16>
    %11 = vector.shape_cast %10 : vector<1x1x16x16xbf16> to vector<1x16x16xbf16>
    %c1_i32 = arith.constant 1 : i32
    %12 = arith.cmpi slt, %arg1, %c1_i32 : i32
    %13 = arith.extui %12 : i1 to i32
    %14 = arith.sitofp %13 : i32 to f32
    %15 = arith.truncf %14 : f32 to bf16
    %16 = vector.broadcast %15 : bf16 to vector<1x16x16xbf16>
    %17 = arith.mulf %11, %16 : vector<1x16x16xbf16>
    %18 = tpu.concatenate %9, %1, %17 in 0 : vector<1x16x16xbf16>, vector<8x16x16xbf16>, vector<1x16x16xbf16> -> vector<10x16x16xbf16>
    %cst = arith.constant 0.000000e+00 : bf16
    %19 = vector.broadcast %cst : bf16 to vector<10x1x16xbf16>
    %20 = tpu.concatenate %19, %18, %19 in 1 : vector<10x1x16xbf16>, vector<10x16x16xbf16>, vector<10x1x16xbf16> -> vector<10x18x16xbf16>
    %21 = vector.extract_strided_slice %20 {offsets = [0, 0, 0], sizes = [8, 16, 16], strides = [1, 1, 1]} : vector<10x18x16xbf16> to vector<8x16x16xbf16>
    %22 = vector.extract_strided_slice %20 {offsets = [0, 1, 0], sizes = [8, 16, 16], strides = [1, 1, 1]} : vector<10x18x16xbf16> to vector<8x16x16xbf16>
    %23 = vector.extract_strided_slice %20 {offsets = [0, 2, 0], sizes = [8, 16, 16], strides = [1, 1, 1]} : vector<10x18x16xbf16> to vector<8x16x16xbf16>
    %24 = vector.extract_strided_slice %20 {offsets = [1, 0, 0], sizes = [8, 16, 16], strides = [1, 1, 1]} : vector<10x18x16xbf16> to vector<8x16x16xbf16>
    %25 = vector.extract_strided_slice %20 {offsets = [1, 1, 0], sizes = [8, 16, 16], strides = [1, 1, 1]} : vector<10x18x16xbf16> to vector<8x16x16xbf16>
    %26 = vector.extract_strided_slice %20 {offsets = [1, 2, 0], sizes = [8, 16, 16], strides = [1, 1, 1]} : vector<10x18x16xbf16> to vector<8x16x16xbf16>
    %27 = vector.extract_strided_slice %20 {offsets = [2, 0, 0], sizes = [8, 16, 16], strides = [1, 1, 1]} : vector<10x18x16xbf16> to vector<8x16x16xbf16>
    %28 = vector.extract_strided_slice %20 {offsets = [2, 1, 0], sizes = [8, 16, 16], strides = [1, 1, 1]} : vector<10x18x16xbf16> to vector<8x16x16xbf16>
    %29 = vector.extract_strided_slice %20 {offsets = [2, 2, 0], sizes = [8, 16, 16], strides = [1, 1, 1]} : vector<10x18x16xbf16> to vector<8x16x16xbf16>
    %30 = tpu.concatenate %21, %22, %23, %24, %25, %26, %27, %28, %29 in 2 : vector<8x16x16xbf16>, vector<8x16x16xbf16>, vector<8x16x16xbf16>, vector<8x16x16xbf16>, vector<8x16x16xbf16>, vector<8x16x16xbf16>, vector<8x16x16xbf16>, vector<8x16x16xbf16>, vector<8x16x16xbf16> -> vector<8x16x144xbf16>
    %31 = vector.shape_cast %30 : vector<8x16x144xbf16> to vector<128x144xbf16>
    %c0_11 = arith.constant 0 : index
    %c0_12 = arith.constant 0 : index
    %32 = vector.load %arg6[%c0_11, %c0_12] : memref<144x16xbf16, #tpu.memory_space<vmem>>, vector<144x16xbf16>
    %cst_13 = arith.constant dense<0.000000e+00> : vector<128x16xf32>
    %33 = tpu.matmul %31, %32, %cst_13 {dimension_numbers = #tpu.dot_dimension_numbers<[1], [0], [0], [1], [0, 0, 1, 1], [], []>} : vector<128x144xbf16>, vector<144x16xbf16>, vector<128x16xf32> -> vector<128x16xf32>
    %c0_14 = arith.constant 0 : index
    %c0_15 = arith.constant 0 : index
    %34 = vector.load %arg7[%c0_14, %c0_15] : memref<1x16xf32, #tpu.memory_space<vmem>>, vector<1x16xf32>
    %35 = vector.broadcast %34 : vector<1x16xf32> to vector<128x16xf32>
    %36 = arith.addf %33, %35 : vector<128x16xf32>
    %cst_16 = arith.constant 0.000000e+00 : f32
    %37 = vector.broadcast %cst_16 : f32 to vector<128x16xf32>
    %38 = arith.maximumf %36, %37 : vector<128x16xf32>
    %c0_17 = arith.constant 0 : index
    %c0_18 = arith.constant 0 : index
    %39 = vector.load %arg8[%c0_17, %c0_18] : memref<1x16xf32, #tpu.memory_space<vmem>>, vector<1x16xf32>
    %40 = vector.broadcast %39 : vector<1x16xf32> to vector<128x16xf32>
    %41 = arith.mulf %38, %40 : vector<128x16xf32>
    %cst_19 = arith.constant dense<0.000000e+00> : vector<128xf32>
    %42 = vector.multi_reduction <add>, %41, %cst_19 [1] : vector<128x16xf32> to vector<128xf32>
    %43 = vector.shape_cast %42 : vector<128xf32> to vector<128x1xf32>
    %c0_20 = arith.constant 0 : index
    %c0_21 = arith.constant 0 : index
    %44 = vector.load %arg9[%c0_20, %c0_21] : memref<1x1xf32, #tpu.memory_space<vmem>>, vector<1x1xf32>
    %45 = vector.broadcast %44 : vector<1x1xf32> to vector<128x1xf32>
    %46 = arith.addf %43, %45 : vector<128x1xf32>
    %cst_22 = arith.constant 1.000000e+00 : f32
    %47 = vector.broadcast %cst_22 : f32 to vector<128x1xf32>
    %48 = arith.addf %46, %47 : vector<128x1xf32>
    %cst_23 = arith.constant 0.000000e+00 : f32
    %49 = vector.broadcast %cst_23 : f32 to vector<128x1xf32>
    %50 = arith.maximumf %48, %49 : vector<128x1xf32>
    %cst_24 = arith.constant 9.99999997E-7 : f32
    %51 = vector.broadcast %cst_24 : f32 to vector<128x1xf32>
    %52 = arith.addf %50, %51 : vector<128x1xf32>
    %53 = tpu.reciprocal %52 {approx = true} : vector<128x1xf32> -> vector<128x1xf32>
    %54 = arith.mulf %52, %53 : vector<128x1xf32>
    %cst_25 = arith.constant 2.000000e+00 : f32
    %55 = vector.broadcast %cst_25 : f32 to vector<128x1xf32>
    %56 = arith.subf %55, %54 : vector<128x1xf32>
    %57 = arith.mulf %53, %56 : vector<128x1xf32>
    %c0_26 = arith.constant 0 : index
    %c0_27 = arith.constant 0 : index
    %c0_28 = arith.constant 0 : index
    %58 = vector.load %arg5[%c0_26, %c0_27, %c0_28] : memref<1x128x4xf32, #tpu.memory_space<vmem>>, vector<1x128x4xf32>
    %59 = vector.shape_cast %58 : vector<1x128x4xf32> to vector<128x4xf32>
    %60 = vector.broadcast %57 : vector<128x1xf32> to vector<128x4xf32>
    %61 = arith.mulf %59, %60 : vector<128x4xf32>
    %c0_29 = arith.constant 0 : index
    %c0_30 = arith.constant 0 : index
    %c0_31 = arith.constant 0 : index
    %62 = vector.load %arg10[%c0_29, %c0_30, %c0_31] : memref<1x128x4xf32, #tpu.memory_space<vmem>>, vector<1x128x4xf32>
    %63 = vector.shape_cast %62 : vector<1x128x4xf32> to vector<128x4xf32>
    %64 = vector.shape_cast %61 : vector<128x4xf32> to vector<1x128x4xf32>
    tpu.vector_store %arg10[%c0_29, %c0_30, %c0_31], %64 {strides = array<i32>} : memref<1x128x4xf32, #tpu.memory_space<vmem>>, vector<1x128x4xf32>,
    return
  }
  func.func @transform_0(%arg0: i32, %arg1: i32) -> (i32, i32, i32, i32) {
    %c8_i32 = arith.constant 8 : i32
    %0 = arith.muli %arg1, %c8_i32 : i32
    %c1_i32 = arith.constant 1 : i32
    %1 = arith.subi %0, %c1_i32 : i32
    %c0_i32 = arith.constant 0 : i32
    %2 = arith.maxsi %1, %c0_i32 : i32
    %c0_i32_0 = arith.constant 0 : i32
    %c0_i32_1 = arith.constant 0 : i32
    %c0_i32_2 = arith.constant 0 : i32
    return %arg0, %2, %c0_i32_0, %c0_i32_1 : i32, i32, i32, i32
  }
  func.func @transform_1(%arg0: i32, %arg1: i32) -> (i32, i32, i32, i32) {
    %c0_i32 = arith.constant 0 : i32
    %c0_i32_0 = arith.constant 0 : i32
    %c0_i32_1 = arith.constant 0 : i32
    return %arg0, %arg1, %c0_i32, %c0_i32_0 : i32, i32, i32, i32
  }
  func.func @transform_2(%arg0: i32, %arg1: i32) -> (i32, i32, i32, i32) {
    %c1_i32 = arith.constant 1 : i32
    %0 = arith.addi %arg1, %c1_i32 : i32
    %c8_i32 = arith.constant 8 : i32
    %1 = arith.muli %0, %c8_i32 : i32
    %c15_i32 = arith.constant 15 : i32
    %2 = arith.minsi %1, %c15_i32 : i32
    %c0_i32 = arith.constant 0 : i32
    %c0_i32_0 = arith.constant 0 : i32
    %c0_i32_1 = arith.constant 0 : i32
    return %arg0, %2, %c0_i32, %c0_i32_0 : i32, i32, i32, i32
  }
  func.func @transform_3(%arg0: i32, %arg1: i32) -> (i32, i32, i32) {
    %c0_i32 = arith.constant 0 : i32
    %c0_i32_0 = arith.constant 0 : i32
    return %arg0, %arg1, %c0_i32 : i32, i32, i32
  }
  func.func @transform_4(%arg0: i32, %arg1: i32) -> (i32, i32) {
    %c0_i32 = arith.constant 0 : i32
    %c0_i32_0 = arith.constant 0 : i32
    %c0_i32_1 = arith.constant 0 : i32
    return %c0_i32, %c0_i32_0 : i32, i32
  }
  func.func @transform_5(%arg0: i32, %arg1: i32) -> (i32, i32) {
    %c0_i32 = arith.constant 0 : i32
    %c0_i32_0 = arith.constant 0 : i32
    %c0_i32_1 = arith.constant 0 : i32
    return %c0_i32, %c0_i32_0 : i32, i32
  }
  func.func @transform_6(%arg0: i32, %arg1: i32) -> (i32, i32) {
    %c0_i32 = arith.constant 0 : i32
    %c0_i32_0 = arith.constant 0 : i32
    %c0_i32_1 = arith.constant 0 : i32
    return %c0_i32, %c0_i32_0 : i32, i32
  }
  func.func @transform_7(%arg0: i32, %arg1: i32) -> (i32, i32) {
    %c0_i32 = arith.constant 0 : i32
    %c0_i32_0 = arith.constant 0 : i32
    %c0_i32_1 = arith.constant 0 : i32
    return %c0_i32, %c0_i32_0 : i32, i32
  }
  func.func @transform_8(%arg0: i32, %arg1: i32) -> (i32, i32, i32) {
    %c0_i32 = arith.constant 0 : i32
    %c0_i32_0 = arith.constant 0 : i32
    return %arg0, %arg1, %c0_i32 : i32, i32, i32
  }
}

module attributes {stable_mosaic.version = 11 : i64} {
  func.func @conv3x3_kernel(%arg0: i32, %arg1: i32, %arg2: memref<1x1x16x4xf32, #tpu.memory_space<vmem>>, %arg3: memref<1x8x16x4xf32, #tpu.memory_space<vmem>>, %arg4: memref<1x1x16x4xf32, #tpu.memory_space<vmem>>, %arg5: memref<36x4xbf16, #tpu.memory_space<vmem>>, %arg6: memref<1x4xf32, #tpu.memory_space<vmem>>, %arg7: memref<1x128x4xf32, #tpu.memory_space<vmem>>) attributes {dimension_semantics = [#tpu.dimension_semantics<parallel>, #tpu.dimension_semantics<parallel>], iteration_bounds = array<i64: 2, 2>, scalar_prefetch = 0 : i64, scratch_operands = 0 : i64, tpu.core_type = #tpu.core_type<tc>, window_params = [{transform_indices = @transform_0, window_bounds = array<i64: 1, 1, 16, 4>}, {transform_indices = @transform_1, window_bounds = array<i64: 1, 8, 16, 4>}, {transform_indices = @transform_2, window_bounds = array<i64: 1, 1, 16, 4>}, {pipeline_mode = #tpu.pipeline_mode<synchronous>, transform_indices = @transform_3, window_bounds = array<i64: 36, 4>}, {pipeline_mode = #tpu.pipeline_mode<synchronous>, transform_indices = @transform_4, window_bounds = array<i64: 1, 4>}, {transform_indices = @transform_5, window_bounds = array<i64: 1, 128, 4>}]} {
    %c0 = arith.constant 0 : index
    %c0_0 = arith.constant 0 : index
    %c0_1 = arith.constant 0 : index
    %c0_2 = arith.constant 0 : index
    %0 = vector.load %arg3[%c0, %c0_0, %c0_1, %c0_2] : memref<1x8x16x4xf32, #tpu.memory_space<vmem>>, vector<1x8x16x4xf32>
    %1 = vector.shape_cast %0 : vector<1x8x16x4xf32> to vector<8x16x4xf32>
    %2 = arith.truncf %1 : vector<8x16x4xf32> to vector<8x16x4xbf16>
    %c0_3 = arith.constant 0 : index
    %c0_4 = arith.constant 0 : index
    %c0_5 = arith.constant 0 : index
    %c0_6 = arith.constant 0 : index
    %3 = vector.load %arg2[%c0_3, %c0_4, %c0_5, %c0_6] : memref<1x1x16x4xf32, #tpu.memory_space<vmem>>, vector<1x1x16x4xf32>
    %4 = vector.shape_cast %3 : vector<1x1x16x4xf32> to vector<1x16x4xf32>
    %5 = arith.truncf %4 : vector<1x16x4xf32> to vector<1x16x4xbf16>
    %c0_i32 = arith.constant 0 : i32
    %6 = arith.cmpi sgt, %arg1, %c0_i32 : i32
    %7 = arith.extui %6 : i1 to i32
    %8 = arith.sitofp %7 : i32 to f32
    %9 = arith.truncf %8 : f32 to bf16
    %10 = vector.broadcast %9 : bf16 to vector<1x16x4xbf16>
    %11 = arith.mulf %5, %10 : vector<1x16x4xbf16>
    %c0_7 = arith.constant 0 : index
    %c0_8 = arith.constant 0 : index
    %c0_9 = arith.constant 0 : index
    %c0_10 = arith.constant 0 : index
    %12 = vector.load %arg4[%c0_7, %c0_8, %c0_9, %c0_10] : memref<1x1x16x4xf32, #tpu.memory_space<vmem>>, vector<1x1x16x4xf32>
    %13 = vector.shape_cast %12 : vector<1x1x16x4xf32> to vector<1x16x4xf32>
    %14 = arith.truncf %13 : vector<1x16x4xf32> to vector<1x16x4xbf16>
    %c1_i32 = arith.constant 1 : i32
    %15 = arith.cmpi slt, %arg1, %c1_i32 : i32
    %16 = arith.extui %15 : i1 to i32
    %17 = arith.sitofp %16 : i32 to f32
    %18 = arith.truncf %17 : f32 to bf16
    %19 = vector.broadcast %18 : bf16 to vector<1x16x4xbf16>
    %20 = arith.mulf %14, %19 : vector<1x16x4xbf16>
    %21 = tpu.concatenate %11, %2, %20 in 0 : vector<1x16x4xbf16>, vector<8x16x4xbf16>, vector<1x16x4xbf16> -> vector<10x16x4xbf16>
    %cst = arith.constant 0.000000e+00 : bf16
    %22 = vector.broadcast %cst : bf16 to vector<10x1x4xbf16>
    %23 = tpu.concatenate %22, %21, %22 in 1 : vector<10x1x4xbf16>, vector<10x16x4xbf16>, vector<10x1x4xbf16> -> vector<10x18x4xbf16>
    %24 = vector.extract_strided_slice %23 {offsets = [0, 0, 0], sizes = [8, 16, 4], strides = [1, 1, 1]} : vector<10x18x4xbf16> to vector<8x16x4xbf16>
    %25 = vector.extract_strided_slice %23 {offsets = [0, 1, 0], sizes = [8, 16, 4], strides = [1, 1, 1]} : vector<10x18x4xbf16> to vector<8x16x4xbf16>
    %26 = vector.extract_strided_slice %23 {offsets = [0, 2, 0], sizes = [8, 16, 4], strides = [1, 1, 1]} : vector<10x18x4xbf16> to vector<8x16x4xbf16>
    %27 = vector.extract_strided_slice %23 {offsets = [1, 0, 0], sizes = [8, 16, 4], strides = [1, 1, 1]} : vector<10x18x4xbf16> to vector<8x16x4xbf16>
    %28 = vector.extract_strided_slice %23 {offsets = [1, 1, 0], sizes = [8, 16, 4], strides = [1, 1, 1]} : vector<10x18x4xbf16> to vector<8x16x4xbf16>
    %29 = vector.extract_strided_slice %23 {offsets = [1, 2, 0], sizes = [8, 16, 4], strides = [1, 1, 1]} : vector<10x18x4xbf16> to vector<8x16x4xbf16>
    %30 = vector.extract_strided_slice %23 {offsets = [2, 0, 0], sizes = [8, 16, 4], strides = [1, 1, 1]} : vector<10x18x4xbf16> to vector<8x16x4xbf16>
    %31 = vector.extract_strided_slice %23 {offsets = [2, 1, 0], sizes = [8, 16, 4], strides = [1, 1, 1]} : vector<10x18x4xbf16> to vector<8x16x4xbf16>
    %32 = vector.extract_strided_slice %23 {offsets = [2, 2, 0], sizes = [8, 16, 4], strides = [1, 1, 1]} : vector<10x18x4xbf16> to vector<8x16x4xbf16>
    %33 = tpu.concatenate %24, %25, %26, %27, %28, %29, %30, %31, %32 in 2 : vector<8x16x4xbf16>, vector<8x16x4xbf16>, vector<8x16x4xbf16>, vector<8x16x4xbf16>, vector<8x16x4xbf16>, vector<8x16x4xbf16>, vector<8x16x4xbf16>, vector<8x16x4xbf16>, vector<8x16x4xbf16> -> vector<8x16x36xbf16>
    %34 = vector.shape_cast %33 : vector<8x16x36xbf16> to vector<128x36xbf16>
    %c0_11 = arith.constant 0 : index
    %c0_12 = arith.constant 0 : index
    %35 = vector.load %arg5[%c0_11, %c0_12] : memref<36x4xbf16, #tpu.memory_space<vmem>>, vector<36x4xbf16>
    %cst_13 = arith.constant dense<0.000000e+00> : vector<128x4xf32>
    %36 = tpu.matmul %34, %35, %cst_13 {dimension_numbers = #tpu.dot_dimension_numbers<[1], [0], [0], [1], [0, 0, 1, 1], [], []>} : vector<128x36xbf16>, vector<36x4xbf16>, vector<128x4xf32> -> vector<128x4xf32>
    %c0_14 = arith.constant 0 : index
    %c0_15 = arith.constant 0 : index
    %37 = vector.load %arg6[%c0_14, %c0_15] : memref<1x4xf32, #tpu.memory_space<vmem>>, vector<1x4xf32>
    %38 = vector.broadcast %37 : vector<1x4xf32> to vector<128x4xf32>
    %39 = arith.addf %36, %38 : vector<128x4xf32>
    %c0_16 = arith.constant 0 : index
    %c0_17 = arith.constant 0 : index
    %c0_18 = arith.constant 0 : index
    %40 = vector.load %arg7[%c0_16, %c0_17, %c0_18] : memref<1x128x4xf32, #tpu.memory_space<vmem>>, vector<1x128x4xf32>
    %41 = vector.shape_cast %40 : vector<1x128x4xf32> to vector<128x4xf32>
    %42 = vector.shape_cast %39 : vector<128x4xf32> to vector<1x128x4xf32>
    tpu.vector_store %arg7[%c0_16, %c0_17, %c0_18], %42 {strides = array<i32>} : memref<1x128x4xf32, #tpu.memory_space<vmem>>, vector<1x128x4xf32>,
    return
  }
  func.func @transform_0(%arg0: i32, %arg1: i32) -> (i32, i32, i32, i32) {
    %c8_i32 = arith.constant 8 : i32
    %0 = arith.muli %arg1, %c8_i32 : i32
    %c1_i32 = arith.constant 1 : i32
    %1 = arith.subi %0, %c1_i32 : i32
    %c0_i32 = arith.constant 0 : i32
    %2 = arith.maxsi %1, %c0_i32 : i32
    %c0_i32_0 = arith.constant 0 : i32
    %c0_i32_1 = arith.constant 0 : i32
    %c0_i32_2 = arith.constant 0 : i32
    return %arg0, %2, %c0_i32_0, %c0_i32_1 : i32, i32, i32, i32
  }
  func.func @transform_1(%arg0: i32, %arg1: i32) -> (i32, i32, i32, i32) {
    %c0_i32 = arith.constant 0 : i32
    %c0_i32_0 = arith.constant 0 : i32
    %c0_i32_1 = arith.constant 0 : i32
    return %arg0, %arg1, %c0_i32, %c0_i32_0 : i32, i32, i32, i32
  }
  func.func @transform_2(%arg0: i32, %arg1: i32) -> (i32, i32, i32, i32) {
    %c1_i32 = arith.constant 1 : i32
    %0 = arith.addi %arg1, %c1_i32 : i32
    %c8_i32 = arith.constant 8 : i32
    %1 = arith.muli %0, %c8_i32 : i32
    %c15_i32 = arith.constant 15 : i32
    %2 = arith.minsi %1, %c15_i32 : i32
    %c0_i32 = arith.constant 0 : i32
    %c0_i32_0 = arith.constant 0 : i32
    %c0_i32_1 = arith.constant 0 : i32
    return %arg0, %2, %c0_i32, %c0_i32_0 : i32, i32, i32, i32
  }
  func.func @transform_3(%arg0: i32, %arg1: i32) -> (i32, i32) {
    %c0_i32 = arith.constant 0 : i32
    %c0_i32_0 = arith.constant 0 : i32
    %c0_i32_1 = arith.constant 0 : i32
    return %c0_i32, %c0_i32_0 : i32, i32
  }
  func.func @transform_4(%arg0: i32, %arg1: i32) -> (i32, i32) {
    %c0_i32 = arith.constant 0 : i32
    %c0_i32_0 = arith.constant 0 : i32
    %c0_i32_1 = arith.constant 0 : i32
    return %c0_i32, %c0_i32_0 : i32, i32
  }
  func.func @transform_5(%arg0: i32, %arg1: i32) -> (i32, i32, i32) {
    %c0_i32 = arith.constant 0 : i32
    %c0_i32_0 = arith.constant 0 : i32
    return %arg0, %arg1, %c0_i32 : i32, i32, i32
  }
}

module attributes {stable_mosaic.version = 11 : i64} {
  func.func @conv3x3_kernel(%arg0: i32, %arg1: i32, %arg2: memref<1x1x16x4xf32, #tpu.memory_space<vmem>>, %arg3: memref<1x8x16x4xf32, #tpu.memory_space<vmem>>, %arg4: memref<1x1x16x4xf32, #tpu.memory_space<vmem>>, %arg5: memref<36x16xbf16, #tpu.memory_space<vmem>>, %arg6: memref<1x16xf32, #tpu.memory_space<vmem>>, %arg7: memref<1x128x16xbf16, #tpu.memory_space<vmem>>) attributes {dimension_semantics = [#tpu.dimension_semantics<parallel>, #tpu.dimension_semantics<parallel>], iteration_bounds = array<i64: 2, 2>, scalar_prefetch = 0 : i64, scratch_operands = 0 : i64, tpu.core_type = #tpu.core_type<tc>, window_params = [{transform_indices = @transform_0, window_bounds = array<i64: 1, 1, 16, 4>}, {transform_indices = @transform_1, window_bounds = array<i64: 1, 8, 16, 4>}, {transform_indices = @transform_2, window_bounds = array<i64: 1, 1, 16, 4>}, {pipeline_mode = #tpu.pipeline_mode<synchronous>, transform_indices = @transform_3, window_bounds = array<i64: 36, 16>}, {pipeline_mode = #tpu.pipeline_mode<synchronous>, transform_indices = @transform_4, window_bounds = array<i64: 1, 16>}, {transform_indices = @transform_5, window_bounds = array<i64: 1, 128, 16>}]} {
    %c0 = arith.constant 0 : index
    %c0_0 = arith.constant 0 : index
    %c0_1 = arith.constant 0 : index
    %c0_2 = arith.constant 0 : index
    %0 = vector.load %arg3[%c0, %c0_0, %c0_1, %c0_2] : memref<1x8x16x4xf32, #tpu.memory_space<vmem>>, vector<1x8x16x4xf32>
    %1 = vector.shape_cast %0 : vector<1x8x16x4xf32> to vector<8x16x4xf32>
    %2 = arith.truncf %1 : vector<8x16x4xf32> to vector<8x16x4xbf16>
    %c0_3 = arith.constant 0 : index
    %c0_4 = arith.constant 0 : index
    %c0_5 = arith.constant 0 : index
    %c0_6 = arith.constant 0 : index
    %3 = vector.load %arg2[%c0_3, %c0_4, %c0_5, %c0_6] : memref<1x1x16x4xf32, #tpu.memory_space<vmem>>, vector<1x1x16x4xf32>
    %4 = vector.shape_cast %3 : vector<1x1x16x4xf32> to vector<1x16x4xf32>
    %5 = arith.truncf %4 : vector<1x16x4xf32> to vector<1x16x4xbf16>
    %c0_i32 = arith.constant 0 : i32
    %6 = arith.cmpi sgt, %arg1, %c0_i32 : i32
    %7 = arith.extui %6 : i1 to i32
    %8 = arith.sitofp %7 : i32 to f32
    %9 = arith.truncf %8 : f32 to bf16
    %10 = vector.broadcast %9 : bf16 to vector<1x16x4xbf16>
    %11 = arith.mulf %5, %10 : vector<1x16x4xbf16>
    %c0_7 = arith.constant 0 : index
    %c0_8 = arith.constant 0 : index
    %c0_9 = arith.constant 0 : index
    %c0_10 = arith.constant 0 : index
    %12 = vector.load %arg4[%c0_7, %c0_8, %c0_9, %c0_10] : memref<1x1x16x4xf32, #tpu.memory_space<vmem>>, vector<1x1x16x4xf32>
    %13 = vector.shape_cast %12 : vector<1x1x16x4xf32> to vector<1x16x4xf32>
    %14 = arith.truncf %13 : vector<1x16x4xf32> to vector<1x16x4xbf16>
    %c1_i32 = arith.constant 1 : i32
    %15 = arith.cmpi slt, %arg1, %c1_i32 : i32
    %16 = arith.extui %15 : i1 to i32
    %17 = arith.sitofp %16 : i32 to f32
    %18 = arith.truncf %17 : f32 to bf16
    %19 = vector.broadcast %18 : bf16 to vector<1x16x4xbf16>
    %20 = arith.mulf %14, %19 : vector<1x16x4xbf16>
    %21 = tpu.concatenate %11, %2, %20 in 0 : vector<1x16x4xbf16>, vector<8x16x4xbf16>, vector<1x16x4xbf16> -> vector<10x16x4xbf16>
    %cst = arith.constant 0.000000e+00 : bf16
    %22 = vector.broadcast %cst : bf16 to vector<10x1x4xbf16>
    %23 = tpu.concatenate %22, %21, %22 in 1 : vector<10x1x4xbf16>, vector<10x16x4xbf16>, vector<10x1x4xbf16> -> vector<10x18x4xbf16>
    %24 = vector.extract_strided_slice %23 {offsets = [0, 0, 0], sizes = [8, 16, 4], strides = [1, 1, 1]} : vector<10x18x4xbf16> to vector<8x16x4xbf16>
    %25 = vector.extract_strided_slice %23 {offsets = [0, 1, 0], sizes = [8, 16, 4], strides = [1, 1, 1]} : vector<10x18x4xbf16> to vector<8x16x4xbf16>
    %26 = vector.extract_strided_slice %23 {offsets = [0, 2, 0], sizes = [8, 16, 4], strides = [1, 1, 1]} : vector<10x18x4xbf16> to vector<8x16x4xbf16>
    %27 = vector.extract_strided_slice %23 {offsets = [1, 0, 0], sizes = [8, 16, 4], strides = [1, 1, 1]} : vector<10x18x4xbf16> to vector<8x16x4xbf16>
    %28 = vector.extract_strided_slice %23 {offsets = [1, 1, 0], sizes = [8, 16, 4], strides = [1, 1, 1]} : vector<10x18x4xbf16> to vector<8x16x4xbf16>
    %29 = vector.extract_strided_slice %23 {offsets = [1, 2, 0], sizes = [8, 16, 4], strides = [1, 1, 1]} : vector<10x18x4xbf16> to vector<8x16x4xbf16>
    %30 = vector.extract_strided_slice %23 {offsets = [2, 0, 0], sizes = [8, 16, 4], strides = [1, 1, 1]} : vector<10x18x4xbf16> to vector<8x16x4xbf16>
    %31 = vector.extract_strided_slice %23 {offsets = [2, 1, 0], sizes = [8, 16, 4], strides = [1, 1, 1]} : vector<10x18x4xbf16> to vector<8x16x4xbf16>
    %32 = vector.extract_strided_slice %23 {offsets = [2, 2, 0], sizes = [8, 16, 4], strides = [1, 1, 1]} : vector<10x18x4xbf16> to vector<8x16x4xbf16>
    %33 = tpu.concatenate %24, %25, %26, %27, %28, %29, %30, %31, %32 in 2 : vector<8x16x4xbf16>, vector<8x16x4xbf16>, vector<8x16x4xbf16>, vector<8x16x4xbf16>, vector<8x16x4xbf16>, vector<8x16x4xbf16>, vector<8x16x4xbf16>, vector<8x16x4xbf16>, vector<8x16x4xbf16> -> vector<8x16x36xbf16>
    %34 = vector.shape_cast %33 : vector<8x16x36xbf16> to vector<128x36xbf16>
    %c0_11 = arith.constant 0 : index
    %c0_12 = arith.constant 0 : index
    %35 = vector.load %arg5[%c0_11, %c0_12] : memref<36x16xbf16, #tpu.memory_space<vmem>>, vector<36x16xbf16>
    %cst_13 = arith.constant dense<0.000000e+00> : vector<128x16xf32>
    %36 = tpu.matmul %34, %35, %cst_13 {dimension_numbers = #tpu.dot_dimension_numbers<[1], [0], [0], [1], [0, 0, 1, 1], [], []>} : vector<128x36xbf16>, vector<36x16xbf16>, vector<128x16xf32> -> vector<128x16xf32>
    %c0_14 = arith.constant 0 : index
    %c0_15 = arith.constant 0 : index
    %37 = vector.load %arg6[%c0_14, %c0_15] : memref<1x16xf32, #tpu.memory_space<vmem>>, vector<1x16xf32>
    %38 = vector.broadcast %37 : vector<1x16xf32> to vector<128x16xf32>
    %39 = arith.addf %36, %38 : vector<128x16xf32>
    %cst_16 = arith.constant 0.000000e+00 : f32
    %40 = vector.broadcast %cst_16 : f32 to vector<128x16xf32>
    %41 = arith.maximumf %39, %40 : vector<128x16xf32>
    %42 = arith.truncf %41 : vector<128x16xf32> to vector<128x16xbf16>
    %c0_17 = arith.constant 0 : index
    %c0_18 = arith.constant 0 : index
    %c0_19 = arith.constant 0 : index
    %43 = vector.load %arg7[%c0_17, %c0_18, %c0_19] : memref<1x128x16xbf16, #tpu.memory_space<vmem>>, vector<1x128x16xbf16>
    %44 = vector.shape_cast %43 : vector<1x128x16xbf16> to vector<128x16xbf16>
    %45 = vector.shape_cast %42 : vector<128x16xbf16> to vector<1x128x16xbf16>
    tpu.vector_store %arg7[%c0_17, %c0_18, %c0_19], %45 {strides = array<i32>} : memref<1x128x16xbf16, #tpu.memory_space<vmem>>, vector<1x128x16xbf16>,
    return
  }
  func.func @transform_0(%arg0: i32, %arg1: i32) -> (i32, i32, i32, i32) {
    %c8_i32 = arith.constant 8 : i32
    %0 = arith.muli %arg1, %c8_i32 : i32
    %c1_i32 = arith.constant 1 : i32
    %1 = arith.subi %0, %c1_i32 : i32
    %c0_i32 = arith.constant 0 : i32
    %2 = arith.maxsi %1, %c0_i32 : i32
    %c0_i32_0 = arith.constant 0 : i32
    %c0_i32_1 = arith.constant 0 : i32
    %c0_i32_2 = arith.constant 0 : i32
    return %arg0, %2, %c0_i32_0, %c0_i32_1 : i32, i32, i32, i32
  }
  func.func @transform_1(%arg0: i32, %arg1: i32) -> (i32, i32, i32, i32) {
    %c0_i32 = arith.constant 0 : i32
    %c0_i32_0 = arith.constant 0 : i32
    %c0_i32_1 = arith.constant 0 : i32
    return %arg0, %arg1, %c0_i32, %c0_i32_0 : i32, i32, i32, i32
  }
  func.func @transform_2(%arg0: i32, %arg1: i32) -> (i32, i32, i32, i32) {
    %c1_i32 = arith.constant 1 : i32
    %0 = arith.addi %arg1, %c1_i32 : i32
    %c8_i32 = arith.constant 8 : i32
    %1 = arith.muli %0, %c8_i32 : i32
    %c15_i32 = arith.constant 15 : i32
    %2 = arith.minsi %1, %c15_i32 : i32
    %c0_i32 = arith.constant 0 : i32
    %c0_i32_0 = arith.constant 0 : i32
    %c0_i32_1 = arith.constant 0 : i32
    return %arg0, %2, %c0_i32, %c0_i32_0 : i32, i32, i32, i32
  }
  func.func @transform_3(%arg0: i32, %arg1: i32) -> (i32, i32) {
    %c0_i32 = arith.constant 0 : i32
    %c0_i32_0 = arith.constant 0 : i32
    %c0_i32_1 = arith.constant 0 : i32
    return %c0_i32, %c0_i32_0 : i32, i32
  }
  func.func @transform_4(%arg0: i32, %arg1: i32) -> (i32, i32) {
    %c0_i32 = arith.constant 0 : i32
    %c0_i32_0 = arith.constant 0 : i32
    %c0_i32_1 = arith.constant 0 : i32
    return %c0_i32, %c0_i32_0 : i32, i32
  }
  func.func @transform_5(%arg0: i32, %arg1: i32) -> (i32, i32, i32) {
    %c0_i32 = arith.constant 0 : i32
    %c0_i32_0 = arith.constant 0 : i32
    return %arg0, %arg1, %c0_i32 : i32, i32, i32
  }
}

</mosaic_0001>

<llo_original>
// kernel: a_call__.5
$region0: #{a_call__.5}
  #allocation0 [shape = 'u32[]', space=smem, size = 0x4, offset = 0x4, fixed_abs, tag = 'smem constant byte address 0x4 - core index']
  #allocation1 [shape = 'u32[144,128]{1,0:T(1,128)}', space=vmem, size = 0x12000, scoped, tag = 'internal scratch']
  #allocation2 [shape = 'f32[1,1]{1,0:T(1,128)S(1)}', space=vmem, size = 0x200, scoped, tag = 'scoped memory for a_call__.5']
  %s0 = inlined_call_operand.vmem [shape: bf16[2,16,16,16], index: 0, kind: input, shape index: {}, may-alias: {0,1,2}]
  %s1 = inlined_call_operand.vmem [shape: bf16[2,16,16,16], index: 1, kind: input, shape index: {}, may-alias: {0,1,2}]
  %s2 = inlined_call_operand.vmem [shape: bf16[2,16,16,16], index: 2, kind: input, shape index: {}, may-alias: {0,1,2}]
  %s3 = inlined_call_operand.vmem [shape: f32[2,256,4], index: 3, kind: input, shape index: {}]
  %s4 = inlined_call_operand.vmem [shape: bf16[144,16], index: 4, kind: input, shape index: {}]
  %s5 = inlined_call_operand.vmem [shape: f32[1,16], index: 5, kind: input, shape index: {}]
  %s6 = inlined_call_operand.vmem [shape: f32[1,16], index: 6, kind: input, shape index: {}]
  %s7 = inlined_call_operand.<no memory space> [shape: f32[1,1], index: 7, kind: input, shape index: {}]
  %s8 = inlined_call_operand.vmem [shape: f32[2,256,4], index: 8, kind: output, shape index: {}]
  %s9 = sld [smem:[#allocation0]]
  $region65: #{a_call__.5} parent=0
    _
  %s11 = ssub.s32 1, %s9
  %s12 = scalar_select 0, %s11, %s9
  %v13 = vstv %s7
  %14 = vst [vmem:[#allocation2] sm:$0x1] %v13
  loop: start=0, step=1, limit=6
  $region2: #{a_call__.5} parent=0 // loop_pre_header
    _
  $region3: #{a_call__.5} parent=0 // loop_header
    %s16 = sphi 0, %s20
    %p17 = scmp.ge.s32.totalorder %s16, 6
    %s23 = sphi 0, %s35
    %s24 = sphi 0, %s31
    %s25 = sphi 0, %s23
    %s26 = sphi 0, %s24
    %s27 = sphi 0, %s25
    %s28 = sphi 0, %s26
    %s48 = sphi 0, %s50
    %s51 = sphi 0, %s48
    %s52 = sphi 0, %s51
    %s68 = sphi 0, %s52
    %s76 = sphi 0, %s78
    %s79 = sphi 0, %s76
    %s80 = sphi 0, %s79
    %s96 = sphi 0, %s80
    %s112 = sphi 0, %s114
    %s115 = sphi 0, %s112
    %s116 = sphi 0, %s115
    %s132 = sphi 0, %s116
    %s140 = sphi 0, %s142
    %s143 = sphi 0, %s140
    %s144 = sphi 0, %s143
    %s160 = sphi 0, %s144
    %s164 = sphi 0, %s164
    %s166 = sphi 0, %s164
    %s167 = sphi 0, %s166
    %s181 = sphi 0, %s167
    %s185 = sphi 0, %s185
    %s187 = sphi 0, %s185
    %s188 = sphi 0, %s187
    %s202 = sphi 0, %s188
    %s206 = sphi 0, %s206
    %s208 = sphi 0, %s206
    %s209 = sphi 0, %s208
    %s223 = sphi 0, %s209
    %s227 = sphi 0, %s227
    %s229 = sphi 0, %s227
    %s230 = sphi 0, %s229
    %s244 = sphi 0, %s230
    %s252 = sphi 0, %s254
    %s255 = sphi 0, %s252
    %s256 = sphi 0, %s255
    %s272 = sphi 0, %s256
  $region4: #{a_call__.5} parent=0 // loop_header_branch
    %19 = sbr.rel (%p17) target = $region8
  $region5: #{a_call__.5} parent=0 // loop_body
    %s21 = ssub.s32 %s16, 1
    %s22 = ssub.s32 %s16, 2
    %s29 = sadd.s32 1, %s24
    %p30 = scmp.ge.s32.totalorder %s29, 2
    %s31 = scalar_select %p30, 0, %s29
    %s32 = sadd.s32 1, %s23
    %s33 = scalar_select %p30, %s32, %s23
    %p34 = scmp.ge.s32.totalorder %s33, 2
    %s35 = scalar_select %p34, 0, %s33
    %s36 = smul.u32 %s24, 8
    %s37 = ssub.s32 %s36, 1
    %p38 = scmp.gt.s32.totalorder %s37, 0
    %s39 = scalar_select %p38, %s37, 0
    %s40 = smul.u32 %s31, 8
    %s41 = ssub.s32 %s40, 1
    %p42 = scmp.gt.s32.totalorder %s41, 0
    %s43 = scalar_select %p42, %s41, 0
    %s44 = ssub.s32 %s23, %s35
    %s45 = ssub.s32 %s39, %s43
    %s46 = sor.u32 %s44, %s45
    %p47 = scmp.eq.s32.totalorder %s46, 0
    %s49 = sadd.s32 %s48, 1
    %s50 = scalar_select %p47, %s48, %s49
    %p53 = pneg %p47
    %p54 = scmp.eq.s32.totalorder %s16, 3
    %p55 = por %p53, %p54
    %p56 = scmp.ne.s32.totalorder %s48, %s51
    %p57 = scmp.eq.s32.totalorder %s16, 0
    %p58 = por %p56, %p57
    %p59 = scmp.ne.s32.totalorder %s48, %s51
    %p60 = scmp.eq.s32.totalorder %s21, 3
    %p61 = por %p59, %p60
    %p62 = scmp.ne.s32.totalorder %s51, %s52
    %p63 = scmp.eq.s32.totalorder %s21, 0
    %p64 = por %p62, %p63
    %p65 = scmp.ne.s32.totalorder %s51, %s52
    %p66 = scmp.eq.s32.totalorder %s22, 3
    %p67 = por %p65, %p66
    %p69 = scmp.ne.s32.totalorder %s52, %s68
    %p70 = scmp.eq.s32.totalorder %s22, 0
    %p71 = por %p69, %p70
    %s72 = ssub.s32 %s23, %s35
    %s73 = ssub.s32 %s24, %s31
    %s74 = sor.u32 %s72, %s73
    %p75 = scmp.eq.s32.totalorder %s74, 0
    %s77 = sadd.s32 %s76, 1
    %s78 = scalar_select %p75, %s76, %s77
    %p81 = pneg %p75
    %p82 = scmp.eq.s32.totalorder %s16, 3
    %p83 = por %p81, %p82
    %p84 = scmp.ne.s32.totalorder %s76, %s79
    %p85 = scmp.eq.s32.totalorder %s16, 0
    %p86 = por %p84, %p85
    %p87 = scmp.ne.s32.totalorder %s76, %s79
    %p88 = scmp.eq.s32.totalorder %s21, 3
    %p89 = por %p87, %p88
    %p90 = scmp.ne.s32.totalorder %s79, %s80
    %p91 = scmp.eq.s32.totalorder %s21, 0
    %p92 = por %p90, %p91
    %p93 = scmp.ne.s32.totalorder %s79, %s80
    %p94 = scmp.eq.s32.totalorder %s22, 3
    %p95 = por %p93, %p94
    %p97 = scmp.ne.s32.totalorder %s80, %s96
    %p98 = scmp.eq.s32.totalorder %s22, 0
    %p99 = por %p97, %p98
    %s100 = sadd.s32 %s24, 1
    %s101 = smul.u32 %s100, 8
    %p102 = scmp.lt.s32.totalorder %s101, 15
    %s103 = scalar_select %p102, %s101, 15
    %s104 = sadd.s32 %s31, 1
    %s105 = smul.u32 %s104, 8
    %p106 = scmp.lt.s32.totalorder %s105, 15
    %s107 = scalar_select %p106, %s105, 15
    %s108 = ssub.s32 %s23, %s35
    %s109 = ssub.s32 %s103, %s107
    %s110 = sor.u32 %s108, %s109
    %p111 = scmp.eq.s32.totalorder %s110, 0
    %s113 = sadd.s32 %s112, 1
    %s114 = scalar_select %p111, %s112, %s113
    %p117 = pneg %p111
    %p118 = scmp.eq.s32.totalorder %s16, 3
    %p119 = por %p117, %p118
    %p120 = scmp.ne.s32.totalorder %s112, %s115
    %p121 = scmp.eq.s32.totalorder %s16, 0
    %p122 = por %p120, %p121
    %p123 = scmp.ne.s32.totalorder %s112, %s115
    %p124 = scmp.eq.s32.totalorder %s21, 3
    %p125 = por %p123, %p124
    %p126 = scmp.ne.s32.totalorder %s115, %s116
    %p127 = scmp.eq.s32.totalorder %s21, 0
    %p128 = por %p126, %p127
    %p129 = scmp.ne.s32.totalorder %s115, %s116
    %p130 = scmp.eq.s32.totalorder %s22, 3
    %p131 = por %p129, %p130
    %p133 = scmp.ne.s32.totalorder %s116, %s132
    %p134 = scmp.eq.s32.totalorder %s22, 0
    %p135 = por %p133, %p134
    %s136 = ssub.s32 %s23, %s35
    %s137 = ssub.s32 %s24, %s31
    %s138 = sor.u32 %s136, %s137
    %p139 = scmp.eq.s32.totalorder %s138, 0
    %s141 = sadd.s32 %s140, 1
    %s142 = scalar_select %p139, %s140, %s141
    %p145 = pneg %p139
    %p146 = scmp.eq.s32.totalorder %s16, 3
    %p147 = por %p145, %p146
    %p148 = scmp.ne.s32.totalorder %s140, %s143
    %p149 = scmp.eq.s32.totalorder %s16, 0
    %p150 = por %p148, %p149
    %p151 = scmp.ne.s32.totalorder %s140, %s143
    %p152 = scmp.eq.s32.totalorder %s21, 3
    %p153 = por %p151, %p152
    %p154 = scmp.ne.s32.totalorder %s143, %s144
    %p155 = scmp.eq.s32.totalorder %s21, 0
    %p156 = por %p154, %p155
    %p157 = scmp.ne.s32.totalorder %s143, %s144
    %p158 = scmp.eq.s32.totalorder %s22, 3
    %p159 = por %p157, %p158
    %p161 = scmp.ne.s32.totalorder %s144, %s160
    %p162 = scmp.eq.s32.totalorder %s22, 0
    %p163 = por %p161, %p162
    %s165 = sadd.s32 %s164, 1
    %p168 = scmp.eq.s32.totalorder %s16, 3
    %p169 = scmp.ne.s32.totalorder %s164, %s166
    %p170 = scmp.eq.s32.totalorder %s16, 0
    %p171 = por %p169, %p170
    %p172 = scmp.ne.s32.totalorder %s164, %s166
    %p173 = scmp.eq.s32.totalorder %s21, 3
    %p174 = por %p172, %p173
    %p175 = scmp.ne.s32.totalorder %s166, %s167
    %p176 = scmp.eq.s32.totalorder %s21, 0
    %p177 = por %p175, %p176
    %p178 = scmp.ne.s32.totalorder %s166, %s167
    %p179 = scmp.eq.s32.totalorder %s22, 3
    %p180 = por %p178, %p179
    %p182 = scmp.ne.s32.totalorder %s167, %s181
    %p183 = scmp.eq.s32.totalorder %s22, 0
    %p184 = por %p182, %p183
    %s186 = sadd.s32 %s185, 1
    %p189 = scmp.eq.s32.totalorder %s16, 3
    %p190 = scmp.ne.s32.totalorder %s185, %s187
    %p191 = scmp.eq.s32.totalorder %s16, 0
    %p192 = por %p190, %p191
    %p193 = scmp.ne.s32.totalorder %s185, %s187
    %p194 = scmp.eq.s32.totalorder %s21, 3
    %p195 = por %p193, %p194
    %p196 = scmp.ne.s32.totalorder %s187, %s188
    %p197 = scmp.eq.s32.totalorder %s21, 0
    %p198 = por %p196, %p197
    %p199 = scmp.ne.s32.totalorder %s187, %s188
    %p200 = scmp.eq.s32.totalorder %s22, 3
    %p201 = por %p199, %p200
    %p203 = scmp.ne.s32.totalorder %s188, %s202
    %p204 = scmp.eq.s32.totalorder %s22, 0
    %p205 = por %p203, %p204
    %s207 = sadd.s32 %s206, 1
    %p210 = scmp.eq.s32.totalorder %s16, 3
    %p211 = scmp.ne.s32.totalorder %s206, %s208
    %p212 = scmp.eq.s32.totalorder %s16, 0
    %p213 = por %p211, %p212
    %p214 = scmp.ne.s32.totalorder %s206, %s208
    %p215 = scmp.eq.s32.totalorder %s21, 3
    %p216 = por %p214, %p215
    %p217 = scmp.ne.s32.totalorder %s208, %s209
    %p218 = scmp.eq.s32.totalorder %s21, 0
    %p219 = por %p217, %p218
    %p220 = scmp.ne.s32.totalorder %s208, %s209
    %p221 = scmp.eq.s32.totalorder %s22, 3
    %p222 = por %p220, %p221
    %p224 = scmp.ne.s32.totalorder %s209, %s223
    %p225 = scmp.eq.s32.totalorder %s22, 0
    %p226 = por %p224, %p225
    %s228 = sadd.s32 %s227, 1
    %p231 = scmp.eq.s32.totalorder %s16, 3
    %p232 = scmp.ne.s32.totalorder %s227, %s229
    %p233 = scmp.eq.s32.totalorder %s16, 0
    %p234 = por %p232, %p233
    %p235 = scmp.ne.s32.totalorder %s227, %s229
    %p236 = scmp.eq.s32.totalorder %s21, 3
    %p237 = por %p235, %p236
    %p238 = scmp.ne.s32.totalorder %s229, %s230
    %p239 = scmp.eq.s32.totalorder %s21, 0
    %p240 = por %p238, %p239
    %p241 = scmp.ne.s32.totalorder %s229, %s230
    %p242 = scmp.eq.s32.totalorder %s22, 3
    %p243 = por %p241, %p242
    %p245 = scmp.ne.s32.totalorder %s230, %s244
    %p246 = scmp.eq.s32.totalorder %s22, 0
    %p247 = por %p245, %p246
    %s248 = ssub.s32 %s23, %s35
    %s249 = ssub.s32 %s24, %s31
    %s250 = sor.u32 %s248, %s249
    %p251 = scmp.eq.s32.totalorder %s250, 0
    %s253 = sadd.s32 %s252, 1
    %s254 = scalar_select %p251, %s252, %s253
    %p257 = pneg %p251
    %p258 = scmp.eq.s32.totalorder %s16, 3
    %p259 = por %p257, %p258
    %p260 = scmp.ne.s32.totalorder %s252, %s255
    %p261 = scmp.eq.s32.totalorder %s16, 0
    %p262 = por %p260, %p261
    %p263 = scmp.ne.s32.totalorder %s252, %s255
    %p264 = scmp.eq.s32.totalorder %s21, 3
    %p265 = por %p263, %p264
    %p266 = scmp.ne.s32.totalorder %s255, %s256
    %p267 = scmp.eq.s32.totalorder %s21, 0
    %p268 = por %p266, %p267
    %p269 = scmp.ne.s32.totalorder %s255, %s256
    %p270 = scmp.eq.s32.totalorder %s22, 3
    %p271 = por %p269, %p270
    %p273 = scmp.ne.s32.totalorder %s256, %s272
    %p274 = scmp.eq.s32.totalorder %s22, 0
    %p275 = por %p273, %p274
    %p276 = scmp.le.s32.totalorder 1, %s16
    %p277 = scmp.lt.s32.totalorder %s16, 5
    %p278 = pnand %p276, %p277
    %p279 = pneg %p278
    // Predicated region
    $region9: #{a_call__.5} parent=5 // pred_check
      _
    $region10: #{a_call__.5} parent=5 // pred_check_branch
      %281 = sbr.rel (%p278) target = $region12
    $region11: #{a_call__.5} parent=5 // pred_region
      %s282 = ssub.s32 %s16, 1
      // Predicated region
      $region13: #{a_call__.5} parent=11 // pred_check
        %p283 = pneg %p177
      $region14: #{a_call__.5} parent=11 // pred_check_branch
        %285 = sbr.rel (%p283) target = $region16
      $region15: #{a_call__.5} parent=11 // pred_region
        _
      $region16: #{a_call__.5} parent=11 // pred_fallthru
        _
      // Predicated region
      $region17: #{a_call__.5} parent=11 // pred_check
        %p286 = pneg %p198
      $region18: #{a_call__.5} parent=11 // pred_check_branch
        %288 = sbr.rel (%p286) target = $region20
      $region19: #{a_call__.5} parent=11 // pred_region
        _
      $region20: #{a_call__.5} parent=11 // pred_fallthru
        _
      // Predicated region
      $region21: #{a_call__.5} parent=11 // pred_check
        %p289 = pneg %p219
      $region22: #{a_call__.5} parent=11 // pred_check_branch
        %291 = sbr.rel (%p289) target = $region24
      $region23: #{a_call__.5} parent=11 // pred_region
        _
      $region24: #{a_call__.5} parent=11 // pred_fallthru
        _
      // Predicated region
      $region25: #{a_call__.5} parent=11 // pred_check
        %p292 = pneg %p240
      $region26: #{a_call__.5} parent=11 // pred_check_branch
        %294 = sbr.rel (%p292) target = $region28
      $region27: #{a_call__.5} parent=11 // pred_region
        _
      $region28: #{a_call__.5} parent=11 // pred_fallthru
        _
    $region12: #{a_call__.5} parent=5 // pred_fallthru
      _
    %p295 = scmp.lt.s32.totalorder %s16, 4
    // Predicated region
    $region29: #{a_call__.5} parent=5 // pred_check
      %p296 = pneg %p295
    $region30: #{a_call__.5} parent=5 // pred_check_branch
      %298 = sbr.rel (%p296) target = $region32
    $region31: #{a_call__.5} parent=5 // pred_region
      // Predicated region
      $region33: #{a_call__.5} parent=31 // pred_check
        %p299 = pneg %p58
      $region34: #{a_call__.5} parent=31 // pred_check_branch
        %301 = sbr.rel (%p299) target = $region36
      $region35: #{a_call__.5} parent=31 // pred_region
        %s302 = smul.u32 %s24, 8
        %s303 = ssub.s32 %s302, 1
        %p304 = scmp.gt.s32.totalorder %s303, 0
        %s305 = scalar_select %p304, %s303, 0
        %p306 = scmp.lt.s32.totalorder %s23, 1
        %s307 = scalar_select %p306, %s23, 1
        %p308 = scmp.lt.s32.totalorder %s305, 15
        %s309 = scalar_select %p308, %s305, 15
        %s310 = smul.addr %s309, 2
        %s311 = smul.addr %s307, 32
        %s312 = sadd.s32 %s310, %s311
        %s313 = smul.addr %s312, 4
        %s314 = scalar_lea.vmem %s0, %s313
        %s315 = smul.u32 %s24, 8
        %s316 = ssub.s32 %s315, 1
        %p317 = scmp.gt.s32.totalorder %s316, 0
        %s318 = scalar_select %p317, %s316, 0
      $region36: #{a_call__.5} parent=31 // pred_fallthru
        _
      // Predicated region
      $region37: #{a_call__.5} parent=31 // pred_check
        %p319 = pneg %p86
      $region38: #{a_call__.5} parent=31 // pred_check_branch
        %321 = sbr.rel (%p319) target = $region40
      $region39: #{a_call__.5} parent=31 // pred_region
        %s322 = smul.u32 8, %s24
        %p323 = scmp.lt.s32.totalorder %s23, 1
        %s324 = scalar_select %p323, %s23, 1
        %p325 = scmp.lt.s32.totalorder %s322, 15
        %s326 = scalar_select %p325, %s322, 15
        %s327 = smul.addr %s326, 2
        %s328 = smul.addr %s324, 32
        %s329 = sadd.s32 %s327, %s328
        %s330 = smul.addr %s329, 4
        %s331 = scalar_lea.vmem %s1, %s330
        %s332 = smul.u32 8, %s24
      $region40: #{a_call__.5} parent=31 // pred_fallthru
        _
      // Predicated region
      $region41: #{a_call__.5} parent=31 // pred_check
        %p333 = pneg %p122
      $region42: #{a_call__.5} parent=31 // pred_check_branch
        %335 = sbr.rel (%p333) target = $region44
      $region43: #{a_call__.5} parent=31 // pred_region
        %s336 = sadd.s32 %s24, 1
        %s337 = smul.u32 %s336, 8
        %p338 = scmp.lt.s32.totalorder %s337, 15
        %s339 = scalar_select %p338, %s337, 15
        %p340 = scmp.lt.s32.totalorder %s23, 1
        %s341 = scalar_select %p340, %s23, 1
        %p342 = scmp.lt.s32.totalorder %s339, 15
        %s343 = scalar_select %p342, %s339, 15
        %s344 = smul.addr %s343, 2
        %s345 = smul.addr %s341, 32
        %s346 = sadd.s32 %s344, %s345
        %s347 = smul.addr %s346, 4
        %s348 = scalar_lea.vmem %s2, %s347
        %s349 = sadd.s32 %s24, 1
        %s350 = smul.u32 %s349, 8
        %p351 = scmp.lt.s32.totalorder %s350, 15
        %s352 = scalar_select %p351, %s350, 15
      $region44: #{a_call__.5} parent=31 // pred_fallthru
        _
      // Predicated region
      $region45: #{a_call__.5} parent=31 // pred_check
        %p353 = pneg %p150
      $region46: #{a_call__.5} parent=31 // pred_check_branch
        %355 = sbr.rel (%p353) target = $region48
      $region47: #{a_call__.5} parent=31 // pred_region
        %s356 = smul.u32 16, %s24
        %p357 = scmp.lt.s32.totalorder %s23, 1
        %s358 = scalar_select %p357, %s23, 1
        %p359 = scmp.lt.s32.totalorder %s356, 31
        %s360 = scalar_select %p359, %s356, 31
        %s361 = smul.addr %s358, 32
        %s362 = sadd.s32 %s360, %s361
        %s363 = smul.addr %s362, 8
        %s364 = scalar_lea.vmem %s3, %s363
        %s365 = smul.u32 16, %s24
      $region48: #{a_call__.5} parent=31 // pred_fallthru
        _
    $region32: #{a_call__.5} parent=5 // pred_fallthru
      _
    %p366 = scmp.le.s32.totalorder 1, %s16
    %p367 = scmp.lt.s32.totalorder %s16, 5
    %p368 = pnand %p366, %p367
    %p369 = pneg %p368
    // Predicated region
    $region49: #{a_call__.5} parent=5 // pred_check
      _
    $region50: #{a_call__.5} parent=5 // pred_check_branch
      %371 = sbr.rel (%p368) target = $region52
    $region51: #{a_call__.5} parent=5 // pred_region
      %s372 = ssub.s32 %s16, 1
      %s373 = smul.u32 %s26, 8
      %s374 = ssub.s32 %s373, 1
      %p375 = scmp.gt.s32.totalorder %s374, 0
      %s376 = scalar_select %p375, %s374, 0
      %p377 = scmp.lt.s32.totalorder %s25, 1
      %s378 = scalar_select %p377, %s25, 1
      %p379 = scmp.lt.s32.totalorder %s376, 15
      %s380 = scalar_select %p379, %s376, 15
      %s381 = smul.addr %s380, 2
      %s382 = smul.addr %s378, 32
      %s383 = sadd.s32 %s381, %s382
      %s384 = smul.addr %s383, 4
      %s385 = scalar_lea.vmem %s0, %s384
      %p386 = pneg %p64
      %p387 = pneg %p61
      %s388 = smul.u32 8, %s26
      %p389 = scmp.lt.s32.totalorder %s25, 1
      %s390 = scalar_select %p389, %s25, 1
      %p391 = scmp.lt.s32.totalorder %s388, 15
      %s392 = scalar_select %p391, %s388, 15
      %s393 = smul.addr %s392, 2
      %s394 = smul.addr %s390, 32
      %s395 = sadd.s32 %s393, %s394
      %s396 = smul.addr %s395, 4
      %s397 = scalar_lea.vmem %s1, %s396
      %p398 = pneg %p92
      %p399 = pneg %p89
      %s400 = sadd.s32 %s26, 1
      %s401 = smul.u32 %s400, 8
      %p402 = scmp.lt.s32.totalorder %s401, 15
      %s403 = scalar_select %p402, %s401, 15
      %p404 = scmp.lt.s32.totalorder %s25, 1
      %s405 = scalar_select %p404, %s25, 1
      %p406 = scmp.lt.s32.totalorder %s403, 15
      %s407 = scalar_select %p406, %s403, 15
      %s408 = smul.addr %s407, 2
      %s409 = smul.addr %s405, 32
      %s410 = sadd.s32 %s408, %s409
      %s411 = smul.addr %s410, 4
      %s412 = scalar_lea.vmem %s2, %s411
      %p413 = pneg %p128
      %p414 = pneg %p125
      %s415 = smul.u32 16, %s26
      %p416 = scmp.lt.s32.totalorder %s25, 1
      %s417 = scalar_select %p416, %s25, 1
      %p418 = scmp.lt.s32.totalorder %s415, 31
      %s419 = scalar_select %p418, %s415, 31
      %s420 = smul.addr %s417, 32
      %s421 = sadd.s32 %s419, %s420
      %s422 = smul.addr %s421, 8
      %s423 = scalar_lea.vmem %s3, %s422
      %p424 = pneg %p156
      %p425 = pneg %p153
      %p426 = pneg %p177
      %p427 = pneg %p174
      %p428 = pneg %p198
      %p429 = pneg %p195
      %p430 = pneg %p219
      %p431 = pneg %p216
      %p432 = pneg %p240
      %p433 = pneg %p237
      %p434 = pneg %p268
      %p435 = pneg %p265
      %s436 = smul.u32 16, %s26
      %p437 = scmp.lt.s32.totalorder %s25, 1
      %s438 = scalar_select %p437, %s25, 1
      %p439 = scmp.lt.s32.totalorder %s436, 31
      %s440 = scalar_select %p439, %s436, 31
      %s441 = smul.addr %s438, 32
      %s442 = sadd.s32 %s440, %s441
      %s443 = smul.addr %s442, 8
      %s444 = scalar_lea.vmem %s8, %s443
      %s445 = smul.u32 %s26, 8
      %s446 = ssub.s32 %s445, 1
      %p447 = scmp.gt.s32.totalorder %s446, 0
      %s448 = scalar_select %p447, %s446, 0
      %p449 = scmp.lt.s32.totalorder %s25, 1
      %s450 = scalar_select %p449, %s25, 1
      %p451 = scmp.lt.s32.totalorder %s448, 15
      %s452 = scalar_select %p451, %s448, 15
      %s453 = smul.addr %s452, 2
      %s454 = smul.addr %s450, 32
      %s455 = sadd.s32 %s453, %s454
      %s456 = smul.addr %s455, 4
      %s457 = scalar_lea.vmem %s0, %s456
      %s458 = smul.u32 %s26, 8
      %s459 = ssub.s32 %s458, 1
      %p460 = scmp.gt.s32.totalorder %s459, 0
      %s461 = scalar_select %p460, %s459, 0
      %s462 = smul.u32 8, %s26
      %p463 = scmp.lt.s32.totalorder %s25, 1
      %s464 = scalar_select %p463, %s25, 1
      %p465 = scmp.lt.s32.totalorder %s462, 15
      %s466 = scalar_select %p465, %s462, 15
      %s467 = smul.addr %s466, 2
      %s468 = smul.addr %s464, 32
      %s469 = sadd.s32 %s467, %s468
      %s470 = smul.addr %s469, 4
      %s471 = scalar_lea.vmem %s1, %s470
      %s472 = smul.u32 8, %s26
      %s473 = sadd.s32 %s26, 1
      %s474 = smul.u32 %s473, 8
      %p475 = scmp.lt.s32.totalorder %s474, 15
      %s476 = scalar_select %p475, %s474, 15
      %p477 = scmp.lt.s32.totalorder %s25, 1
      %s478 = scalar_select %p477, %s25, 1
      %p479 = scmp.lt.s32.totalorder %s476, 15
      %s480 = scalar_select %p479, %s476, 15
      %s481 = smul.addr %s480, 2
      %s482 = smul.addr %s478, 32
      %s483 = sadd.s32 %s481, %s482
      %s484 = smul.addr %s483, 4
      %s485 = scalar_lea.vmem %s2, %s484
      %s486 = sadd.s32 %s26, 1
      %s487 = smul.u32 %s486, 8
      %p488 = scmp.lt.s32.totalorder %s487, 15
      %s489 = scalar_select %p488, %s487, 15
      %s490 = smul.u32 16, %s26
      %p491 = scmp.lt.s32.totalorder %s25, 1
      %s492 = scalar_select %p491, %s25, 1
      %p493 = scmp.lt.s32.totalorder %s490, 31
      %s494 = scalar_select %p493, %s490, 31
      %s495 = smul.addr %s492, 32
      %s496 = sadd.s32 %s494, %s495
      %s497 = smul.addr %s496, 8
      %s498 = scalar_lea.vmem %s3, %s497
      %s499 = smul.u32 16, %s26
      %s500 = smul.u32 16, %s26
      %p501 = scmp.lt.s32.totalorder %s25, 1
      %s502 = scalar_select %p501, %s25, 1
      %p503 = scmp.lt.s32.totalorder %s500, 31
      %s504 = scalar_select %p503, %s500, 31
      %s505 = smul.addr %s502, 32
      %s506 = sadd.s32 %s504, %s505
      %s507 = smul.addr %s506, 8
      %s508 = scalar_lea.vmem %s8, %s507
      %s509 = smul.u32 16, %s26
      %v511 = vld [vmem:[%s471] sm:$0xf]
      %v512 = vld [vmem:[%s471 + $0x4] sm:$0xf]
      %v513 = vld [vmem:[%s471 + $0x8] sm:$0xf]
      %v514 = vld [vmem:[%s471 + $0xc] sm:$0xf]
      %v515 = vld [vmem:[%s471 + $0x10] sm:$0xf]
      %v516 = vld [vmem:[%s471 + $0x14] sm:$0xf]
      %v517 = vld [vmem:[%s471 + $0x18] sm:$0xf]
      %v518 = vld [vmem:[%s471 + $0x1c] sm:$0xf]
      %v519 = vld [vmem:[%s471 + $0x20] sm:$0xf]
      %v520 = vld [vmem:[%s471 + $0x24] sm:$0xf]
      %v521 = vld [vmem:[%s471 + $0x28] sm:$0xf]
      %v522 = vld [vmem:[%s471 + $0x2c] sm:$0xf]
      %v523 = vld [vmem:[%s471 + $0x30] sm:$0xf]
      %v524 = vld [vmem:[%s471 + $0x34] sm:$0xf]
      %v525 = vld [vmem:[%s471 + $0x38] sm:$0xf]
      %v526 = vld [vmem:[%s471 + $0x3c] sm:$0xf]
      %v527 = vld [vmem:[%s457] sm:$0xf]
      %v528 = vld [vmem:[%s457 + $0x4] sm:$0xf]
      %p529 = scmp.gt.s32.totalorder %s26, 0
      %s530 = scalar_select %p529, 1, 0
      %s531 = scvt.s32.f32 %s530
      %p533 = scmp.ne.f32.partialorder %s531, %s531
      %s534 = sshrl.u32 %s531, 16
      %s535 = sand.u32 %s534, 1
      %s536 = sadd.s32 32767, %s535
      %s537 = sadd.s32 %s531, %s536
      %s538 = sand.u32 %s537, 4294901760
      %s539 = scalar_select %p533, 2143289344, %s538
      %s541 = sshrl.u32 %s539, 16
      %s542 = sshll.u32 %s541, 16
      %s543 = sor.u32 %s541, %s542
      %v544 = vstv %s543
      %v546 = vmul.bf16 %v527, %v544
      %v547 = vmul.bf16 %v528, %v544
      %v548 = vld [vmem:[%s485] sm:$0xf]
      %v549 = vld [vmem:[%s485 + $0x4] sm:$0xf]
      %p550 = scmp.lt.s32.totalorder %s26, 1
      %s551 = scalar_select %p550, 1, 0
      %s552 = scvt.s32.f32 %s551
      %p554 = scmp.ne.f32.partialorder %s552, %s552
      %s555 = sshrl.u32 %s552, 16
      %s556 = sand.u32 %s555, 1
      %s557 = sadd.s32 32767, %s556
      %s558 = sadd.s32 %s552, %s557
      %s559 = sand.u32 %s558, 4294901760
      %s560 = scalar_select %p554, 2143289344, %s559
      %s562 = sshrl.u32 %s560, 16
      %s563 = sshll.u32 %s562, 16
      %s564 = sor.u32 %s562, %s563
      %v565 = vstv %s564
      %v567 = vmul.bf16 %v548, %v565
      %v568 = vmul.bf16 %v549, %v565
      %v589 = vunpack.c.l.b16 %v546
      %v590 = vunpack.c.l.b16 %v547
      %v591 = vunpack.c.l.b16 %v511
      %v592 = vunpack.c.l.b16 %v512
      %v593 = vunpack.c.l.b16 %v513
      %v594 = vunpack.c.l.b16 %v514
      %v595 = vunpack.c.l.b16 %v515
      %v596 = vunpack.c.l.b16 %v516
      %v597 = vunpack.c.l.b16 %v517
      %v598 = vunpack.c.l.b16 %v518
      %v599 = vunpack.c.l.b16 %v519
      %v600 = vunpack.c.l.b16 %v520
      %v601 = vunpack.c.l.b16 %v521
      %v602 = vunpack.c.l.b16 %v522
      %v603 = vunpack.c.l.b16 %v523
      %v604 = vunpack.c.l.b16 %v524
      %v605 = vunpack.c.l.b16 %v525
      %v606 = vunpack.c.l.b16 %v526
      %v607 = vunpack.c.l.b16 %v567
      %v608 = vunpack.c.l.b16 %v568
      %v609 = vpack.c.b16 %v590, %v589
      %v610 = vpack.c.b16 %v592, %v591
      %v611 = vpack.c.b16 %v594, %v593
      %v612 = vpack.c.b16 %v596, %v595
      %v613 = vpack.c.b16 %v598, %v597
      %v614 = vpack.c.b16 %v600, %v599
      %v615 = vpack.c.b16 %v602, %v601
      %v616 = vpack.c.b16 %v604, %v603
      %v617 = vpack.c.b16 %v606, %v605
      %v618 = vpack.c.b16 %v608, %v607
      %v620 = vshrl.u32 %v609, 16
      %v622 = vrot.slane %v620, 7
      %v623 = vshll.u32 %v609, 16
      %v625 = vor.u32 %v622, %v623
      %v627 = vshrl.u32 %v610, 16
      %v629 = vrot.slane %v627, 7
      %v630 = vshll.u32 %v610, 16
      %v632 = vor.u32 %v629, %v630
      %v634 = vshrl.u32 %v611, 16
      %v636 = vrot.slane %v634, 7
      %v637 = vshll.u32 %v611, 16
      %v639 = vor.u32 %v636, %v637
      %v641 = vshrl.u32 %v612, 16
      %v643 = vrot.slane %v641, 7
      %v644 = vshll.u32 %v612, 16
      %v646 = vor.u32 %v643, %v644
      %v648 = vshrl.u32 %v613, 16
      %v650 = vrot.slane %v648, 7
      %v651 = vshll.u32 %v613, 16
      %v653 = vor.u32 %v650, %v651
      %v655 = vshrl.u32 %v614, 16
      %v657 = vrot.slane %v655, 7
      %v658 = vshll.u32 %v614, 16
      %v660 = vor.u32 %v657, %v658
      %v662 = vshrl.u32 %v615, 16
      %v664 = vrot.slane %v662, 7
      %v665 = vshll.u32 %v615, 16
      %v667 = vor.u32 %v664, %v665
      %v669 = vshrl.u32 %v616, 16
      %v671 = vrot.slane %v669, 7
      %v672 = vshll.u32 %v616, 16
      %v674 = vor.u32 %v671, %v672
      %v676 = vshrl.u32 %v617, 16
      %v678 = vrot.slane %v676, 7
      %v679 = vshll.u32 %v617, 16
      %v681 = vor.u32 %v678, %v679
      %v683 = vshrl.u32 %v618, 16
      %v685 = vrot.slane %v683, 7
      %v686 = vshll.u32 %v618, 16
      %v688 = vor.u32 %v685, %v686
      %vm709 = vcmask 1040384
      %vm710 = vsmask.f32 256
      %vm711 = vmand %vm709, %vm710
      %v712 = vsel %vm711, 0, %v625
      %v713 = vsel %vm711, 0, %v632
      %v714 = vsel %vm711, 0, %v639
      %v715 = vsel %vm711, 0, %v646
      %v716 = vsel %vm711, 0, %v653
      %v717 = vsel %vm711, 0, %v660
      %v718 = vsel %vm711, 0, %v667
      %v719 = vsel %vm711, 0, %v674
      %v720 = vsel %vm711, 0, %v681
      %v721 = vsel %vm711, 0, %v688
      %v722 = vsel %vm711, %v622, 0
      %v723 = vsel %vm711, %v629, 0
      %v724 = vsel %vm711, %v636, 0
      %v725 = vsel %vm711, %v643, 0
      %v726 = vsel %vm711, %v650, 0
      %v727 = vsel %vm711, %v657, 0
      %v728 = vsel %vm711, %v664, 0
      %v729 = vsel %vm711, %v671, 0
      %v730 = vsel %vm711, %v678, 0
      %v731 = vsel %vm711, %v685, 0
      %vm732 = vsmask.f32 7424
      %v734 = vshrl.u32 %v712, 16
      %v736 = vshll.u32 %v712, 16
      %v738 = vrot.slane %v736, 1
      %v739 = vor.u32 %v734, %v738
      %v741 = vshll.u32 %v722, 16
      %v743 = vrot.slane %v741, 1
      %v744 = vsel %vm732, %v739, %v743
      %v746 = vshrl.u32 %v713, 16
      %v748 = vshll.u32 %v713, 16
      %v750 = vrot.slane %v748, 1
      %v751 = vor.u32 %v746, %v750
      %v753 = vshll.u32 %v723, 16
      %v755 = vrot.slane %v753, 1
      %v756 = vsel %vm732, %v751, %v755
      %v758 = vshrl.u32 %v714, 16
      %v760 = vshll.u32 %v714, 16
      %v762 = vrot.slane %v760, 1
      %v763 = vor.u32 %v758, %v762
      %v765 = vshll.u32 %v724, 16
      %v767 = vrot.slane %v765, 1
      %v768 = vsel %vm732, %v763, %v767
      %v770 = vshrl.u32 %v715, 16
      %v772 = vshll.u32 %v715, 16
      %v774 = vrot.slane %v772, 1
      %v775 = vor.u32 %v770, %v774
      %v777 = vshll.u32 %v725, 16
      %v779 = vrot.slane %v777, 1
      %v780 = vsel %vm732, %v775, %v779
      %v782 = vshrl.u32 %v716, 16
      %v784 = vshll.u32 %v716, 16
      %v786 = vrot.slane %v784, 1
      %v787 = vor.u32 %v782, %v786
      %v789 = vshll.u32 %v726, 16
      %v791 = vrot.slane %v789, 1
      %v792 = vsel %vm732, %v787, %v791
      %v794 = vshrl.u32 %v717, 16
      %v796 = vshll.u32 %v717, 16
      %v798 = vrot.slane %v796, 1
      %v799 = vor.u32 %v794, %v798
      %v801 = vshll.u32 %v727, 16
      %v803 = vrot.slane %v801, 1
      %v804 = vsel %vm732, %v799, %v803
      %v806 = vshrl.u32 %v718, 16
      %v808 = vshll.u32 %v718, 16
      %v810 = vrot.slane %v808, 1
      %v811 = vor.u32 %v806, %v810
      %v813 = vshll.u32 %v728, 16
      %v815 = vrot.slane %v813, 1
      %v816 = vsel %vm732, %v811, %v815
      %v818 = vshrl.u32 %v719, 16
      %v820 = vshll.u32 %v719, 16
      %v822 = vrot.slane %v820, 1
      %v823 = vor.u32 %v818, %v822
      %v825 = vshll.u32 %v729, 16
      %v827 = vrot.slane %v825, 1
      %v828 = vsel %vm732, %v823, %v827
      %829 = vrot.lane.b32.xlu0 %v744, 16
      %v830 = vpop.permute.xlu0 %829
      %831 = vrot.lane.b32.xlu0 %v756, 16
      %v832 = vpop.permute.xlu0 %831
      %833 = vrot.lane.b32.xlu0 %v768, 16
      %v834 = vpop.permute.xlu0 %833
      %835 = vrot.lane.b32.xlu0 %v780, 16
      %v836 = vpop.permute.xlu0 %835
      %837 = vrot.lane.b32.xlu0 %v792, 16
      %v838 = vpop.permute.xlu0 %837
      %839 = vrot.lane.b32.xlu0 %v804, 16
      %v840 = vpop.permute.xlu0 %839
      %841 = vrot.lane.b32.xlu0 %v816, 16
      %v842 = vpop.permute.xlu0 %841
      %843 = vrot.lane.b32.xlu0 %v828, 16
      %v844 = vpop.permute.xlu0 %843
      %vm861 = vcmask 1046528
      %v862 = vrot.slane %v712, 1
      %v863 = vrot.slane %v722, 1
      %v864 = vsel %vm861, %v862, %v863
      %v865 = vrot.slane %v713, 1
      %v866 = vrot.slane %v723, 1
      %v867 = vsel %vm861, %v865, %v866
      %v868 = vrot.slane %v714, 1
      %v869 = vrot.slane %v724, 1
      %v870 = vsel %vm861, %v868, %v869
      %v871 = vrot.slane %v715, 1
      %v872 = vrot.slane %v725, 1
      %v873 = vsel %vm861, %v871, %v872
      %v874 = vrot.slane %v716, 1
      %v875 = vrot.slane %v726, 1
      %v876 = vsel %vm861, %v874, %v875
      %v877 = vrot.slane %v717, 1
      %v878 = vrot.slane %v727, 1
      %v879 = vsel %vm861, %v877, %v878
      %v880 = vrot.slane %v718, 1
      %v881 = vrot.slane %v728, 1
      %v882 = vsel %vm861, %v880, %v881
      %v883 = vrot.slane %v719, 1
      %v884 = vrot.slane %v729, 1
      %v885 = vsel %vm861, %v883, %v884
      %886 = vrot.lane.b32.xlu0 %v864, 32
      %v887 = vpop.permute.xlu0 %886
      %888 = vrot.lane.b32.xlu0 %v867, 32
      %v889 = vpop.permute.xlu0 %888
      %890 = vrot.lane.b32.xlu0 %v870, 32
      %v891 = vpop.permute.xlu0 %890
      %892 = vrot.lane.b32.xlu0 %v873, 32
      %v893 = vpop.permute.xlu0 %892
      %894 = vrot.lane.b32.xlu0 %v876, 32
      %v895 = vpop.permute.xlu0 %894
      %896 = vrot.lane.b32.xlu0 %v879, 32
      %v897 = vpop.permute.xlu0 %896
      %898 = vrot.lane.b32.xlu0 %v882, 32
      %v899 = vpop.permute.xlu0 %898
      %900 = vrot.lane.b32.xlu0 %v885, 32
      %v901 = vpop.permute.xlu0 %900
      %903 = vrot.lane.b32.xlu0 %v713, 48
      %v904 = vpop.permute.xlu0 %903
      %905 = vrot.lane.b32.xlu0 %v714, 48
      %v906 = vpop.permute.xlu0 %905
      %907 = vrot.lane.b32.xlu0 %v715, 48
      %v908 = vpop.permute.xlu0 %907
      %909 = vrot.lane.b32.xlu0 %v716, 48
      %v910 = vpop.permute.xlu0 %909
      %911 = vrot.lane.b32.xlu0 %v717, 48
      %v912 = vpop.permute.xlu0 %911
      %913 = vrot.lane.b32.xlu0 %v718, 48
      %v914 = vpop.permute.xlu0 %913
      %915 = vrot.lane.b32.xlu0 %v719, 48
      %v916 = vpop.permute.xlu0 %915
      %917 = vrot.lane.b32.xlu0 %v720, 48
      %v918 = vpop.permute.xlu0 %917
      %v920 = vshrl.u32 %v720, 16
      %v922 = vshll.u32 %v720, 16
      %v924 = vrot.slane %v922, 1
      %v925 = vor.u32 %v920, %v924
      %v927 = vshll.u32 %v730, 16
      %v929 = vrot.slane %v927, 1
      %v930 = vsel %vm732, %v925, %v929
      %931 = vrot.lane.b32.xlu0 %v756, 64
      %v932 = vpop.permute.xlu0 %931
      %933 = vrot.lane.b32.xlu0 %v768, 64
      %v934 = vpop.permute.xlu0 %933
      %935 = vrot.lane.b32.xlu0 %v780, 64
      %v936 = vpop.permute.xlu0 %935
      %937 = vrot.lane.b32.xlu0 %v792, 64
      %v938 = vpop.permute.xlu0 %937
      %939 = vrot.lane.b32.xlu0 %v804, 64
      %v940 = vpop.permute.xlu0 %939
      %941 = vrot.lane.b32.xlu0 %v816, 64
      %v942 = vpop.permute.xlu0 %941
      %943 = vrot.lane.b32.xlu0 %v828, 64
      %v944 = vpop.permute.xlu0 %943
      %945 = vrot.lane.b32.xlu0 %v930, 64
      %v946 = vpop.permute.xlu0 %945
      %v948 = vrot.slane %v720, 1
      %v949 = vrot.slane %v730, 1
      %v950 = vsel %vm861, %v948, %v949
      %951 = vrot.lane.b32.xlu0 %v867, 80
      %v952 = vpop.permute.xlu0 %951
      %953 = vrot.lane.b32.xlu0 %v870, 80
      %v954 = vpop.permute.xlu0 %953
      %955 = vrot.lane.b32.xlu0 %v873, 80
      %v956 = vpop.permute.xlu0 %955
      %957 = vrot.lane.b32.xlu0 %v876, 80
      %v958 = vpop.permute.xlu0 %957
      %959 = vrot.lane.b32.xlu0 %v879, 80
      %v960 = vpop.permute.xlu0 %959
      %961 = vrot.lane.b32.xlu0 %v882, 80
      %v962 = vpop.permute.xlu0 %961
      %963 = vrot.lane.b32.xlu0 %v885, 80
      %v964 = vpop.permute.xlu0 %963
      %965 = vrot.lane.b32.xlu0 %v950, 80
      %v966 = vpop.permute.xlu0 %965
      %968 = vrot.lane.b32.xlu0 %v714, 96
      %v969 = vpop.permute.xlu0 %968
      %970 = vrot.lane.b32.xlu0 %v715, 96
      %v971 = vpop.permute.xlu0 %970
      %972 = vrot.lane.b32.xlu0 %v716, 96
      %v973 = vpop.permute.xlu0 %972
      %974 = vrot.lane.b32.xlu0 %v717, 96
      %v975 = vpop.permute.xlu0 %974
      %976 = vrot.lane.b32.xlu0 %v718, 96
      %v977 = vpop.permute.xlu0 %976
      %978 = vrot.lane.b32.xlu0 %v719, 96
      %v979 = vpop.permute.xlu0 %978
      %980 = vrot.lane.b32.xlu0 %v720, 96
      %v981 = vpop.permute.xlu0 %980
      %982 = vrot.lane.b32.xlu0 %v721, 96
      %v983 = vpop.permute.xlu0 %982
      %v985 = vshrl.u32 %v721, 16
      %v987 = vshll.u32 %v721, 16
      %v989 = vrot.slane %v987, 1
      %v990 = vor.u32 %v985, %v989
      %v992 = vshll.u32 %v731, 16
      %v994 = vrot.slane %v992, 1
      %v995 = vsel %vm732, %v990, %v994
      %996 = vrot.lane.b32.xlu0 %v768, 112
      %v997 = vpop.permute.xlu0 %996
      %998 = vrot.lane.b32.xlu0 %v780, 112
      %v999 = vpop.permute.xlu0 %998
      %1000 = vrot.lane.b32.xlu0 %v792, 112
      %v1001 = vpop.permute.xlu0 %1000
      %1002 = vrot.lane.b32.xlu0 %v804, 112
      %v1003 = vpop.permute.xlu0 %1002
      %1004 = vrot.lane.b32.xlu0 %v816, 112
      %v1005 = vpop.permute.xlu0 %1004
      %1006 = vrot.lane.b32.xlu0 %v828, 112
      %v1007 = vpop.permute.xlu0 %1006
      %1008 = vrot.lane.b32.xlu0 %v930, 112
      %v1009 = vpop.permute.xlu0 %1008
      %1010 = vrot.lane.b32.xlu0 %v995, 112
      %v1011 = vpop.permute.xlu0 %1010
      %v1013 = vrot.slane %v721, 1
      %v1014 = vrot.slane %v731, 1
      %v1015 = vsel %vm861, %v1013, %v1014
      %vm1016 = vcmask 130048
      %v1018 = vsel %vm1016, %v712, %v830
      %v1020 = vsel %vm1016, %v713, %v832
      %v1022 = vsel %vm1016, %v714, %v834
      %v1024 = vsel %vm1016, %v715, %v836
      %v1026 = vsel %vm1016, %v716, %v838
      %v1028 = vsel %vm1016, %v717, %v840
      %v1030 = vsel %vm1016, %v718, %v842
      %v1032 = vsel %vm1016, %v719, %v844
      %vm1033 = vcmask 261120
      %v1035 = vsel %vm1033, %v1018, %v887
      %v1037 = vsel %vm1033, %v1020, %v889
      %v1039 = vsel %vm1033, %v1022, %v891
      %v1041 = vsel %vm1033, %v1024, %v893
      %v1043 = vsel %vm1033, %v1026, %v895
      %v1045 = vsel %vm1033, %v1028, %v897
      %v1047 = vsel %vm1033, %v1030, %v899
      %v1049 = vsel %vm1033, %v1032, %v901
      %vm1050 = vcmask 392192
      %v1052 = vsel %vm1050, %v1035, %v904
      %v1054 = vsel %vm1050, %v1037, %v906
      %v1056 = vsel %vm1050, %v1039, %v908
      %v1058 = vsel %vm1050, %v1041, %v910
      %v1060 = vsel %vm1050, %v1043, %v912
      %v1062 = vsel %vm1050, %v1045, %v914
      %v1064 = vsel %vm1050, %v1047, %v916
      %v1066 = vsel %vm1050, %v1049, %v918
      %vm1067 = vcmask 523264
      %v1069 = vsel %vm1067, %v1052, %v932
      %v1071 = vsel %vm1067, %v1054, %v934
      %v1073 = vsel %vm1067, %v1056, %v936
      %v1075 = vsel %vm1067, %v1058, %v938
      %v1077 = vsel %vm1067, %v1060, %v940
      %v1079 = vsel %vm1067, %v1062, %v942
      %v1081 = vsel %vm1067, %v1064, %v944
      %v1083 = vsel %vm1067, %v1066, %v946
      %vm1084 = vcmask 654336
      %v1086 = vsel %vm1084, %v1069, %v952
      %v1088 = vsel %vm1084, %v1071, %v954
      %v1090 = vsel %vm1084, %v1073, %v956
      %v1092 = vsel %vm1084, %v1075, %v958
      %v1094 = vsel %vm1084, %v1077, %v960
      %v1096 = vsel %vm1084, %v1079, %v962
      %v1098 = vsel %vm1084, %v1081, %v964
      %v1100 = vsel %vm1084, %v1083, %v966
      %vm1101 = vcmask 785408
      %v1103 = vsel %vm1101, %v1086, %v969
      %v1105 = vsel %vm1101, %v1088, %v971
      %v1107 = vsel %vm1101, %v1090, %v973
      %v1109 = vsel %vm1101, %v1092, %v975
      %v1111 = vsel %vm1101, %v1094, %v977
      %v1113 = vsel %vm1101, %v1096, %v979
      %v1115 = vsel %vm1101, %v1098, %v981
      %v1117 = vsel %vm1101, %v1100, %v983
      %vm1118 = vcmask 916480
      %v1120 = vsel %vm1118, %v1103, %v997
      %v1123 = vsel %vm1118, %v1105, %v999
      %v1126 = vsel %vm1118, %v1107, %v1001
      %v1129 = vsel %vm1118, %v1109, %v1003
      %v1132 = vsel %vm1118, %v1111, %v1005
      %v1135 = vsel %vm1118, %v1113, %v1007
      %v1138 = vsel %vm1118, %v1115, %v1009
      %v1141 = vsel %vm1118, %v1117, %v1011
      %v1143 = vld [vmem:[%s4] sm:$0xf]
      %v1144 = vld [vmem:[%s4 + $0x4] sm:$0xf]
      %v1145 = vld [vmem:[%s4 + $0x8] sm:$0xf]
      %v1146 = vld [vmem:[%s4 + $0xc] sm:$0xf]
      %v1147 = vld [vmem:[%s4 + $0x10] sm:$0xf]
      %v1148 = vld [vmem:[%s4 + $0x14] sm:$0xf]
      %v1149 = vld [vmem:[%s4 + $0x18] sm:$0xf]
      %v1150 = vld [vmem:[%s4 + $0x1c] sm:$0xf]
      %v1151 = vld [vmem:[%s4 + $0x20] sm:$0xf]
      %v1152 = vld [vmem:[%s4 + $0x24] sm:$0xf]
      %v1153 = vld [vmem:[%s4 + $0x28] sm:$0xf]
      %v1154 = vld [vmem:[%s4 + $0x2c] sm:$0xf]
      %v1155 = vld [vmem:[%s4 + $0x30] sm:$0xf]
      %v1156 = vld [vmem:[%s4 + $0x34] sm:$0xf]
      %v1157 = vld [vmem:[%s4 + $0x38] sm:$0xf]
      %v1158 = vld [vmem:[%s4 + $0x3c] sm:$0xf]
      %v1159 = vld [vmem:[%s4 + $0x40] sm:$0xf]
      %v1160 = vld [vmem:[%s4 + $0x44] sm:$0xf]
      %v1161 = vld [vmem:[%s5] sm:$0x1]
      %v1163 = vlaneseq
      %v1164 = vshrl.u32 %v1163, 7
      %v1165 = vsub.s32 0, %v1164
      %v1166 = vrot.slane %v1161, %v1165
      %v1186 = vunpack.c.l.b16 %v1143
      %v1187 = vunpack.c.l.b16 %v1144
      %v1188 = vunpack.c.l.b16 %v1145
      %v1189 = vunpack.c.l.b16 %v1146
      %v1190 = vunpack.c.l.b16 %v1147
      %v1191 = vunpack.c.l.b16 %v1148
      %v1192 = vunpack.c.l.b16 %v1149
      %v1193 = vunpack.c.l.b16 %v1150
      %v1194 = vunpack.c.l.b16 %v1151
      %v1195 = vunpack.c.l.b16 %v1152
      %v1196 = vunpack.c.l.b16 %v1153
      %v1197 = vunpack.c.l.b16 %v1154
      %v1198 = vunpack.c.l.b16 %v1155
      %v1199 = vunpack.c.l.b16 %v1156
      %v1200 = vunpack.c.l.b16 %v1157
      %v1201 = vunpack.c.l.b16 %v1158
      %v1202 = vunpack.c.l.b16 %v1159
      %v1203 = vunpack.c.l.b16 %v1160
      %v1204 = vpack.c.b16 %v1187, %v1186
      %v1205 = vpack.c.b16 %v1189, %v1188
      %v1206 = vpack.c.b16 %v1191, %v1190
      %v1207 = vpack.c.b16 %v1193, %v1192
      %v1208 = vpack.c.b16 %v1195, %v1194
      %v1209 = vpack.c.b16 %v1197, %v1196
      %v1210 = vpack.c.b16 %v1199, %v1198
      %v1211 = vpack.c.b16 %v1201, %v1200
      %v1212 = vpack.c.b16 %v1203, %v1202
      %v1223 = vsel %vm1016, %v870, 0
      %v1226 = vsel %vm1016, %v873, 0
      %v1229 = vsel %vm1016, %v876, 0
      %v1232 = vsel %vm1016, %v879, 0
      %v1235 = vsel %vm1016, %v882, 0
      %v1238 = vsel %vm1016, %v885, 0
      %v1241 = vsel %vm1016, %v950, 0
      %v1244 = vsel %vm1016, %v1015, 0
      %1246 = vmatprep.subr.bf16.mxu0 0
      %1247 = vmatpush1.bf16.msra.mxu0 %v1204
      %1248 = vmatprep.subr.bf16.mxu0 0
      %1249 = vmatpush1.bf16.msra.mxu0 %v1205
      %1250 = vmatprep.subr.bf16.mxu0 0
      %1251 = vmatpush1.bf16.msra.mxu0 %v1206
      %1252 = vmatprep.subr.bf16.mxu0 0
      %1253 = vmatpush1.bf16.msra.mxu0 %v1207
      %1254 = vmatprep.subr.bf16.mxu0 0
      %1255 = vmatpush1.bf16.msra.mxu0 %v1208
      %1256 = vmatprep.subr.bf16.mxu0 0
      %1257 = vmatpush1.bf16.msra.mxu0 %v1209
      %1258 = vmatprep.subr.bf16.mxu0 0
      %1259 = vmatpush1.bf16.msra.mxu0 %v1210
      %1260 = vmatprep.subr.bf16.mxu0 0
      %1261 = vmatpush1.bf16.msra.mxu0 %v1211
      %1262 = vmatprep.subr.bf16.mxu0 0
      %1263 = vmatpush1.bf16.msra.mxu0 %v1212
      %1264 = vmatprep.subr.bf16.mxu0 0
      %1265 = vmatpush1.bf16.msra.mxu0 0
      %1266 = vmatprep.subr.bf16.mxu0 0
      %1267 = vmatpush1.bf16.msra.mxu0 0
      %1268 = vmatprep.subr.bf16.mxu0 0
      %1269 = vmatpush1.bf16.msra.mxu0 0
      %1270 = vmatprep.subr.bf16.mxu0 0
      %1271 = vmatpush1.bf16.msra.mxu0 0
      %1272 = vmatprep.subr.bf16.mxu0 0
      %1273 = vmatpush1.bf16.msra.mxu0 0
      %1274 = vmatprep.subr.bf16.mxu0 0
      %1275 = vmatpush1.bf16.msra.mxu0 0
      %1276 = vmatprep.subr.bf16.mxu0 0
      %1277 = vmatpush1.bf16.msra.mxu0 0
      %1278 = vmatprep.mubr.bf16.mxu0 %v1223
      %1279 = vmatmul.mubr.bf16.gmra.mrb[0].mxu0 %v1120
      %v1280 = vpop.f32.mrb[0].mxu0
      %v1281 = vadd.f32 %v1166, %v1280
      %v1282 = vpop.f32.mrb[0].mxu0
      %v1283 = vpop.f32.mrb[0].mxu0
      %v1284 = vadd.f32 %v1166, %v1283
      %v1285 = vpop.f32.mrb[0].mxu0
      %1286 = vmatprep.mubr.bf16.mxu0 %v1226
      %1287 = vmatmul.mubr.bf16.gmra.mrb[0].mxu0 %v1123
      %v1288 = vpop.f32.mrb[0].mxu0
      %v1289 = vadd.f32 %v1166, %v1288
      %v1290 = vpop.f32.mrb[0].mxu0
      %v1291 = vpop.f32.mrb[0].mxu0
      %v1292 = vadd.f32 %v1166, %v1291
      %v1293 = vpop.f32.mrb[0].mxu0
      %1294 = vmatprep.mubr.bf16.mxu0 %v1229
      %1295 = vmatmul.mubr.bf16.gmra.mrb[0].mxu0 %v1126
      %v1296 = vpop.f32.mrb[0].mxu0
      %v1297 = vadd.f32 %v1166, %v1296
      %v1298 = vpop.f32.mrb[0].mxu0
      %v1299 = vpop.f32.mrb[0].mxu0
      %v1300 = vadd.f32 %v1166, %v1299
      %v1301 = vpop.f32.mrb[0].mxu0
      %1302 = vmatprep.mubr.bf16.mxu0 %v1232
      %1303 = vmatmul.mubr.bf16.gmra.mrb[0].mxu0 %v1129
      %v1304 = vpop.f32.mrb[0].mxu0
      %v1305 = vadd.f32 %v1166, %v1304
      %v1306 = vpop.f32.mrb[0].mxu0
      %v1307 = vpop.f32.mrb[0].mxu0
      %v1308 = vadd.f32 %v1166, %v1307
      %v1309 = vpop.f32.mrb[0].mxu0
      %1310 = vmatprep.mubr.bf16.mxu0 %v1235
      %1311 = vmatmul.mubr.bf16.gmra.mrb[0].mxu0 %v1132
      %v1312 = vpop.f32.mrb[0].mxu0
      %v1313 = vadd.f32 %v1166, %v1312
      %v1314 = vpop.f32.mrb[0].mxu0
      %v1315 = vpop.f32.mrb[0].mxu0
      %v1316 = vadd.f32 %v1166, %v1315
      %v1317 = vpop.f32.mrb[0].mxu0
      %1318 = vmatprep.mubr.bf16.mxu0 %v1238
      %1319 = vmatmul.mubr.bf16.gmra.mrb[0].mxu0 %v1135
      %v1320 = vpop.f32.mrb[0].mxu0
      %v1321 = vadd.f32 %v1166, %v1320
      %v1322 = vpop.f32.mrb[0].mxu0
      %v1323 = vpop.f32.mrb[0].mxu0
      %v1324 = vadd.f32 %v1166, %v1323
      %v1325 = vpop.f32.mrb[0].mxu0
      %1326 = vmatprep.mubr.bf16.mxu0 %v1241
      %1327 = vmatmul.mubr.bf16.gmra.mrb[0].mxu0 %v1138
      %v1328 = vpop.f32.mrb[0].mxu0
      %v1329 = vadd.f32 %v1166, %v1328
      %v1330 = vpop.f32.mrb[0].mxu0
      %v1331 = vpop.f32.mrb[0].mxu0
      %v1332 = vadd.f32 %v1166, %v1331
      %v1333 = vpop.f32.mrb[0].mxu0
      %1334 = vmatprep.mubr.bf16.mxu0 %v1244
      %1335 = vmatmul.mubr.bf16.gmra.mrb[0].mxu0 %v1141
      %v1336 = vpop.f32.mrb[0].mxu0
      %v1337 = vadd.f32 %v1166, %v1336
      %v1338 = vpop.f32.mrb[0].mxu0
      %v1339 = vpop.f32.mrb[0].mxu0
      %v1340 = vadd.f32 %v1166, %v1339
      %v1341 = vpop.f32.mrb[0].mxu0
      %1342 = vdwg.mxu0
      %v1343 = vmax.f32 %v1281, 0.0
      %v1344 = vmax.f32 %v1284, 0.0
      %v1345 = vmax.f32 %v1289, 0.0
      %v1346 = vmax.f32 %v1292, 0.0
      %v1347 = vmax.f32 %v1297, 0.0
      %v1348 = vmax.f32 %v1300, 0.0
      %v1349 = vmax.f32 %v1305, 0.0
      %v1350 = vmax.f32 %v1308, 0.0
      %v1351 = vmax.f32 %v1313, 0.0
      %v1352 = vmax.f32 %v1316, 0.0
      %v1353 = vmax.f32 %v1321, 0.0
      %v1354 = vmax.f32 %v1324, 0.0
      %v1355 = vmax.f32 %v1329, 0.0
      %v1356 = vmax.f32 %v1332, 0.0
      %v1357 = vmax.f32 %v1337, 0.0
      %v1358 = vmax.f32 %v1340, 0.0
      %v1359 = vld [vmem:[%s6] sm:$0x1]
      %v1361 = vlaneseq
      %v1362 = vshrl.u32 %v1361, 7
      %v1363 = vsub.s32 0, %v1362
      %v1364 = vrot.slane %v1359, %v1363
      %v1366 = vmul.f32 %v1343, %v1364
      %v1367 = vmul.f32 %v1344, %v1364
      %v1368 = vmul.f32 %v1345, %v1364
      %v1369 = vmul.f32 %v1346, %v1364
      %v1370 = vmul.f32 %v1347, %v1364
      %v1371 = vmul.f32 %v1348, %v1364
      %v1372 = vmul.f32 %v1349, %v1364
      %v1373 = vmul.f32 %v1350, %v1364
      %v1374 = vmul.f32 %v1351, %v1364
      %v1375 = vmul.f32 %v1352, %v1364
      %v1376 = vmul.f32 %v1353, %v1364
      %v1377 = vmul.f32 %v1354, %v1364
      %v1378 = vmul.f32 %v1355, %v1364
      %v1379 = vmul.f32 %v1356, %v1364
      %v1380 = vmul.f32 %v1357, %v1364
      %v1381 = vmul.f32 %v1358, %v1364
      %v1382 = vsel %vm1016, %v1366, 0.0
      %1383 = vadd.xlane.f32.xlu0 %v1382
      %v1384 = vpop.xlane.xlu0 %1383
      %v1385 = vsel %vm1016, %v1367, 0.0
      %1386 = vadd.xlane.f32.xlu0 %v1385
      %v1387 = vpop.xlane.xlu0 %1386
      %v1388 = vsel %vm1016, %v1368, 0.0
      %1389 = vadd.xlane.f32.xlu0 %v1388
      %v1390 = vpop.xlane.xlu0 %1389
      %v1391 = vsel %vm1016, %v1369, 0.0
      %1392 = vadd.xlane.f32.xlu0 %v1391
      %v1393 = vpop.xlane.xlu0 %1392
      %v1394 = vsel %vm1016, %v1370, 0.0
      %1395 = vadd.xlane.f32.xlu0 %v1394
      %v1396 = vpop.xlane.xlu0 %1395
      %v1397 = vsel %vm1016, %v1371, 0.0
      %1398 = vadd.xlane.f32.xlu0 %v1397
      %v1399 = vpop.xlane.xlu0 %1398
      %v1400 = vsel %vm1016, %v1372, 0.0
      %1401 = vadd.xlane.f32.xlu0 %v1400
      %v1402 = vpop.xlane.xlu0 %1401
      %v1403 = vsel %vm1016, %v1373, 0.0
      %1404 = vadd.xlane.f32.xlu0 %v1403
      %v1405 = vpop.xlane.xlu0 %1404
      %v1406 = vsel %vm1016, %v1374, 0.0
      %1407 = vadd.xlane.f32.xlu0 %v1406
      %v1408 = vpop.xlane.xlu0 %1407
      %v1409 = vsel %vm1016, %v1375, 0.0
      %1410 = vadd.xlane.f32.xlu0 %v1409
      %v1411 = vpop.xlane.xlu0 %1410
      %v1412 = vsel %vm1016, %v1376, 0.0
      %1413 = vadd.xlane.f32.xlu0 %v1412
      %v1414 = vpop.xlane.xlu0 %1413
      %v1415 = vsel %vm1016, %v1377, 0.0
      %1416 = vadd.xlane.f32.xlu0 %v1415
      %v1417 = vpop.xlane.xlu0 %1416
      %v1418 = vsel %vm1016, %v1378, 0.0
      %1419 = vadd.xlane.f32.xlu0 %v1418
      %v1420 = vpop.xlane.xlu0 %1419
      %v1421 = vsel %vm1016, %v1379, 0.0
      %1422 = vadd.xlane.f32.xlu0 %v1421
      %v1423 = vpop.xlane.xlu0 %1422
      %v1424 = vsel %vm1016, %v1380, 0.0
      %1425 = vadd.xlane.f32.xlu0 %v1424
      %v1426 = vpop.xlane.xlu0 %1425
      %v1427 = vsel %vm1016, %v1381, 0.0
      %1428 = vadd.xlane.f32.xlu0 %v1427
      %v1429 = vpop.xlane.xlu0 %1428
      %v1430 = vld [vmem:[#allocation2] sm:$0x1]
      %v1432 = vlaneseq
      %v1433 = vshrl.u32 %v1432, 7
      %v1434 = vsub.s32 0, %v1433
      %v1435 = vrot.slane %v1430, %v1434
      %v1437 = vadd.f32 %v1384, %v1435
      %v1438 = vadd.f32 %v1387, %v1435
      %v1439 = vadd.f32 %v1390, %v1435
      %v1440 = vadd.f32 %v1393, %v1435
      %v1441 = vadd.f32 %v1396, %v1435
      %v1442 = vadd.f32 %v1399, %v1435
      %v1443 = vadd.f32 %v1402, %v1435
      %v1444 = vadd.f32 %v1405, %v1435
      %v1445 = vadd.f32 %v1408, %v1435
      %v1446 = vadd.f32 %v1411, %v1435
      %v1447 = vadd.f32 %v1414, %v1435
      %v1448 = vadd.f32 %v1417, %v1435
      %v1449 = vadd.f32 %v1420, %v1435
      %v1450 = vadd.f32 %v1423, %v1435
      %v1451 = vadd.f32 %v1426, %v1435
      %v1452 = vadd.f32 %v1429, %v1435
      %v1453 = vadd.f32 %v1437, 1.0
      %v1454 = vadd.f32 %v1438, 1.0
      %v1455 = vadd.f32 %v1439, 1.0
      %v1456 = vadd.f32 %v1440, 1.0
      %v1457 = vadd.f32 %v1441, 1.0
      %v1458 = vadd.f32 %v1442, 1.0
      %v1459 = vadd.f32 %v1443, 1.0
      %v1460 = vadd.f32 %v1444, 1.0
      %v1461 = vadd.f32 %v1445, 1.0
      %v1462 = vadd.f32 %v1446, 1.0
      %v1463 = vadd.f32 %v1447, 1.0
      %v1464 = vadd.f32 %v1448, 1.0
      %v1465 = vadd.f32 %v1449, 1.0
      %v1466 = vadd.f32 %v1450, 1.0
      %v1467 = vadd.f32 %v1451, 1.0
      %v1468 = vadd.f32 %v1452, 1.0
      %v1469 = vmax.f32 %v1453, 0.0
      %v1470 = vmax.f32 %v1454, 0.0
      %v1471 = vmax.f32 %v1455, 0.0
      %v1472 = vmax.f32 %v1456, 0.0
      %v1473 = vmax.f32 %v1457, 0.0
      %v1474 = vmax.f32 %v1458, 0.0
      %v1475 = vmax.f32 %v1459, 0.0
      %v1476 = vmax.f32 %v1460, 0.0
      %v1477 = vmax.f32 %v1461, 0.0
      %v1478 = vmax.f32 %v1462, 0.0
      %v1479 = vmax.f32 %v1463, 0.0
      %v1480 = vmax.f32 %v1464, 0.0
      %v1481 = vmax.f32 %v1465, 0.0
      %v1482 = vmax.f32 %v1466, 0.0
      %v1483 = vmax.f32 %v1467, 0.0
      %v1484 = vmax.f32 %v1468, 0.0
      %v1485 = vadd.f32 %v1469, 1e-06
      %v1486 = vadd.f32 %v1470, 1e-06
      %v1487 = vadd.f32 %v1471, 1e-06
      %v1488 = vadd.f32 %v1472, 1e-06
      %v1489 = vadd.f32 %v1473, 1e-06
      %v1490 = vadd.f32 %v1474, 1e-06
      %v1491 = vadd.f32 %v1475, 1e-06
      %v1492 = vadd.f32 %v1476, 1e-06
      %v1493 = vadd.f32 %v1477, 1e-06
      %v1494 = vadd.f32 %v1478, 1e-06
      %v1495 = vadd.f32 %v1479, 1e-06
      %v1496 = vadd.f32 %v1480, 1e-06
      %v1497 = vadd.f32 %v1481, 1e-06
      %v1498 = vadd.f32 %v1482, 1e-06
      %v1499 = vadd.f32 %v1483, 1e-06
      %v1500 = vadd.f32 %v1484, 1e-06
      %v1501 = vrcp.pop %v1485
      %v1502 = vrcp.pop %v1486
      %v1503 = vrcp.pop %v1487
      %v1504 = vrcp.pop %v1488
      %v1505 = vrcp.pop %v1489
      %v1506 = vrcp.pop %v1490
      %v1507 = vrcp.pop %v1491
      %v1508 = vrcp.pop %v1492
      %v1509 = vrcp.pop %v1493
      %v1510 = vrcp.pop %v1494
      %v1511 = vrcp.pop %v1495
      %v1512 = vrcp.pop %v1496
      %v1513 = vrcp.pop %v1497
      %v1514 = vrcp.pop %v1498
      %v1515 = vrcp.pop %v1499
      %v1516 = vrcp.pop %v1500
      %v1517 = vmul.f32 %v1485, %v1501
      %v1518 = vmul.f32 %v1486, %v1502
      %v1519 = vmul.f32 %v1487, %v1503
      %v1520 = vmul.f32 %v1488, %v1504
      %v1521 = vmul.f32 %v1489, %v1505
      %v1522 = vmul.f32 %v1490, %v1506
      %v1523 = vmul.f32 %v1491, %v1507
      %v1524 = vmul.f32 %v1492, %v1508
      %v1525 = vmul.f32 %v1493, %v1509
      %v1526 = vmul.f32 %v1494, %v1510
      %v1527 = vmul.f32 %v1495, %v1511
      %v1528 = vmul.f32 %v1496, %v1512
      %v1529 = vmul.f32 %v1497, %v1513
      %v1530 = vmul.f32 %v1498, %v1514
      %v1531 = vmul.f32 %v1499, %v1515
      %v1532 = vmul.f32 %v1500, %v1516
      %v1533 = vsub.f32 2.0, %v1517
      %v1534 = vsub.f32 2.0, %v1518
      %v1535 = vsub.f32 2.0, %v1519
      %v1536 = vsub.f32 2.0, %v1520
      %v1537 = vsub.f32 2.0, %v1521
      %v1538 = vsub.f32 2.0, %v1522
      %v1539 = vsub.f32 2.0, %v1523
      %v1540 = vsub.f32 2.0, %v1524
      %v1541 = vsub.f32 2.0, %v1525
      %v1542 = vsub.f32 2.0, %v1526
      %v1543 = vsub.f32 2.0, %v1527
      %v1544 = vsub.f32 2.0, %v1528
      %v1545 = vsub.f32 2.0, %v1529
      %v1546 = vsub.f32 2.0, %v1530
      %v1547 = vsub.f32 2.0, %v1531
      %v1548 = vsub.f32 2.0, %v1532
      %v1549 = vmul.f32 %v1501, %v1533
      %v1550 = vmul.f32 %v1502, %v1534
      %v1551 = vmul.f32 %v1503, %v1535
      %v1552 = vmul.f32 %v1504, %v1536
      %v1553 = vmul.f32 %v1505, %v1537
      %v1554 = vmul.f32 %v1506, %v1538
      %v1555 = vmul.f32 %v1507, %v1539
      %v1556 = vmul.f32 %v1508, %v1540
      %v1557 = vmul.f32 %v1509, %v1541
      %v1558 = vmul.f32 %v1510, %v1542
      %v1559 = vmul.f32 %v1511, %v1543
      %v1560 = vmul.f32 %v1512, %v1544
      %v1561 = vmul.f32 %v1513, %v1545
      %v1562 = vmul.f32 %v1514, %v1546
      %v1563 = vmul.f32 %v1515, %v1547
      %v1564 = vmul.f32 %v1516, %v1548
      %v1565 = vld [vmem:[%s498] sm:$0xff]
      %v1566 = vld [vmem:[%s498 + $0x8] sm:$0xff]
      %v1567 = vld [vmem:[%s498 + $0x10] sm:$0xff]
      %v1568 = vld [vmem:[%s498 + $0x18] sm:$0xff]
      %v1569 = vld [vmem:[%s498 + $0x20] sm:$0xff]
      %v1570 = vld [vmem:[%s498 + $0x28] sm:$0xff]
      %v1571 = vld [vmem:[%s498 + $0x30] sm:$0xff]
      %v1572 = vld [vmem:[%s498 + $0x38] sm:$0xff]
      %v1573 = vld [vmem:[%s498 + $0x40] sm:$0xff]
      %v1574 = vld [vmem:[%s498 + $0x48] sm:$0xff]
      %v1575 = vld [vmem:[%s498 + $0x50] sm:$0xff]
      %v1576 = vld [vmem:[%s498 + $0x58] sm:$0xff]
      %v1577 = vld [vmem:[%s498 + $0x60] sm:$0xff]
      %v1578 = vld [vmem:[%s498 + $0x68] sm:$0xff]
      %v1579 = vld [vmem:[%s498 + $0x70] sm:$0xff]
      %v1580 = vld [vmem:[%s498 + $0x78] sm:$0xff]
      %1582 = vset.pattern.permute.xlu0 0
      %1583 = vperm.xlu0 %1582, %v1549
      %v1584 = vpop.permute.xlu0 %1583
      %1587 = vset.pattern.permute.xlu0 0
      %1588 = vperm.xlu0 %1587, %v1550
      %v1589 = vpop.permute.xlu0 %1588
      %1592 = vset.pattern.permute.xlu0 0
      %1593 = vperm.xlu0 %1592, %v1551
      %v1594 = vpop.permute.xlu0 %1593
      %1597 = vset.pattern.permute.xlu0 0
      %1598 = vperm.xlu0 %1597, %v1552
      %v1599 = vpop.permute.xlu0 %1598
      %1602 = vset.pattern.permute.xlu0 0
      %1603 = vperm.xlu0 %1602, %v1553
      %v1604 = vpop.permute.xlu0 %1603
      %1607 = vset.pattern.permute.xlu0 0
      %1608 = vperm.xlu0 %1607, %v1554
      %v1609 = vpop.permute.xlu0 %1608
      %1612 = vset.pattern.permute.xlu0 0
      %1613 = vperm.xlu0 %1612, %v1555
      %v1614 = vpop.permute.xlu0 %1613
      %1617 = vset.pattern.permute.xlu0 0
      %1618 = vperm.xlu0 %1617, %v1556
      %v1619 = vpop.permute.xlu0 %1618
      %1622 = vset.pattern.permute.xlu0 0
      %1623 = vperm.xlu0 %1622, %v1557
      %v1624 = vpop.permute.xlu0 %1623
      %1627 = vset.pattern.permute.xlu0 0
      %1628 = vperm.xlu0 %1627, %v1558
      %v1629 = vpop.permute.xlu0 %1628
      %1632 = vset.pattern.permute.xlu0 0
      %1633 = vperm.xlu0 %1632, %v1559
      %v1634 = vpop.permute.xlu0 %1633
      %1637 = vset.pattern.permute.xlu0 0
      %1638 = vperm.xlu0 %1637, %v1560
      %v1639 = vpop.permute.xlu0 %1638
      %1642 = vset.pattern.permute.xlu0 0
      %1643 = vperm.xlu0 %1642, %v1561
      %v1644 = vpop.permute.xlu0 %1643
      %1647 = vset.pattern.permute.xlu0 0
      %1648 = vperm.xlu0 %1647, %v1562
      %v1649 = vpop.permute.xlu0 %1648
      %1652 = vset.pattern.permute.xlu0 0
      %1653 = vperm.xlu0 %1652, %v1563
      %v1654 = vpop.permute.xlu0 %1653
      %1657 = vset.pattern.permute.xlu0 0
      %1658 = vperm.xlu0 %1657, %v1564
      %v1659 = vpop.permute.xlu0 %1658
      %v1661 = vmul.f32 %v1565, %v1584
      %v1662 = vmul.f32 %v1566, %v1589
      %v1663 = vmul.f32 %v1567, %v1594
      %v1664 = vmul.f32 %v1568, %v1599
      %v1665 = vmul.f32 %v1569, %v1604
      %v1666 = vmul.f32 %v1570, %v1609
      %v1667 = vmul.f32 %v1571, %v1614
      %v1668 = vmul.f32 %v1572, %v1619
      %v1669 = vmul.f32 %v1573, %v1624
      %v1670 = vmul.f32 %v1574, %v1629
      %v1671 = vmul.f32 %v1575, %v1634
      %v1672 = vmul.f32 %v1576, %v1639
      %v1673 = vmul.f32 %v1577, %v1644
      %v1674 = vmul.f32 %v1578, %v1649
      %v1675 = vmul.f32 %v1579, %v1654
      %v1676 = vmul.f32 %v1580, %v1659
      %vm1677 = vcmask 31744
      %1678 = vst.msk [vmem:[%s508] sm:$0xff] %vm1677, %v1661
      %1679 = vst.msk [vmem:[%s508 + $0x8] sm:$0xff] %vm1677, %v1662
      %1680 = vst.msk [vmem:[%s508 + $0x10] sm:$0xff] %vm1677, %v1663
      %1681 = vst.msk [vmem:[%s508 + $0x18] sm:$0xff] %vm1677, %v1664
      %1682 = vst.msk [vmem:[%s508 + $0x20] sm:$0xff] %vm1677, %v1665
      %1683 = vst.msk [vmem:[%s508 + $0x28] sm:$0xff] %vm1677, %v1666
      %1684 = vst.msk [vmem:[%s508 + $0x30] sm:$0xff] %vm1677, %v1667
      %1685 = vst.msk [vmem:[%s508 + $0x38] sm:$0xff] %vm1677, %v1668
      %1686 = vst.msk [vmem:[%s508 + $0x40] sm:$0xff] %vm1677, %v1669
      %1687 = vst.msk [vmem:[%s508 + $0x48] sm:$0xff] %vm1677, %v1670
      %1688 = vst.msk [vmem:[%s508 + $0x50] sm:$0xff] %vm1677, %v1671
      %1689 = vst.msk [vmem:[%s508 + $0x58] sm:$0xff] %vm1677, %v1672
      %1690 = vst.msk [vmem:[%s508 + $0x60] sm:$0xff] %vm1677, %v1673
      %1691 = vst.msk [vmem:[%s508 + $0x68] sm:$0xff] %vm1677, %v1674
      %1692 = vst.msk [vmem:[%s508 + $0x70] sm:$0xff] %vm1677, %v1675
      %1693 = vst.msk [vmem:[%s508 + $0x78] sm:$0xff] %vm1677, %v1676
      %s1694 = smul.u32 16, %s26
      %p1695 = scmp.lt.s32.totalorder %s25, 1
      %s1696 = scalar_select %p1695, %s25, 1
      %p1697 = scmp.lt.s32.totalorder %s1694, 31
      %s1698 = scalar_select %p1697, %s1694, 31
      %s1699 = smul.addr %s1696, 32
      %s1700 = sadd.s32 %s1698, %s1699
      %s1701 = smul.addr %s1700, 8
      %s1702 = scalar_lea.vmem %s8, %s1701
      // Predicated region
      $region53: #{a_call__.5} parent=51 // pred_check
        %p1703 = pneg %p265
      $region54: #{a_call__.5} parent=51 // pred_check_branch
        %1705 = sbr.rel (%p1703) target = $region56
      $region55: #{a_call__.5} parent=51 // pred_region
        %s1706 = smul.u32 16, %s26
      $region56: #{a_call__.5} parent=51 // pred_fallthru
        _
    $region52: #{a_call__.5} parent=5 // pred_fallthru
      _
    %p1707 = scmp.le.s32.totalorder 2, %s16
    // Predicated region
    $region57: #{a_call__.5} parent=5 // pred_check
      %p1708 = pneg %p1707
    $region58: #{a_call__.5} parent=5 // pred_check_branch
      %1710 = sbr.rel (%p1708) target = $region60
    $region59: #{a_call__.5} parent=5 // pred_region
      %s1711 = ssub.s32 %s16, 2
      // Predicated region
      $region61: #{a_call__.5} parent=59 // pred_check
        %p1712 = pneg %p271
      $region62: #{a_call__.5} parent=59 // pred_check_branch
        %1714 = sbr.rel (%p1712) target = $region64
      $region63: #{a_call__.5} parent=59 // pred_region
        %s1715 = smul.u32 16, %s28
        %p1716 = scmp.lt.s32.totalorder %s27, 1
        %s1717 = scalar_select %p1716, %s27, 1
        %p1718 = scmp.lt.s32.totalorder %s1715, 31
        %s1719 = scalar_select %p1718, %s1715, 31
        %s1720 = smul.addr %s1717, 32
        %s1721 = sadd.s32 %s1719, %s1720
        %s1722 = smul.addr %s1721, 8
        %s1723 = scalar_lea.vmem %s8, %s1722
      $region64: #{a_call__.5} parent=59 // pred_fallthru
        _
    $region60: #{a_call__.5} parent=5 // pred_fallthru
      _
  $region6: #{a_call__.5} parent=0 // loop_footer
    %s20 = sadd.s32 1, %s16
  $region7: #{a_call__.5} parent=0 // loop_footer_branch
    %15 = sbr.rel target = $region3
  $region8: #{a_call__.5} parent=0 // loop_exit
    _

// kernel: a_call__.3
$region0: #{a_call__.3}
  #allocation0 [shape = 'u32[]', space=smem, size = 0x4, offset = 0x4, fixed_abs, tag = 'smem constant byte address 0x4 - core index']
  #allocation1 [shape = 'u32[144,128]{1,0:T(1,128)}', space=vmem, size = 0x12000, scoped, tag = 'internal scratch']
  %s0 = inlined_call_operand.vmem [shape: f32[2,16,16,4], index: 0, kind: input, shape index: {}, may-alias: {0,1,2}]
  %s1 = inlined_call_operand.vmem [shape: f32[2,16,16,4], index: 1, kind: input, shape index: {}, may-alias: {0,1,2}]
  %s2 = inlined_call_operand.vmem [shape: f32[2,16,16,4], index: 2, kind: input, shape index: {}, may-alias: {0,1,2}]
  %s3 = inlined_call_operand.vmem [shape: bf16[36,4], index: 3, kind: input, shape index: {}]
  %s4 = inlined_call_operand.vmem [shape: f32[1,4], index: 4, kind: input, shape index: {}]
  %s5 = inlined_call_operand.vmem [shape: f32[2,256,4], index: 5, kind: output, shape index: {}]
  %s6 = sld [smem:[#allocation0]]
  $region53: #{a_call__.3} parent=0
    _
  %s8 = ssub.s32 1, %s6
  %s9 = scalar_select 0, %s8, %s6
  loop: start=0, step=1, limit=6
  $region2: #{a_call__.3} parent=0 // loop_pre_header
    _
  $region3: #{a_call__.3} parent=0 // loop_header
    %s11 = sphi 0, %s15
    %p12 = scmp.ge.s32.totalorder %s11, 6
    %s18 = sphi 0, %s30
    %s19 = sphi 0, %s26
    %s20 = sphi 0, %s18
    %s21 = sphi 0, %s19
    %s22 = sphi 0, %s20
    %s23 = sphi 0, %s21
    %s43 = sphi 0, %s45
    %s46 = sphi 0, %s43
    %s47 = sphi 0, %s46
    %s63 = sphi 0, %s47
    %s71 = sphi 0, %s73
    %s74 = sphi 0, %s71
    %s75 = sphi 0, %s74
    %s91 = sphi 0, %s75
    %s107 = sphi 0, %s109
    %s110 = sphi 0, %s107
    %s111 = sphi 0, %s110
    %s127 = sphi 0, %s111
    %s131 = sphi 0, %s131
    %s133 = sphi 0, %s131
    %s134 = sphi 0, %s133
    %s148 = sphi 0, %s134
    %s152 = sphi 0, %s152
    %s154 = sphi 0, %s152
    %s155 = sphi 0, %s154
    %s169 = sphi 0, %s155
    %s177 = sphi 0, %s179
    %s180 = sphi 0, %s177
    %s181 = sphi 0, %s180
    %s197 = sphi 0, %s181
  $region4: #{a_call__.3} parent=0 // loop_header_branch
    %14 = sbr.rel (%p12) target = $region8
  $region5: #{a_call__.3} parent=0 // loop_body
    %s16 = ssub.s32 %s11, 1
    %s17 = ssub.s32 %s11, 2
    %s24 = sadd.s32 1, %s19
    %p25 = scmp.ge.s32.totalorder %s24, 2
    %s26 = scalar_select %p25, 0, %s24
    %s27 = sadd.s32 1, %s18
    %s28 = scalar_select %p25, %s27, %s18
    %p29 = scmp.ge.s32.totalorder %s28, 2
    %s30 = scalar_select %p29, 0, %s28
    %s31 = smul.u32 %s19, 8
    %s32 = ssub.s32 %s31, 1
    %p33 = scmp.gt.s32.totalorder %s32, 0
    %s34 = scalar_select %p33, %s32, 0
    %s35 = smul.u32 %s26, 8
    %s36 = ssub.s32 %s35, 1
    %p37 = scmp.gt.s32.totalorder %s36, 0
    %s38 = scalar_select %p37, %s36, 0
    %s39 = ssub.s32 %s18, %s30
    %s40 = ssub.s32 %s34, %s38
    %s41 = sor.u32 %s39, %s40
    %p42 = scmp.eq.s32.totalorder %s41, 0
    %s44 = sadd.s32 %s43, 1
    %s45 = scalar_select %p42, %s43, %s44
    %p48 = pneg %p42
    %p49 = scmp.eq.s32.totalorder %s11, 3
    %p50 = por %p48, %p49
    %p51 = scmp.ne.s32.totalorder %s43, %s46
    %p52 = scmp.eq.s32.totalorder %s11, 0
    %p53 = por %p51, %p52
    %p54 = scmp.ne.s32.totalorder %s43, %s46
    %p55 = scmp.eq.s32.totalorder %s16, 3
    %p56 = por %p54, %p55
    %p57 = scmp.ne.s32.totalorder %s46, %s47
    %p58 = scmp.eq.s32.totalorder %s16, 0
    %p59 = por %p57, %p58
    %p60 = scmp.ne.s32.totalorder %s46, %s47
    %p61 = scmp.eq.s32.totalorder %s17, 3
    %p62 = por %p60, %p61
    %p64 = scmp.ne.s32.totalorder %s47, %s63
    %p65 = scmp.eq.s32.totalorder %s17, 0
    %p66 = por %p64, %p65
    %s67 = ssub.s32 %s18, %s30
    %s68 = ssub.s32 %s19, %s26
    %s69 = sor.u32 %s67, %s68
    %p70 = scmp.eq.s32.totalorder %s69, 0
    %s72 = sadd.s32 %s71, 1
    %s73 = scalar_select %p70, %s71, %s72
    %p76 = pneg %p70
    %p77 = scmp.eq.s32.totalorder %s11, 3
    %p78 = por %p76, %p77
    %p79 = scmp.ne.s32.totalorder %s71, %s74
    %p80 = scmp.eq.s32.totalorder %s11, 0
    %p81 = por %p79, %p80
    %p82 = scmp.ne.s32.totalorder %s71, %s74
    %p83 = scmp.eq.s32.totalorder %s16, 3
    %p84 = por %p82, %p83
    %p85 = scmp.ne.s32.totalorder %s74, %s75
    %p86 = scmp.eq.s32.totalorder %s16, 0
    %p87 = por %p85, %p86
    %p88 = scmp.ne.s32.totalorder %s74, %s75
    %p89 = scmp.eq.s32.totalorder %s17, 3
    %p90 = por %p88, %p89
    %p92 = scmp.ne.s32.totalorder %s75, %s91
    %p93 = scmp.eq.s32.totalorder %s17, 0
    %p94 = por %p92, %p93
    %s95 = sadd.s32 %s19, 1
    %s96 = smul.u32 %s95, 8
    %p97 = scmp.lt.s32.totalorder %s96, 15
    %s98 = scalar_select %p97, %s96, 15
    %s99 = sadd.s32 %s26, 1
    %s100 = smul.u32 %s99, 8
    %p101 = scmp.lt.s32.totalorder %s100, 15
    %s102 = scalar_select %p101, %s100, 15
    %s103 = ssub.s32 %s18, %s30
    %s104 = ssub.s32 %s98, %s102
    %s105 = sor.u32 %s103, %s104
    %p106 = scmp.eq.s32.totalorder %s105, 0
    %s108 = sadd.s32 %s107, 1
    %s109 = scalar_select %p106, %s107, %s108
    %p112 = pneg %p106
    %p113 = scmp.eq.s32.totalorder %s11, 3
    %p114 = por %p112, %p113
    %p115 = scmp.ne.s32.totalorder %s107, %s110
    %p116 = scmp.eq.s32.totalorder %s11, 0
    %p117 = por %p115, %p116
    %p118 = scmp.ne.s32.totalorder %s107, %s110
    %p119 = scmp.eq.s32.totalorder %s16, 3
    %p120 = por %p118, %p119
    %p121 = scmp.ne.s32.totalorder %s110, %s111
    %p122 = scmp.eq.s32.totalorder %s16, 0
    %p123 = por %p121, %p122
    %p124 = scmp.ne.s32.totalorder %s110, %s111
    %p125 = scmp.eq.s32.totalorder %s17, 3
    %p126 = por %p124, %p125
    %p128 = scmp.ne.s32.totalorder %s111, %s127
    %p129 = scmp.eq.s32.totalorder %s17, 0
    %p130 = por %p128, %p129
    %s132 = sadd.s32 %s131, 1
    %p135 = scmp.eq.s32.totalorder %s11, 3
    %p136 = scmp.ne.s32.totalorder %s131, %s133
    %p137 = scmp.eq.s32.totalorder %s11, 0
    %p138 = por %p136, %p137
    %p139 = scmp.ne.s32.totalorder %s131, %s133
    %p140 = scmp.eq.s32.totalorder %s16, 3
    %p141 = por %p139, %p140
    %p142 = scmp.ne.s32.totalorder %s133, %s134
    %p143 = scmp.eq.s32.totalorder %s16, 0
    %p144 = por %p142, %p143
    %p145 = scmp.ne.s32.totalorder %s133, %s134
    %p146 = scmp.eq.s32.totalorder %s17, 3
    %p147 = por %p145, %p146
    %p149 = scmp.ne.s32.totalorder %s134, %s148
    %p150 = scmp.eq.s32.totalorder %s17, 0
    %p151 = por %p149, %p150
    %s153 = sadd.s32 %s152, 1
    %p156 = scmp.eq.s32.totalorder %s11, 3
    %p157 = scmp.ne.s32.totalorder %s152, %s154
    %p158 = scmp.eq.s32.totalorder %s11, 0
    %p159 = por %p157, %p158
    %p160 = scmp.ne.s32.totalorder %s152, %s154
    %p161 = scmp.eq.s32.totalorder %s16, 3
    %p162 = por %p160, %p161
    %p163 = scmp.ne.s32.totalorder %s154, %s155
    %p164 = scmp.eq.s32.totalorder %s16, 0
    %p165 = por %p163, %p164
    %p166 = scmp.ne.s32.totalorder %s154, %s155
    %p167 = scmp.eq.s32.totalorder %s17, 3
    %p168 = por %p166, %p167
    %p170 = scmp.ne.s32.totalorder %s155, %s169
    %p171 = scmp.eq.s32.totalorder %s17, 0
    %p172 = por %p170, %p171
    %s173 = ssub.s32 %s18, %s30
    %s174 = ssub.s32 %s19, %s26
    %s175 = sor.u32 %s173, %s174
    %p176 = scmp.eq.s32.totalorder %s175, 0
    %s178 = sadd.s32 %s177, 1
    %s179 = scalar_select %p176, %s177, %s178
    %p182 = pneg %p176
    %p183 = scmp.eq.s32.totalorder %s11, 3
    %p184 = por %p182, %p183
    %p185 = scmp.ne.s32.totalorder %s177, %s180
    %p186 = scmp.eq.s32.totalorder %s11, 0
    %p187 = por %p185, %p186
    %p188 = scmp.ne.s32.totalorder %s177, %s180
    %p189 = scmp.eq.s32.totalorder %s16, 3
    %p190 = por %p188, %p189
    %p191 = scmp.ne.s32.totalorder %s180, %s181
    %p192 = scmp.eq.s32.totalorder %s16, 0
    %p193 = por %p191, %p192
    %p194 = scmp.ne.s32.totalorder %s180, %s181
    %p195 = scmp.eq.s32.totalorder %s17, 3
    %p196 = por %p194, %p195
    %p198 = scmp.ne.s32.totalorder %s181, %s197
    %p199 = scmp.eq.s32.totalorder %s17, 0
    %p200 = por %p198, %p199
    %p201 = scmp.le.s32.totalorder 1, %s11
    %p202 = scmp.lt.s32.totalorder %s11, 5
    %p203 = pnand %p201, %p202
    %p204 = pneg %p203
    // Predicated region
    $region9: #{a_call__.3} parent=5 // pred_check
      _
    $region10: #{a_call__.3} parent=5 // pred_check_branch
      %206 = sbr.rel (%p203) target = $region12
    $region11: #{a_call__.3} parent=5 // pred_region
      %s207 = ssub.s32 %s11, 1
      // Predicated region
      $region13: #{a_call__.3} parent=11 // pred_check
        %p208 = pneg %p144
      $region14: #{a_call__.3} parent=11 // pred_check_branch
        %210 = sbr.rel (%p208) target = $region16
      $region15: #{a_call__.3} parent=11 // pred_region
        _
      $region16: #{a_call__.3} parent=11 // pred_fallthru
        _
      // Predicated region
      $region17: #{a_call__.3} parent=11 // pred_check
        %p211 = pneg %p165
      $region18: #{a_call__.3} parent=11 // pred_check_branch
        %213 = sbr.rel (%p211) target = $region20
      $region19: #{a_call__.3} parent=11 // pred_region
        _
      $region20: #{a_call__.3} parent=11 // pred_fallthru
        _
    $region12: #{a_call__.3} parent=5 // pred_fallthru
      _
    %p214 = scmp.lt.s32.totalorder %s11, 4
    // Predicated region
    $region21: #{a_call__.3} parent=5 // pred_check
      %p215 = pneg %p214
    $region22: #{a_call__.3} parent=5 // pred_check_branch
      %217 = sbr.rel (%p215) target = $region24
    $region23: #{a_call__.3} parent=5 // pred_region
      // Predicated region
      $region25: #{a_call__.3} parent=23 // pred_check
        %p218 = pneg %p53
      $region26: #{a_call__.3} parent=23 // pred_check_branch
        %220 = sbr.rel (%p218) target = $region28
      $region27: #{a_call__.3} parent=23 // pred_region
        %s221 = smul.u32 %s19, 8
        %s222 = ssub.s32 %s221, 1
        %p223 = scmp.gt.s32.totalorder %s222, 0
        %s224 = scalar_select %p223, %s222, 0
        %p225 = scmp.lt.s32.totalorder %s18, 1
        %s226 = scalar_select %p225, %s18, 1
        %p227 = scmp.lt.s32.totalorder %s224, 15
        %s228 = scalar_select %p227, %s224, 15
        %s229 = smul.addr %s228, 2
        %s230 = smul.addr %s226, 32
        %s231 = sadd.s32 %s229, %s230
        %s232 = smul.addr %s231, 8
        %s233 = scalar_lea.vmem %s0, %s232
        %s234 = smul.u32 %s19, 8
        %s235 = ssub.s32 %s234, 1
        %p236 = scmp.gt.s32.totalorder %s235, 0
        %s237 = scalar_select %p236, %s235, 0
      $region28: #{a_call__.3} parent=23 // pred_fallthru
        _
      // Predicated region
      $region29: #{a_call__.3} parent=23 // pred_check
        %p238 = pneg %p81
      $region30: #{a_call__.3} parent=23 // pred_check_branch
        %240 = sbr.rel (%p238) target = $region32
      $region31: #{a_call__.3} parent=23 // pred_region
        %s241 = smul.u32 8, %s19
        %p242 = scmp.lt.s32.totalorder %s18, 1
        %s243 = scalar_select %p242, %s18, 1
        %p244 = scmp.lt.s32.totalorder %s241, 15
        %s245 = scalar_select %p244, %s241, 15
        %s246 = smul.addr %s245, 2
        %s247 = smul.addr %s243, 32
        %s248 = sadd.s32 %s246, %s247
        %s249 = smul.addr %s248, 8
        %s250 = scalar_lea.vmem %s1, %s249
        %s251 = smul.u32 8, %s19
      $region32: #{a_call__.3} parent=23 // pred_fallthru
        _
      // Predicated region
      $region33: #{a_call__.3} parent=23 // pred_check
        %p252 = pneg %p117
      $region34: #{a_call__.3} parent=23 // pred_check_branch
        %254 = sbr.rel (%p252) target = $region36
      $region35: #{a_call__.3} parent=23 // pred_region
        %s255 = sadd.s32 %s19, 1
        %s256 = smul.u32 %s255, 8
        %p257 = scmp.lt.s32.totalorder %s256, 15
        %s258 = scalar_select %p257, %s256, 15
        %p259 = scmp.lt.s32.totalorder %s18, 1
        %s260 = scalar_select %p259, %s18, 1
        %p261 = scmp.lt.s32.totalorder %s258, 15
        %s262 = scalar_select %p261, %s258, 15
        %s263 = smul.addr %s262, 2
        %s264 = smul.addr %s260, 32
        %s265 = sadd.s32 %s263, %s264
        %s266 = smul.addr %s265, 8
        %s267 = scalar_lea.vmem %s2, %s266
        %s268 = sadd.s32 %s19, 1
        %s269 = smul.u32 %s268, 8
        %p270 = scmp.lt.s32.totalorder %s269, 15
        %s271 = scalar_select %p270, %s269, 15
      $region36: #{a_call__.3} parent=23 // pred_fallthru
        _
    $region24: #{a_call__.3} parent=5 // pred_fallthru
      _
    %p272 = scmp.le.s32.totalorder 1, %s11
    %p273 = scmp.lt.s32.totalorder %s11, 5
    %p274 = pnand %p272, %p273
    %p275 = pneg %p274
    // Predicated region
    $region37: #{a_call__.3} parent=5 // pred_check
      _
    $region38: #{a_call__.3} parent=5 // pred_check_branch
      %277 = sbr.rel (%p274) target = $region40
    $region39: #{a_call__.3} parent=5 // pred_region
      %s278 = ssub.s32 %s11, 1
      %s279 = smul.u32 %s21, 8
      %s280 = ssub.s32 %s279, 1
      %p281 = scmp.gt.s32.totalorder %s280, 0
      %s282 = scalar_select %p281, %s280, 0
      %p283 = scmp.lt.s32.totalorder %s20, 1
      %s284 = scalar_select %p283, %s20, 1
      %p285 = scmp.lt.s32.totalorder %s282, 15
      %s286 = scalar_select %p285, %s282, 15
      %s287 = smul.addr %s286, 2
      %s288 = smul.addr %s284, 32
      %s289 = sadd.s32 %s287, %s288
      %s290 = smul.addr %s289, 8
      %s291 = scalar_lea.vmem %s0, %s290
      %p292 = pneg %p59
      %p293 = pneg %p56
      %s294 = smul.u32 8, %s21
      %p295 = scmp.lt.s32.totalorder %s20, 1
      %s296 = scalar_select %p295, %s20, 1
      %p297 = scmp.lt.s32.totalorder %s294, 15
      %s298 = scalar_select %p297, %s294, 15
      %s299 = smul.addr %s298, 2
      %s300 = smul.addr %s296, 32
      %s301 = sadd.s32 %s299, %s300
      %s302 = smul.addr %s301, 8
      %s303 = scalar_lea.vmem %s1, %s302
      %p304 = pneg %p87
      %p305 = pneg %p84
      %s306 = sadd.s32 %s21, 1
      %s307 = smul.u32 %s306, 8
      %p308 = scmp.lt.s32.totalorder %s307, 15
      %s309 = scalar_select %p308, %s307, 15
      %p310 = scmp.lt.s32.totalorder %s20, 1
      %s311 = scalar_select %p310, %s20, 1
      %p312 = scmp.lt.s32.totalorder %s309, 15
      %s313 = scalar_select %p312, %s309, 15
      %s314 = smul.addr %s313, 2
      %s315 = smul.addr %s311, 32
      %s316 = sadd.s32 %s314, %s315
      %s317 = smul.addr %s316, 8
      %s318 = scalar_lea.vmem %s2, %s317
      %p319 = pneg %p123
      %p320 = pneg %p120
      %p321 = pneg %p144
      %p322 = pneg %p141
      %p323 = pneg %p165
      %p324 = pneg %p162
      %p325 = pneg %p193
      %p326 = pneg %p190
      %s327 = smul.u32 16, %s21
      %p328 = scmp.lt.s32.totalorder %s20, 1
      %s329 = scalar_select %p328, %s20, 1
      %p330 = scmp.lt.s32.totalorder %s327, 31
      %s331 = scalar_select %p330, %s327, 31
      %s332 = smul.addr %s329, 32
      %s333 = sadd.s32 %s331, %s332
      %s334 = smul.addr %s333, 8
      %s335 = scalar_lea.vmem %s5, %s334
      %s336 = smul.u32 %s21, 8
      %s337 = ssub.s32 %s336, 1
      %p338 = scmp.gt.s32.totalorder %s337, 0
      %s339 = scalar_select %p338, %s337, 0
      %p340 = scmp.lt.s32.totalorder %s20, 1
      %s341 = scalar_select %p340, %s20, 1
      %p342 = scmp.lt.s32.totalorder %s339, 15
      %s343 = scalar_select %p342, %s339, 15
      %s344 = smul.addr %s343, 2
      %s345 = smul.addr %s341, 32
      %s346 = sadd.s32 %s344, %s345
      %s347 = smul.addr %s346, 8
      %s348 = scalar_lea.vmem %s0, %s347
      %s349 = smul.u32 %s21, 8
      %s350 = ssub.s32 %s349, 1
      %p351 = scmp.gt.s32.totalorder %s350, 0
      %s352 = scalar_select %p351, %s350, 0
      %s353 = smul.u32 8, %s21
      %p354 = scmp.lt.s32.totalorder %s20, 1
      %s355 = scalar_select %p354, %s20, 1
      %p356 = scmp.lt.s32.totalorder %s353, 15
      %s357 = scalar_select %p356, %s353, 15
      %s358 = smul.addr %s357, 2
      %s359 = smul.addr %s355, 32
      %s360 = sadd.s32 %s358, %s359
      %s361 = smul.addr %s360, 8
      %s362 = scalar_lea.vmem %s1, %s361
      %s363 = smul.u32 8, %s21
      %s364 = sadd.s32 %s21, 1
      %s365 = smul.u32 %s364, 8
      %p366 = scmp.lt.s32.totalorder %s365, 15
      %s367 = scalar_select %p366, %s365, 15
      %p368 = scmp.lt.s32.totalorder %s20, 1
      %s369 = scalar_select %p368, %s20, 1
      %p370 = scmp.lt.s32.totalorder %s367, 15
      %s371 = scalar_select %p370, %s367, 15
      %s372 = smul.addr %s371, 2
      %s373 = smul.addr %s369, 32
      %s374 = sadd.s32 %s372, %s373
      %s375 = smul.addr %s374, 8
      %s376 = scalar_lea.vmem %s2, %s375
      %s377 = sadd.s32 %s21, 1
      %s378 = smul.u32 %s377, 8
      %p379 = scmp.lt.s32.totalorder %s378, 15
      %s380 = scalar_select %p379, %s378, 15
      %s381 = smul.u32 16, %s21
      %p382 = scmp.lt.s32.totalorder %s20, 1
      %s383 = scalar_select %p382, %s20, 1
      %p384 = scmp.lt.s32.totalorder %s381, 31
      %s385 = scalar_select %p384, %s381, 31
      %s386 = smul.addr %s383, 32
      %s387 = sadd.s32 %s385, %s386
      %s388 = smul.addr %s387, 8
      %s389 = scalar_lea.vmem %s5, %s388
      %s390 = smul.u32 16, %s21
      %v392 = vld [vmem:[%s362] sm:$0xff]
      %v393 = vld [vmem:[%s362 + $0x8] sm:$0xff]
      %v394 = vld [vmem:[%s362 + $0x10] sm:$0xff]
      %v395 = vld [vmem:[%s362 + $0x18] sm:$0xff]
      %v396 = vld [vmem:[%s362 + $0x20] sm:$0xff]
      %v397 = vld [vmem:[%s362 + $0x28] sm:$0xff]
      %v398 = vld [vmem:[%s362 + $0x30] sm:$0xff]
      %v399 = vld [vmem:[%s362 + $0x38] sm:$0xff]
      %v400 = vld [vmem:[%s362 + $0x40] sm:$0xff]
      %v401 = vld [vmem:[%s362 + $0x48] sm:$0xff]
      %v402 = vld [vmem:[%s362 + $0x50] sm:$0xff]
      %v403 = vld [vmem:[%s362 + $0x58] sm:$0xff]
      %v404 = vld [vmem:[%s362 + $0x60] sm:$0xff]
      %v405 = vld [vmem:[%s362 + $0x68] sm:$0xff]
      %v406 = vld [vmem:[%s362 + $0x70] sm:$0xff]
      %v407 = vld [vmem:[%s362 + $0x78] sm:$0xff]
      %v408 = vpack.c.bf16 %v393, %v392
      %v409 = vpack.c.bf16 %v395, %v394
      %v410 = vpack.c.bf16 %v397, %v396
      %v411 = vpack.c.bf16 %v399, %v398
      %v412 = vpack.c.bf16 %v401, %v400
      %v413 = vpack.c.bf16 %v403, %v402
      %v414 = vpack.c.bf16 %v405, %v404
      %v415 = vpack.c.bf16 %v407, %v406
      %v416 = vld [vmem:[%s348] sm:$0xff]
      %v417 = vld [vmem:[%s348 + $0x8] sm:$0xff]
      %v418 = vpack.c.bf16 %v417, %v416
      %p419 = scmp.gt.s32.totalorder %s21, 0
      %s420 = scalar_select %p419, 1, 0
      %s421 = scvt.s32.f32 %s420
      %p423 = scmp.ne.f32.partialorder %s421, %s421
      %s424 = sshrl.u32 %s421, 16
      %s425 = sand.u32 %s424, 1
      %s426 = sadd.s32 32767, %s425
      %s427 = sadd.s32 %s421, %s426
      %s428 = sand.u32 %s427, 4294901760
      %s429 = scalar_select %p423, 2143289344, %s428
      %s431 = sshrl.u32 %s429, 16
      %s432 = sshll.u32 %s431, 16
      %s433 = sor.u32 %s431, %s432
      %v434 = vstv %s433
      %v436 = vmul.bf16 %v418, %v434
      %v437 = vld [vmem:[%s376] sm:$0xff]
      %v438 = vld [vmem:[%s376 + $0x8] sm:$0xff]
      %v439 = vpack.c.bf16 %v438, %v437
      %p440 = scmp.lt.s32.totalorder %s21, 1
      %s441 = scalar_select %p440, 1, 0
      %s442 = scvt.s32.f32 %s441
      %p444 = scmp.ne.f32.partialorder %s442, %s442
      %s445 = sshrl.u32 %s442, 16
      %s446 = sand.u32 %s445, 1
      %s447 = sadd.s32 32767, %s446
      %s448 = sadd.s32 %s442, %s447
      %s449 = sand.u32 %s448, 4294901760
      %s450 = scalar_select %p444, 2143289344, %s449
      %s452 = sshrl.u32 %s450, 16
      %s453 = sshll.u32 %s452, 16
      %s454 = sor.u32 %s452, %s453
      %v455 = vstv %s454
      %v457 = vmul.bf16 %v439, %v455
      %v459 = vshrl.u32 %v436, 16
      %v461 = vrot.slane %v459, 7
      %v462 = vshll.u32 %v436, 16
      %v464 = vor.u32 %v461, %v462
      %v466 = vshrl.u32 %v408, 16
      %v468 = vrot.slane %v466, 7
      %v469 = vshll.u32 %v408, 16
      %v471 = vor.u32 %v468, %v469
      %v473 = vshrl.u32 %v409, 16
      %v475 = vrot.slane %v473, 7
      %v476 = vshll.u32 %v409, 16
      %v478 = vor.u32 %v475, %v476
      %v480 = vshrl.u32 %v410, 16
      %v482 = vrot.slane %v480, 7
      %v483 = vshll.u32 %v410, 16
      %v485 = vor.u32 %v482, %v483
      %v487 = vshrl.u32 %v411, 16
      %v489 = vrot.slane %v487, 7
      %v490 = vshll.u32 %v411, 16
      %v492 = vor.u32 %v489, %v490
      %v494 = vshrl.u32 %v412, 16
      %v496 = vrot.slane %v494, 7
      %v497 = vshll.u32 %v412, 16
      %v499 = vor.u32 %v496, %v497
      %v501 = vshrl.u32 %v413, 16
      %v503 = vrot.slane %v501, 7
      %v504 = vshll.u32 %v413, 16
      %v506 = vor.u32 %v503, %v504
      %v508 = vshrl.u32 %v414, 16
      %v510 = vrot.slane %v508, 7
      %v511 = vshll.u32 %v414, 16
      %v513 = vor.u32 %v510, %v511
      %v515 = vshrl.u32 %v415, 16
      %v517 = vrot.slane %v515, 7
      %v518 = vshll.u32 %v415, 16
      %v520 = vor.u32 %v517, %v518
      %v522 = vshrl.u32 %v457, 16
      %v524 = vrot.slane %v522, 7
      %v525 = vshll.u32 %v457, 16
      %v527 = vor.u32 %v524, %v525
      %vm548 = vcmask 1040384
      %vm549 = vsmask.f32 256
      %vm550 = vmand %vm548, %vm549
      %v551 = vsel %vm550, 0, %v464
      %v552 = vsel %vm550, 0, %v471
      %v553 = vsel %vm550, 0, %v478
      %v554 = vsel %vm550, 0, %v485
      %v555 = vsel %vm550, 0, %v492
      %v556 = vsel %vm550, 0, %v499
      %v557 = vsel %vm550, 0, %v506
      %v558 = vsel %vm550, 0, %v513
      %v559 = vsel %vm550, 0, %v520
      %v560 = vsel %vm550, 0, %v527
      %v561 = vsel %vm550, %v461, 0
      %v562 = vsel %vm550, %v468, 0
      %v563 = vsel %vm550, %v475, 0
      %v564 = vsel %vm550, %v482, 0
      %v565 = vsel %vm550, %v489, 0
      %v566 = vsel %vm550, %v496, 0
      %v567 = vsel %vm550, %v503, 0
      %v568 = vsel %vm550, %v510, 0
      %v569 = vsel %vm550, %v517, 0
      %v570 = vsel %vm550, %v524, 0
      %vm571 = vsmask.f32 7424
      %v573 = vshrl.u32 %v551, 16
      %v575 = vshll.u32 %v551, 16
      %v577 = vrot.slane %v575, 1
      %v578 = vor.u32 %v573, %v577
      %v580 = vshll.u32 %v561, 16
      %v582 = vrot.slane %v580, 1
      %v583 = vsel %vm571, %v578, %v582
      %v585 = vshrl.u32 %v552, 16
      %v587 = vshll.u32 %v552, 16
      %v589 = vrot.slane %v587, 1
      %v590 = vor.u32 %v585, %v589
      %v592 = vshll.u32 %v562, 16
      %v594 = vrot.slane %v592, 1
      %v595 = vsel %vm571, %v590, %v594
      %v597 = vshrl.u32 %v553, 16
      %v599 = vshll.u32 %v553, 16
      %v601 = vrot.slane %v599, 1
      %v602 = vor.u32 %v597, %v601
      %v604 = vshll.u32 %v563, 16
      %v606 = vrot.slane %v604, 1
      %v607 = vsel %vm571, %v602, %v606
      %v609 = vshrl.u32 %v554, 16
      %v611 = vshll.u32 %v554, 16
      %v613 = vrot.slane %v611, 1
      %v614 = vor.u32 %v609, %v613
      %v616 = vshll.u32 %v564, 16
      %v618 = vrot.slane %v616, 1
      %v619 = vsel %vm571, %v614, %v618
      %v621 = vshrl.u32 %v555, 16
      %v623 = vshll.u32 %v555, 16
      %v625 = vrot.slane %v623, 1
      %v626 = vor.u32 %v621, %v625
      %v628 = vshll.u32 %v565, 16
      %v630 = vrot.slane %v628, 1
      %v631 = vsel %vm571, %v626, %v630
      %v633 = vshrl.u32 %v556, 16
      %v635 = vshll.u32 %v556, 16
      %v637 = vrot.slane %v635, 1
      %v638 = vor.u32 %v633, %v637
      %v640 = vshll.u32 %v566, 16
      %v642 = vrot.slane %v640, 1
      %v643 = vsel %vm571, %v638, %v642
      %v645 = vshrl.u32 %v557, 16
      %v647 = vshll.u32 %v557, 16
      %v649 = vrot.slane %v647, 1
      %v650 = vor.u32 %v645, %v649
      %v652 = vshll.u32 %v567, 16
      %v654 = vrot.slane %v652, 1
      %v655 = vsel %vm571, %v650, %v654
      %v657 = vshrl.u32 %v558, 16
      %v659 = vshll.u32 %v558, 16
      %v661 = vrot.slane %v659, 1
      %v662 = vor.u32 %v657, %v661
      %v664 = vshll.u32 %v568, 16
      %v666 = vrot.slane %v664, 1
      %v667 = vsel %vm571, %v662, %v666
      %668 = vrot.lane.b32.xlu0 %v583, 4
      %v669 = vpop.permute.xlu0 %668
      %670 = vrot.lane.b32.xlu0 %v595, 4
      %v671 = vpop.permute.xlu0 %670
      %672 = vrot.lane.b32.xlu0 %v607, 4
      %v673 = vpop.permute.xlu0 %672
      %674 = vrot.lane.b32.xlu0 %v619, 4
      %v675 = vpop.permute.xlu0 %674
      %676 = vrot.lane.b32.xlu0 %v631, 4
      %v677 = vpop.permute.xlu0 %676
      %678 = vrot.lane.b32.xlu0 %v643, 4
      %v679 = vpop.permute.xlu0 %678
      %680 = vrot.lane.b32.xlu0 %v655, 4
      %v681 = vpop.permute.xlu0 %680
      %682 = vrot.lane.b32.xlu0 %v667, 4
      %v683 = vpop.permute.xlu0 %682
      %vm700 = vcmask 1046528
      %v701 = vrot.slane %v551, 1
      %v702 = vrot.slane %v561, 1
      %v703 = vsel %vm700, %v701, %v702
      %v704 = vrot.slane %v552, 1
      %v705 = vrot.slane %v562, 1
      %v706 = vsel %vm700, %v704, %v705
      %v707 = vrot.slane %v553, 1
      %v708 = vrot.slane %v563, 1
      %v709 = vsel %vm700, %v707, %v708
      %v710 = vrot.slane %v554, 1
      %v711 = vrot.slane %v564, 1
      %v712 = vsel %vm700, %v710, %v711
      %v713 = vrot.slane %v555, 1
      %v714 = vrot.slane %v565, 1
      %v715 = vsel %vm700, %v713, %v714
      %v716 = vrot.slane %v556, 1
      %v717 = vrot.slane %v566, 1
      %v718 = vsel %vm700, %v716, %v717
      %v719 = vrot.slane %v557, 1
      %v720 = vrot.slane %v567, 1
      %v721 = vsel %vm700, %v719, %v720
      %v722 = vrot.slane %v558, 1
      %v723 = vrot.slane %v568, 1
      %v724 = vsel %vm700, %v722, %v723
      %725 = vrot.lane.b32.xlu0 %v703, 8
      %v726 = vpop.permute.xlu0 %725
      %727 = vrot.lane.b32.xlu0 %v706, 8
      %v728 = vpop.permute.xlu0 %727
      %729 = vrot.lane.b32.xlu0 %v709, 8
      %v730 = vpop.permute.xlu0 %729
      %731 = vrot.lane.b32.xlu0 %v712, 8
      %v732 = vpop.permute.xlu0 %731
      %733 = vrot.lane.b32.xlu0 %v715, 8
      %v734 = vpop.permute.xlu0 %733
      %735 = vrot.lane.b32.xlu0 %v718, 8
      %v736 = vpop.permute.xlu0 %735
      %737 = vrot.lane.b32.xlu0 %v721, 8
      %v738 = vpop.permute.xlu0 %737
      %739 = vrot.lane.b32.xlu0 %v724, 8
      %v740 = vpop.permute.xlu0 %739
      %742 = vrot.lane.b32.xlu0 %v552, 12
      %v743 = vpop.permute.xlu0 %742
      %744 = vrot.lane.b32.xlu0 %v553, 12
      %v745 = vpop.permute.xlu0 %744
      %746 = vrot.lane.b32.xlu0 %v554, 12
      %v747 = vpop.permute.xlu0 %746
      %748 = vrot.lane.b32.xlu0 %v555, 12
      %v749 = vpop.permute.xlu0 %748
      %750 = vrot.lane.b32.xlu0 %v556, 12
      %v751 = vpop.permute.xlu0 %750
      %752 = vrot.lane.b32.xlu0 %v557, 12
      %v753 = vpop.permute.xlu0 %752
      %754 = vrot.lane.b32.xlu0 %v558, 12
      %v755 = vpop.permute.xlu0 %754
      %756 = vrot.lane.b32.xlu0 %v559, 12
      %v757 = vpop.permute.xlu0 %756
      %v759 = vshrl.u32 %v559, 16
      %v761 = vshll.u32 %v559, 16
      %v763 = vrot.slane %v761, 1
      %v764 = vor.u32 %v759, %v763
      %v766 = vshll.u32 %v569, 16
      %v768 = vrot.slane %v766, 1
      %v769 = vsel %vm571, %v764, %v768
      %770 = vrot.lane.b32.xlu0 %v595, 16
      %v771 = vpop.permute.xlu0 %770
      %772 = vrot.lane.b32.xlu0 %v607, 16
      %v773 = vpop.permute.xlu0 %772
      %774 = vrot.lane.b32.xlu0 %v619, 16
      %v775 = vpop.permute.xlu0 %774
      %776 = vrot.lane.b32.xlu0 %v631, 16
      %v777 = vpop.permute.xlu0 %776
      %778 = vrot.lane.b32.xlu0 %v643, 16
      %v779 = vpop.permute.xlu0 %778
      %780 = vrot.lane.b32.xlu0 %v655, 16
      %v781 = vpop.permute.xlu0 %780
      %782 = vrot.lane.b32.xlu0 %v667, 16
      %v783 = vpop.permute.xlu0 %782
      %784 = vrot.lane.b32.xlu0 %v769, 16
      %v785 = vpop.permute.xlu0 %784
      %v787 = vrot.slane %v559, 1
      %v788 = vrot.slane %v569, 1
      %v789 = vsel %vm700, %v787, %v788
      %790 = vrot.lane.b32.xlu0 %v706, 20
      %v791 = vpop.permute.xlu0 %790
      %792 = vrot.lane.b32.xlu0 %v709, 20
      %v793 = vpop.permute.xlu0 %792
      %794 = vrot.lane.b32.xlu0 %v712, 20
      %v795 = vpop.permute.xlu0 %794
      %796 = vrot.lane.b32.xlu0 %v715, 20
      %v797 = vpop.permute.xlu0 %796
      %798 = vrot.lane.b32.xlu0 %v718, 20
      %v799 = vpop.permute.xlu0 %798
      %800 = vrot.lane.b32.xlu0 %v721, 20
      %v801 = vpop.permute.xlu0 %800
      %802 = vrot.lane.b32.xlu0 %v724, 20
      %v803 = vpop.permute.xlu0 %802
      %804 = vrot.lane.b32.xlu0 %v789, 20
      %v805 = vpop.permute.xlu0 %804
      %807 = vrot.lane.b32.xlu0 %v553, 24
      %v808 = vpop.permute.xlu0 %807
      %809 = vrot.lane.b32.xlu0 %v554, 24
      %v810 = vpop.permute.xlu0 %809
      %811 = vrot.lane.b32.xlu0 %v555, 24
      %v812 = vpop.permute.xlu0 %811
      %813 = vrot.lane.b32.xlu0 %v556, 24
      %v814 = vpop.permute.xlu0 %813
      %815 = vrot.lane.b32.xlu0 %v557, 24
      %v816 = vpop.permute.xlu0 %815
      %817 = vrot.lane.b32.xlu0 %v558, 24
      %v818 = vpop.permute.xlu0 %817
      %819 = vrot.lane.b32.xlu0 %v559, 24
      %v820 = vpop.permute.xlu0 %819
      %821 = vrot.lane.b32.xlu0 %v560, 24
      %v822 = vpop.permute.xlu0 %821
      %v824 = vshrl.u32 %v560, 16
      %v826 = vshll.u32 %v560, 16
      %v828 = vrot.slane %v826, 1
      %v829 = vor.u32 %v824, %v828
      %v831 = vshll.u32 %v570, 16
      %v833 = vrot.slane %v831, 1
      %v834 = vsel %vm571, %v829, %v833
      %835 = vrot.lane.b32.xlu0 %v607, 28
      %v836 = vpop.permute.xlu0 %835
      %837 = vrot.lane.b32.xlu0 %v619, 28
      %v838 = vpop.permute.xlu0 %837
      %839 = vrot.lane.b32.xlu0 %v631, 28
      %v840 = vpop.permute.xlu0 %839
      %841 = vrot.lane.b32.xlu0 %v643, 28
      %v842 = vpop.permute.xlu0 %841
      %843 = vrot.lane.b32.xlu0 %v655, 28
      %v844 = vpop.permute.xlu0 %843
      %845 = vrot.lane.b32.xlu0 %v667, 28
      %v846 = vpop.permute.xlu0 %845
      %847 = vrot.lane.b32.xlu0 %v769, 28
      %v848 = vpop.permute.xlu0 %847
      %849 = vrot.lane.b32.xlu0 %v834, 28
      %v850 = vpop.permute.xlu0 %849
      %v852 = vrot.slane %v560, 1
      %v853 = vrot.slane %v570, 1
      %v854 = vsel %vm700, %v852, %v853
      %855 = vrot.lane.b32.xlu0 %v709, 32
      %v856 = vpop.permute.xlu0 %855
      %857 = vrot.lane.b32.xlu0 %v712, 32
      %v858 = vpop.permute.xlu0 %857
      %859 = vrot.lane.b32.xlu0 %v715, 32
      %v860 = vpop.permute.xlu0 %859
      %861 = vrot.lane.b32.xlu0 %v718, 32
      %v862 = vpop.permute.xlu0 %861
      %863 = vrot.lane.b32.xlu0 %v721, 32
      %v864 = vpop.permute.xlu0 %863
      %865 = vrot.lane.b32.xlu0 %v724, 32
      %v866 = vpop.permute.xlu0 %865
      %867 = vrot.lane.b32.xlu0 %v789, 32
      %v868 = vpop.permute.xlu0 %867
      %869 = vrot.lane.b32.xlu0 %v854, 32
      %v870 = vpop.permute.xlu0 %869
      %vm871 = vcmask 31744
      %v873 = vsel %vm871, %v551, %v669
      %v875 = vsel %vm871, %v552, %v671
      %v877 = vsel %vm871, %v553, %v673
      %v879 = vsel %vm871, %v554, %v675
      %v881 = vsel %vm871, %v555, %v677
      %v883 = vsel %vm871, %v556, %v679
      %v885 = vsel %vm871, %v557, %v681
      %v887 = vsel %vm871, %v558, %v683
      %vm888 = vcmask 64512
      %v890 = vsel %vm888, %v873, %v726
      %v892 = vsel %vm888, %v875, %v728
      %v894 = vsel %vm888, %v877, %v730
      %v896 = vsel %vm888, %v879, %v732
      %v898 = vsel %vm888, %v881, %v734
      %v900 = vsel %vm888, %v883, %v736
      %v902 = vsel %vm888, %v885, %v738
      %v904 = vsel %vm888, %v887, %v740
      %vm905 = vcmask 97280
      %v907 = vsel %vm905, %v890, %v743
      %v909 = vsel %vm905, %v892, %v745
      %v911 = vsel %vm905, %v894, %v747
      %v913 = vsel %vm905, %v896, %v749
      %v915 = vsel %vm905, %v898, %v751
      %v917 = vsel %vm905, %v900, %v753
      %v919 = vsel %vm905, %v902, %v755
      %v921 = vsel %vm905, %v904, %v757
      %vm922 = vcmask 130048
      %v924 = vsel %vm922, %v907, %v771
      %v926 = vsel %vm922, %v909, %v773
      %v928 = vsel %vm922, %v911, %v775
      %v930 = vsel %vm922, %v913, %v777
      %v932 = vsel %vm922, %v915, %v779
      %v934 = vsel %vm922, %v917, %v781
      %v936 = vsel %vm922, %v919, %v783
      %v938 = vsel %vm922, %v921, %v785
      %vm939 = vcmask 162816
      %v941 = vsel %vm939, %v924, %v791
      %v943 = vsel %vm939, %v926, %v793
      %v945 = vsel %vm939, %v928, %v795
      %v947 = vsel %vm939, %v930, %v797
      %v949 = vsel %vm939, %v932, %v799
      %v951 = vsel %vm939, %v934, %v801
      %v953 = vsel %vm939, %v936, %v803
      %v955 = vsel %vm939, %v938, %v805
      %vm956 = vcmask 195584
      %v958 = vsel %vm956, %v941, %v808
      %v960 = vsel %vm956, %v943, %v810
      %v962 = vsel %vm956, %v945, %v812
      %v964 = vsel %vm956, %v947, %v814
      %v966 = vsel %vm956, %v949, %v816
      %v968 = vsel %vm956, %v951, %v818
      %v970 = vsel %vm956, %v953, %v820
      %v972 = vsel %vm956, %v955, %v822
      %vm973 = vcmask 228352
      %v975 = vsel %vm973, %v958, %v836
      %v977 = vsel %vm973, %v960, %v838
      %v979 = vsel %vm973, %v962, %v840
      %v981 = vsel %vm973, %v964, %v842
      %v983 = vsel %vm973, %v966, %v844
      %v985 = vsel %vm973, %v968, %v846
      %v987 = vsel %vm973, %v970, %v848
      %v989 = vsel %vm973, %v972, %v850
      %vm990 = vcmask 261120
      %v992 = vsel %vm990, %v975, %v856
      %v994 = vsel %vm990, %v977, %v858
      %v996 = vsel %vm990, %v979, %v860
      %v998 = vsel %vm990, %v981, %v862
      %v1000 = vsel %vm990, %v983, %v864
      %v1002 = vsel %vm990, %v985, %v866
      %v1004 = vsel %vm990, %v987, %v868
      %v1006 = vsel %vm990, %v989, %v870
      %v1007 = vld [vmem:[%s3] sm:$0xf]
      %v1008 = vld [vmem:[%s3 + $0x4] sm:$0xf]
      %v1009 = vld [vmem:[%s3 + $0x8] sm:$0xf]
      %v1010 = vld [vmem:[%s3 + $0xc] sm:$0xf]
      %v1011 = vld [vmem:[%s3 + $0x10] sm:$0x3]
      %v1012 = vld [vmem:[%s4] sm:$0x1]
      %v1014 = vlaneseq
      %v1015 = vshrl.u32 %v1014, 7
      %v1016 = vsub.s32 0, %v1015
      %v1017 = vrot.slane %v1012, %v1016
      %v1024 = vunpack.c.l.b16 %v1007
      %v1025 = vunpack.c.l.b16 %v1008
      %v1026 = vunpack.c.l.b16 %v1009
      %v1027 = vunpack.c.l.b16 %v1010
      %v1028 = vunpack.c.l.b16 %v1011
      %v1029 = vpack.c.b16 %v1025, %v1024
      %v1030 = vpack.c.b16 %v1027, %v1026
      %v1031 = vpack.c.b16 %v1028, %v1028
      %vm1034 = vcmask 293888
      %v1035 = vsel %vm1034, %v992, 0
      %v1037 = vsel %vm1034, %v994, 0
      %v1039 = vsel %vm1034, %v996, 0
      %v1041 = vsel %vm1034, %v998, 0
      %v1043 = vsel %vm1034, %v1000, 0
      %v1045 = vsel %vm1034, %v1002, 0
      %v1047 = vsel %vm1034, %v1004, 0
      %v1049 = vsel %vm1034, %v1006, 0
      %vm1051 = vcmask 1041408
      %v1053 = vsel %vm1051, %v1031, 0
      %1055 = vmatprep.subr.bf16.mxu0 0
      %1056 = vmatpush1.bf16.msra.mxu0 %v1029
      %1057 = vmatprep.subr.bf16.mxu0 0
      %1058 = vmatpush1.bf16.msra.mxu0 %v1030
      %1059 = vmatprep.subr.bf16.mxu0 0
      %1060 = vmatpush1.bf16.msra.mxu0 %v1053
      %1061 = vmatprep.subr.bf16.mxu0 0
      %1062 = vmatpush1.bf16.msra.mxu0 0
      %1063 = vmatprep.subr.bf16.mxu0 0
      %1064 = vmatpush1.bf16.msra.mxu0 0
      %1065 = vmatprep.subr.bf16.mxu0 0
      %1066 = vmatpush1.bf16.msra.mxu0 0
      %1067 = vmatprep.subr.bf16.mxu0 0
      %1068 = vmatpush1.bf16.msra.mxu0 0
      %1069 = vmatprep.subr.bf16.mxu0 0
      %1070 = vmatpush1.bf16.msra.mxu0 0
      %1071 = vmatprep.subr.bf16.mxu0 0
      %1072 = vmatpush1.bf16.msra.mxu0 0
      %1073 = vmatprep.subr.bf16.mxu0 0
      %1074 = vmatpush1.bf16.msra.mxu0 0
      %1075 = vmatprep.subr.bf16.mxu0 0
      %1076 = vmatpush1.bf16.msra.mxu0 0
      %1077 = vmatprep.subr.bf16.mxu0 0
      %1078 = vmatpush1.bf16.msra.mxu0 0
      %1079 = vmatprep.subr.bf16.mxu0 0
      %1080 = vmatpush1.bf16.msra.mxu0 0
      %1081 = vmatprep.subr.bf16.mxu0 0
      %1082 = vmatpush1.bf16.msra.mxu0 0
      %1083 = vmatprep.subr.bf16.mxu0 0
      %1084 = vmatpush1.bf16.msra.mxu0 0
      %1085 = vmatprep.subr.bf16.mxu0 0
      %1086 = vmatpush1.bf16.msra.mxu0 0
      %1087 = vmatprep.mubr.bf16.mxu0 0
      %1088 = vmatmul.mubr.bf16.gmra.mrb[0].mxu0 %v1035
      %v1089 = vpop.f32.mrb[0].mxu0
      %v1090 = vadd.f32 %v1017, %v1089
      %v1091 = vpop.f32.mrb[0].mxu0
      %v1092 = vpop.f32.mrb[0].mxu0
      %v1093 = vadd.f32 %v1017, %v1092
      %v1094 = vpop.f32.mrb[0].mxu0
      %1095 = vmatprep.mubr.bf16.mxu0 0
      %1096 = vmatmul.mubr.bf16.gmra.mrb[0].mxu0 %v1037
      %v1097 = vpop.f32.mrb[0].mxu0
      %v1098 = vadd.f32 %v1017, %v1097
      %v1099 = vpop.f32.mrb[0].mxu0
      %v1100 = vpop.f32.mrb[0].mxu0
      %v1101 = vadd.f32 %v1017, %v1100
      %v1102 = vpop.f32.mrb[0].mxu0
      %1103 = vmatprep.mubr.bf16.mxu0 0
      %1104 = vmatmul.mubr.bf16.gmra.mrb[0].mxu0 %v1039
      %v1105 = vpop.f32.mrb[0].mxu0
      %v1106 = vadd.f32 %v1017, %v1105
      %v1107 = vpop.f32.mrb[0].mxu0
      %v1108 = vpop.f32.mrb[0].mxu0
      %v1109 = vadd.f32 %v1017, %v1108
      %v1110 = vpop.f32.mrb[0].mxu0
      %1111 = vmatprep.mubr.bf16.mxu0 0
      %1112 = vmatmul.mubr.bf16.gmra.mrb[0].mxu0 %v1041
      %v1113 = vpop.f32.mrb[0].mxu0
      %v1114 = vadd.f32 %v1017, %v1113
      %v1115 = vpop.f32.mrb[0].mxu0
      %v1116 = vpop.f32.mrb[0].mxu0
      %v1117 = vadd.f32 %v1017, %v1116
      %v1118 = vpop.f32.mrb[0].mxu0
      %1119 = vmatprep.mubr.bf16.mxu0 0
      %1120 = vmatmul.mubr.bf16.gmra.mrb[0].mxu0 %v1043
      %v1121 = vpop.f32.mrb[0].mxu0
      %v1122 = vadd.f32 %v1017, %v1121
      %v1123 = vpop.f32.mrb[0].mxu0
      %v1124 = vpop.f32.mrb[0].mxu0
      %v1125 = vadd.f32 %v1017, %v1124
      %v1126 = vpop.f32.mrb[0].mxu0
      %1127 = vmatprep.mubr.bf16.mxu0 0
      %1128 = vmatmul.mubr.bf16.gmra.mrb[0].mxu0 %v1045
      %v1129 = vpop.f32.mrb[0].mxu0
      %v1130 = vadd.f32 %v1017, %v1129
      %v1131 = vpop.f32.mrb[0].mxu0
      %v1132 = vpop.f32.mrb[0].mxu0
      %v1133 = vadd.f32 %v1017, %v1132
      %v1134 = vpop.f32.mrb[0].mxu0
      %1135 = vmatprep.mubr.bf16.mxu0 0
      %1136 = vmatmul.mubr.bf16.gmra.mrb[0].mxu0 %v1047
      %v1137 = vpop.f32.mrb[0].mxu0
      %v1138 = vadd.f32 %v1017, %v1137
      %v1139 = vpop.f32.mrb[0].mxu0
      %v1140 = vpop.f32.mrb[0].mxu0
      %v1141 = vadd.f32 %v1017, %v1140
      %v1142 = vpop.f32.mrb[0].mxu0
      %1143 = vmatprep.mubr.bf16.mxu0 0
      %1144 = vmatmul.mubr.bf16.gmra.mrb[0].mxu0 %v1049
      %v1145 = vpop.f32.mrb[0].mxu0
      %v1146 = vadd.f32 %v1017, %v1145
      %v1147 = vpop.f32.mrb[0].mxu0
      %v1148 = vpop.f32.mrb[0].mxu0
      %v1149 = vadd.f32 %v1017, %v1148
      %v1150 = vpop.f32.mrb[0].mxu0
      %1151 = vdwg.mxu0
      %1152 = vst.msk [vmem:[%s389] sm:$0xff] %vm871, %v1090
      %1153 = vst.msk [vmem:[%s389 + $0x8] sm:$0xff] %vm871, %v1093
      %1154 = vst.msk [vmem:[%s389 + $0x10] sm:$0xff] %vm871, %v1098
      %1155 = vst.msk [vmem:[%s389 + $0x18] sm:$0xff] %vm871, %v1101
      %1156 = vst.msk [vmem:[%s389 + $0x20] sm:$0xff] %vm871, %v1106
      %1157 = vst.msk [vmem:[%s389 + $0x28] sm:$0xff] %vm871, %v1109
      %1158 = vst.msk [vmem:[%s389 + $0x30] sm:$0xff] %vm871, %v1114
      %1159 = vst.msk [vmem:[%s389 + $0x38] sm:$0xff] %vm871, %v1117
      %1160 = vst.msk [vmem:[%s389 + $0x40] sm:$0xff] %vm871, %v1122
      %1161 = vst.msk [vmem:[%s389 + $0x48] sm:$0xff] %vm871, %v1125
      %1162 = vst.msk [vmem:[%s389 + $0x50] sm:$0xff] %vm871, %v1130
      %1163 = vst.msk [vmem:[%s389 + $0x58] sm:$0xff] %vm871, %v1133
      %1164 = vst.msk [vmem:[%s389 + $0x60] sm:$0xff] %vm871, %v1138
      %1165 = vst.msk [vmem:[%s389 + $0x68] sm:$0xff] %vm871, %v1141
      %1166 = vst.msk [vmem:[%s389 + $0x70] sm:$0xff] %vm871, %v1146
      %1167 = vst.msk [vmem:[%s389 + $0x78] sm:$0xff] %vm871, %v1149
      %s1168 = smul.u32 16, %s21
      %p1169 = scmp.lt.s32.totalorder %s20, 1
      %s1170 = scalar_select %p1169, %s20, 1
      %p1171 = scmp.lt.s32.totalorder %s1168, 31
      %s1172 = scalar_select %p1171, %s1168, 31
      %s1173 = smul.addr %s1170, 32
      %s1174 = sadd.s32 %s1172, %s1173
      %s1175 = smul.addr %s1174, 8
      %s1176 = scalar_lea.vmem %s5, %s1175
      // Predicated region
      $region41: #{a_call__.3} parent=39 // pred_check
        %p1177 = pneg %p190
      $region42: #{a_call__.3} parent=39 // pred_check_branch
        %1179 = sbr.rel (%p1177) target = $region44
      $region43: #{a_call__.3} parent=39 // pred_region
        %s1180 = smul.u32 16, %s21
      $region44: #{a_call__.3} parent=39 // pred_fallthru
        _
    $region40: #{a_call__.3} parent=5 // pred_fallthru
      _
    %p1181 = scmp.le.s32.totalorder 2, %s11
    // Predicated region
    $region45: #{a_call__.3} parent=5 // pred_check
      %p1182 = pneg %p1181
    $region46: #{a_call__.3} parent=5 // pred_check_branch
      %1184 = sbr.rel (%p1182) target = $region48
    $region47: #{a_call__.3} parent=5 // pred_region
      %s1185 = ssub.s32 %s11, 2
      // Predicated region
      $region49: #{a_call__.3} parent=47 // pred_check
        %p1186 = pneg %p196
      $region50: #{a_call__.3} parent=47 // pred_check_branch
        %1188 = sbr.rel (%p1186) target = $region52
      $region51: #{a_call__.3} parent=47 // pred_region
        %s1189 = smul.u32 16, %s23
        %p1190 = scmp.lt.s32.totalorder %s22, 1
        %s1191 = scalar_select %p1190, %s22, 1
        %p1192 = scmp.lt.s32.totalorder %s1189, 31
        %s1193 = scalar_select %p1192, %s1189, 31
        %s1194 = smul.addr %s1191, 32
        %s1195 = sadd.s32 %s1193, %s1194
        %s1196 = smul.addr %s1195, 8
        %s1197 = scalar_lea.vmem %s5, %s1196
      $region52: #{a_call__.3} parent=47 // pred_fallthru
        _
    $region48: #{a_call__.3} parent=5 // pred_fallthru
      _
  $region6: #{a_call__.3} parent=0 // loop_footer
    %s15 = sadd.s32 1, %s11
  $region7: #{a_call__.3} parent=0 // loop_footer_branch
    %10 = sbr.rel target = $region3
  $region8: #{a_call__.3} parent=0 // loop_exit
    _

// kernel: a_call__.4
$region0: #{a_call__.4}
  #allocation0 [shape = 'u32[]', space=smem, size = 0x4, offset = 0x4, fixed_abs, tag = 'smem constant byte address 0x4 - core index']
  #allocation1 [shape = 'u32[144,128]{1,0:T(1,128)}', space=vmem, size = 0x12000, scoped, tag = 'internal scratch']
  %s0 = inlined_call_operand.vmem [shape: f32[2,16,16,4], index: 0, kind: input, shape index: {}, may-alias: {0,1,2}]
  %s1 = inlined_call_operand.vmem [shape: f32[2,16,16,4], index: 1, kind: input, shape index: {}, may-alias: {0,1,2}]
  %s2 = inlined_call_operand.vmem [shape: f32[2,16,16,4], index: 2, kind: input, shape index: {}, may-alias: {0,1,2}]
  %s3 = inlined_call_operand.vmem [shape: bf16[36,16], index: 3, kind: input, shape index: {}]
  %s4 = inlined_call_operand.vmem [shape: f32[1,16], index: 4, kind: input, shape index: {}]
  %s5 = inlined_call_operand.vmem [shape: bf16[2,256,16], index: 5, kind: output, shape index: {}]
  %s6 = sld [smem:[#allocation0]]
  $region53: #{a_call__.4} parent=0
    _
  %s8 = ssub.s32 1, %s6
  %s9 = scalar_select 0, %s8, %s6
  loop: start=0, step=1, limit=6
  $region2: #{a_call__.4} parent=0 // loop_pre_header
    _
  $region3: #{a_call__.4} parent=0 // loop_header
    %s11 = sphi 0, %s15
    %p12 = scmp.ge.s32.totalorder %s11, 6
    %s18 = sphi 0, %s30
    %s19 = sphi 0, %s26
    %s20 = sphi 0, %s18
    %s21 = sphi 0, %s19
    %s22 = sphi 0, %s20
    %s23 = sphi 0, %s21
    %s43 = sphi 0, %s45
    %s46 = sphi 0, %s43
    %s47 = sphi 0, %s46
    %s63 = sphi 0, %s47
    %s71 = sphi 0, %s73
    %s74 = sphi 0, %s71
    %s75 = sphi 0, %s74
    %s91 = sphi 0, %s75
    %s107 = sphi 0, %s109
    %s110 = sphi 0, %s107
    %s111 = sphi 0, %s110
    %s127 = sphi 0, %s111
    %s131 = sphi 0, %s131
    %s133 = sphi 0, %s131
    %s134 = sphi 0, %s133
    %s148 = sphi 0, %s134
    %s152 = sphi 0, %s152
    %s154 = sphi 0, %s152
    %s155 = sphi 0, %s154
    %s169 = sphi 0, %s155
    %s177 = sphi 0, %s179
    %s180 = sphi 0, %s177
    %s181 = sphi 0, %s180
    %s197 = sphi 0, %s181
  $region4: #{a_call__.4} parent=0 // loop_header_branch
    %14 = sbr.rel (%p12) target = $region8
  $region5: #{a_call__.4} parent=0 // loop_body
    %s16 = ssub.s32 %s11, 1
    %s17 = ssub.s32 %s11, 2
    %s24 = sadd.s32 1, %s19
    %p25 = scmp.ge.s32.totalorder %s24, 2
    %s26 = scalar_select %p25, 0, %s24
    %s27 = sadd.s32 1, %s18
    %s28 = scalar_select %p25, %s27, %s18
    %p29 = scmp.ge.s32.totalorder %s28, 2
    %s30 = scalar_select %p29, 0, %s28
    %s31 = smul.u32 %s19, 8
    %s32 = ssub.s32 %s31, 1
    %p33 = scmp.gt.s32.totalorder %s32, 0
    %s34 = scalar_select %p33, %s32, 0
    %s35 = smul.u32 %s26, 8
    %s36 = ssub.s32 %s35, 1
    %p37 = scmp.gt.s32.totalorder %s36, 0
    %s38 = scalar_select %p37, %s36, 0
    %s39 = ssub.s32 %s18, %s30
    %s40 = ssub.s32 %s34, %s38
    %s41 = sor.u32 %s39, %s40
    %p42 = scmp.eq.s32.totalorder %s41, 0
    %s44 = sadd.s32 %s43, 1
    %s45 = scalar_select %p42, %s43, %s44
    %p48 = pneg %p42
    %p49 = scmp.eq.s32.totalorder %s11, 3
    %p50 = por %p48, %p49
    %p51 = scmp.ne.s32.totalorder %s43, %s46
    %p52 = scmp.eq.s32.totalorder %s11, 0
    %p53 = por %p51, %p52
    %p54 = scmp.ne.s32.totalorder %s43, %s46
    %p55 = scmp.eq.s32.totalorder %s16, 3
    %p56 = por %p54, %p55
    %p57 = scmp.ne.s32.totalorder %s46, %s47
    %p58 = scmp.eq.s32.totalorder %s16, 0
    %p59 = por %p57, %p58
    %p60 = scmp.ne.s32.totalorder %s46, %s47
    %p61 = scmp.eq.s32.totalorder %s17, 3
    %p62 = por %p60, %p61
    %p64 = scmp.ne.s32.totalorder %s47, %s63
    %p65 = scmp.eq.s32.totalorder %s17, 0
    %p66 = por %p64, %p65
    %s67 = ssub.s32 %s18, %s30
    %s68 = ssub.s32 %s19, %s26
    %s69 = sor.u32 %s67, %s68
    %p70 = scmp.eq.s32.totalorder %s69, 0
    %s72 = sadd.s32 %s71, 1
    %s73 = scalar_select %p70, %s71, %s72
    %p76 = pneg %p70
    %p77 = scmp.eq.s32.totalorder %s11, 3
    %p78 = por %p76, %p77
    %p79 = scmp.ne.s32.totalorder %s71, %s74
    %p80 = scmp.eq.s32.totalorder %s11, 0
    %p81 = por %p79, %p80
    %p82 = scmp.ne.s32.totalorder %s71, %s74
    %p83 = scmp.eq.s32.totalorder %s16, 3
    %p84 = por %p82, %p83
    %p85 = scmp.ne.s32.totalorder %s74, %s75
    %p86 = scmp.eq.s32.totalorder %s16, 0
    %p87 = por %p85, %p86
    %p88 = scmp.ne.s32.totalorder %s74, %s75
    %p89 = scmp.eq.s32.totalorder %s17, 3
    %p90 = por %p88, %p89
    %p92 = scmp.ne.s32.totalorder %s75, %s91
    %p93 = scmp.eq.s32.totalorder %s17, 0
    %p94 = por %p92, %p93
    %s95 = sadd.s32 %s19, 1
    %s96 = smul.u32 %s95, 8
    %p97 = scmp.lt.s32.totalorder %s96, 15
    %s98 = scalar_select %p97, %s96, 15
    %s99 = sadd.s32 %s26, 1
    %s100 = smul.u32 %s99, 8
    %p101 = scmp.lt.s32.totalorder %s100, 15
    %s102 = scalar_select %p101, %s100, 15
    %s103 = ssub.s32 %s18, %s30
    %s104 = ssub.s32 %s98, %s102
    %s105 = sor.u32 %s103, %s104
    %p106 = scmp.eq.s32.totalorder %s105, 0
    %s108 = sadd.s32 %s107, 1
    %s109 = scalar_select %p106, %s107, %s108
    %p112 = pneg %p106
    %p113 = scmp.eq.s32.totalorder %s11, 3
    %p114 = por %p112, %p113
    %p115 = scmp.ne.s32.totalorder %s107, %s110
    %p116 = scmp.eq.s32.totalorder %s11, 0
    %p117 = por %p115, %p116
    %p118 = scmp.ne.s32.totalorder %s107, %s110
    %p119 = scmp.eq.s32.totalorder %s16, 3
    %p120 = por %p118, %p119
    %p121 = scmp.ne.s32.totalorder %s110, %s111
    %p122 = scmp.eq.s32.totalorder %s16, 0
    %p123 = por %p121, %p122
    %p124 = scmp.ne.s32.totalorder %s110, %s111
    %p125 = scmp.eq.s32.totalorder %s17, 3
    %p126 = por %p124, %p125
    %p128 = scmp.ne.s32.totalorder %s111, %s127
    %p129 = scmp.eq.s32.totalorder %s17, 0
    %p130 = por %p128, %p129
    %s132 = sadd.s32 %s131, 1
    %p135 = scmp.eq.s32.totalorder %s11, 3
    %p136 = scmp.ne.s32.totalorder %s131, %s133
    %p137 = scmp.eq.s32.totalorder %s11, 0
    %p138 = por %p136, %p137
    %p139 = scmp.ne.s32.totalorder %s131, %s133
    %p140 = scmp.eq.s32.totalorder %s16, 3
    %p141 = por %p139, %p140
    %p142 = scmp.ne.s32.totalorder %s133, %s134
    %p143 = scmp.eq.s32.totalorder %s16, 0
    %p144 = por %p142, %p143
    %p145 = scmp.ne.s32.totalorder %s133, %s134
    %p146 = scmp.eq.s32.totalorder %s17, 3
    %p147 = por %p145, %p146
    %p149 = scmp.ne.s32.totalorder %s134, %s148
    %p150 = scmp.eq.s32.totalorder %s17, 0
    %p151 = por %p149, %p150
    %s153 = sadd.s32 %s152, 1
    %p156 = scmp.eq.s32.totalorder %s11, 3
    %p157 = scmp.ne.s32.totalorder %s152, %s154
    %p158 = scmp.eq.s32.totalorder %s11, 0
    %p159 = por %p157, %p158
    %p160 = scmp.ne.s32.totalorder %s152, %s154
    %p161 = scmp.eq.s32.totalorder %s16, 3
    %p162 = por %p160, %p161
    %p163 = scmp.ne.s32.totalorder %s154, %s155
    %p164 = scmp.eq.s32.totalorder %s16, 0
    %p165 = por %p163, %p164
    %p166 = scmp.ne.s32.totalorder %s154, %s155
    %p167 = scmp.eq.s32.totalorder %s17, 3
    %p168 = por %p166, %p167
    %p170 = scmp.ne.s32.totalorder %s155, %s169
    %p171 = scmp.eq.s32.totalorder %s17, 0
    %p172 = por %p170, %p171
    %s173 = ssub.s32 %s18, %s30
    %s174 = ssub.s32 %s19, %s26
    %s175 = sor.u32 %s173, %s174
    %p176 = scmp.eq.s32.totalorder %s175, 0
    %s178 = sadd.s32 %s177, 1
    %s179 = scalar_select %p176, %s177, %s178
    %p182 = pneg %p176
    %p183 = scmp.eq.s32.totalorder %s11, 3
    %p184 = por %p182, %p183
    %p185 = scmp.ne.s32.totalorder %s177, %s180
    %p186 = scmp.eq.s32.totalorder %s11, 0
    %p187 = por %p185, %p186
    %p188 = scmp.ne.s32.totalorder %s177, %s180
    %p189 = scmp.eq.s32.totalorder %s16, 3
    %p190 = por %p188, %p189
    %p191 = scmp.ne.s32.totalorder %s180, %s181
    %p192 = scmp.eq.s32.totalorder %s16, 0
    %p193 = por %p191, %p192
    %p194 = scmp.ne.s32.totalorder %s180, %s181
    %p195 = scmp.eq.s32.totalorder %s17, 3
    %p196 = por %p194, %p195
    %p198 = scmp.ne.s32.totalorder %s181, %s197
    %p199 = scmp.eq.s32.totalorder %s17, 0
    %p200 = por %p198, %p199
    %p201 = scmp.le.s32.totalorder 1, %s11
    %p202 = scmp.lt.s32.totalorder %s11, 5
    %p203 = pnand %p201, %p202
    %p204 = pneg %p203
    // Predicated region
    $region9: #{a_call__.4} parent=5 // pred_check
      _
    $region10: #{a_call__.4} parent=5 // pred_check_branch
      %206 = sbr.rel (%p203) target = $region12
    $region11: #{a_call__.4} parent=5 // pred_region
      %s207 = ssub.s32 %s11, 1
      // Predicated region
      $region13: #{a_call__.4} parent=11 // pred_check
        %p208 = pneg %p144
      $region14: #{a_call__.4} parent=11 // pred_check_branch
        %210 = sbr.rel (%p208) target = $region16
      $region15: #{a_call__.4} parent=11 // pred_region
        _
      $region16: #{a_call__.4} parent=11 // pred_fallthru
        _
      // Predicated region
      $region17: #{a_call__.4} parent=11 // pred_check
        %p211 = pneg %p165
      $region18: #{a_call__.4} parent=11 // pred_check_branch
        %213 = sbr.rel (%p211) target = $region20
      $region19: #{a_call__.4} parent=11 // pred_region
        _
      $region20: #{a_call__.4} parent=11 // pred_fallthru
        _
    $region12: #{a_call__.4} parent=5 // pred_fallthru
      _
    %p214 = scmp.lt.s32.totalorder %s11, 4
    // Predicated region
    $region21: #{a_call__.4} parent=5 // pred_check
      %p215 = pneg %p214
    $region22: #{a_call__.4} parent=5 // pred_check_branch
      %217 = sbr.rel (%p215) target = $region24
    $region23: #{a_call__.4} parent=5 // pred_region
      // Predicated region
      $region25: #{a_call__.4} parent=23 // pred_check
        %p218 = pneg %p53
      $region26: #{a_call__.4} parent=23 // pred_check_branch
        %220 = sbr.rel (%p218) target = $region28
      $region27: #{a_call__.4} parent=23 // pred_region
        %s221 = smul.u32 %s19, 8
        %s222 = ssub.s32 %s221, 1
        %p223 = scmp.gt.s32.totalorder %s222, 0
        %s224 = scalar_select %p223, %s222, 0
        %p225 = scmp.lt.s32.totalorder %s18, 1
        %s226 = scalar_select %p225, %s18, 1
        %p227 = scmp.lt.s32.totalorder %s224, 15
        %s228 = scalar_select %p227, %s224, 15
        %s229 = smul.addr %s228, 2
        %s230 = smul.addr %s226, 32
        %s231 = sadd.s32 %s229, %s230
        %s232 = smul.addr %s231, 8
        %s233 = scalar_lea.vmem %s0, %s232
        %s234 = smul.u32 %s19, 8
        %s235 = ssub.s32 %s234, 1
        %p236 = scmp.gt.s32.totalorder %s235, 0
        %s237 = scalar_select %p236, %s235, 0
      $region28: #{a_call__.4} parent=23 // pred_fallthru
        _
      // Predicated region
      $region29: #{a_call__.4} parent=23 // pred_check
        %p238 = pneg %p81
      $region30: #{a_call__.4} parent=23 // pred_check_branch
        %240 = sbr.rel (%p238) target = $region32
      $region31: #{a_call__.4} parent=23 // pred_region
        %s241 = smul.u32 8, %s19
        %p242 = scmp.lt.s32.totalorder %s18, 1
        %s243 = scalar_select %p242, %s18, 1
        %p244 = scmp.lt.s32.totalorder %s241, 15
        %s245 = scalar_select %p244, %s241, 15
        %s246 = smul.addr %s245, 2
        %s247 = smul.addr %s243, 32
        %s248 = sadd.s32 %s246, %s247
        %s249 = smul.addr %s248, 8
        %s250 = scalar_lea.vmem %s1, %s249
        %s251 = smul.u32 8, %s19
      $region32: #{a_call__.4} parent=23 // pred_fallthru
        _
      // Predicated region
      $region33: #{a_call__.4} parent=23 // pred_check
        %p252 = pneg %p117
      $region34: #{a_call__.4} parent=23 // pred_check_branch
        %254 = sbr.rel (%p252) target = $region36
      $region35: #{a_call__.4} parent=23 // pred_region
        %s255 = sadd.s32 %s19, 1
        %s256 = smul.u32 %s255, 8
        %p257 = scmp.lt.s32.totalorder %s256, 15
        %s258 = scalar_select %p257, %s256, 15
        %p259 = scmp.lt.s32.totalorder %s18, 1
        %s260 = scalar_select %p259, %s18, 1
        %p261 = scmp.lt.s32.totalorder %s258, 15
        %s262 = scalar_select %p261, %s258, 15
        %s263 = smul.addr %s262, 2
        %s264 = smul.addr %s260, 32
        %s265 = sadd.s32 %s263, %s264
        %s266 = smul.addr %s265, 8
        %s267 = scalar_lea.vmem %s2, %s266
        %s268 = sadd.s32 %s19, 1
        %s269 = smul.u32 %s268, 8
        %p270 = scmp.lt.s32.totalorder %s269, 15
        %s271 = scalar_select %p270, %s269, 15
      $region36: #{a_call__.4} parent=23 // pred_fallthru
        _
    $region24: #{a_call__.4} parent=5 // pred_fallthru
      _
    %p272 = scmp.le.s32.totalorder 1, %s11
    %p273 = scmp.lt.s32.totalorder %s11, 5
    %p274 = pnand %p272, %p273
    %p275 = pneg %p274
    // Predicated region
    $region37: #{a_call__.4} parent=5 // pred_check
      _
    $region38: #{a_call__.4} parent=5 // pred_check_branch
      %277 = sbr.rel (%p274) target = $region40
    $region39: #{a_call__.4} parent=5 // pred_region
      %s278 = ssub.s32 %s11, 1
      %s279 = smul.u32 %s21, 8
      %s280 = ssub.s32 %s279, 1
      %p281 = scmp.gt.s32.totalorder %s280, 0
      %s282 = scalar_select %p281, %s280, 0
      %p283 = scmp.lt.s32.totalorder %s20, 1
      %s284 = scalar_select %p283, %s20, 1
      %p285 = scmp.lt.s32.totalorder %s282, 15
      %s286 = scalar_select %p285, %s282, 15
      %s287 = smul.addr %s286, 2
      %s288 = smul.addr %s284, 32
      %s289 = sadd.s32 %s287, %s288
      %s290 = smul.addr %s289, 8
      %s291 = scalar_lea.vmem %s0, %s290
      %p292 = pneg %p59
      %p293 = pneg %p56
      %s294 = smul.u32 8, %s21
      %p295 = scmp.lt.s32.totalorder %s20, 1
      %s296 = scalar_select %p295, %s20, 1
      %p297 = scmp.lt.s32.totalorder %s294, 15
      %s298 = scalar_select %p297, %s294, 15
      %s299 = smul.addr %s298, 2
      %s300 = smul.addr %s296, 32
      %s301 = sadd.s32 %s299, %s300
      %s302 = smul.addr %s301, 8
      %s303 = scalar_lea.vmem %s1, %s302
      %p304 = pneg %p87
      %p305 = pneg %p84
      %s306 = sadd.s32 %s21, 1
      %s307 = smul.u32 %s306, 8
      %p308 = scmp.lt.s32.totalorder %s307, 15
      %s309 = scalar_select %p308, %s307, 15
      %p310 = scmp.lt.s32.totalorder %s20, 1
      %s311 = scalar_select %p310, %s20, 1
      %p312 = scmp.lt.s32.totalorder %s309, 15
      %s313 = scalar_select %p312, %s309, 15
      %s314 = smul.addr %s313, 2
      %s315 = smul.addr %s311, 32
      %s316 = sadd.s32 %s314, %s315
      %s317 = smul.addr %s316, 8
      %s318 = scalar_lea.vmem %s2, %s317
      %p319 = pneg %p123
      %p320 = pneg %p120
      %p321 = pneg %p144
      %p322 = pneg %p141
      %p323 = pneg %p165
      %p324 = pneg %p162
      %p325 = pneg %p193
      %p326 = pneg %p190
      %s327 = smul.u32 16, %s21
      %p328 = scmp.lt.s32.totalorder %s20, 1
      %s329 = scalar_select %p328, %s20, 1
      %p330 = scmp.lt.s32.totalorder %s327, 31
      %s331 = scalar_select %p330, %s327, 31
      %s332 = smul.addr %s329, 32
      %s333 = sadd.s32 %s331, %s332
      %s334 = smul.addr %s333, 4
      %s335 = scalar_lea.vmem %s5, %s334
      %s336 = smul.u32 %s21, 8
      %s337 = ssub.s32 %s336, 1
      %p338 = scmp.gt.s32.totalorder %s337, 0
      %s339 = scalar_select %p338, %s337, 0
      %p340 = scmp.lt.s32.totalorder %s20, 1
      %s341 = scalar_select %p340, %s20, 1
      %p342 = scmp.lt.s32.totalorder %s339, 15
      %s343 = scalar_select %p342, %s339, 15
      %s344 = smul.addr %s343, 2
      %s345 = smul.addr %s341, 32
      %s346 = sadd.s32 %s344, %s345
      %s347 = smul.addr %s346, 8
      %s348 = scalar_lea.vmem %s0, %s347
      %s349 = smul.u32 %s21, 8
      %s350 = ssub.s32 %s349, 1
      %p351 = scmp.gt.s32.totalorder %s350, 0
      %s352 = scalar_select %p351, %s350, 0
      %s353 = smul.u32 8, %s21
      %p354 = scmp.lt.s32.totalorder %s20, 1
      %s355 = scalar_select %p354, %s20, 1
      %p356 = scmp.lt.s32.totalorder %s353, 15
      %s357 = scalar_select %p356, %s353, 15
      %s358 = smul.addr %s357, 2
      %s359 = smul.addr %s355, 32
      %s360 = sadd.s32 %s358, %s359
      %s361 = smul.addr %s360, 8
      %s362 = scalar_lea.vmem %s1, %s361
      %s363 = smul.u32 8, %s21
      %s364 = sadd.s32 %s21, 1
      %s365 = smul.u32 %s364, 8
      %p366 = scmp.lt.s32.totalorder %s365, 15
      %s367 = scalar_select %p366, %s365, 15
      %p368 = scmp.lt.s32.totalorder %s20, 1
      %s369 = scalar_select %p368, %s20, 1
      %p370 = scmp.lt.s32.totalorder %s367, 15
      %s371 = scalar_select %p370, %s367, 15
      %s372 = smul.addr %s371, 2
      %s373 = smul.addr %s369, 32
      %s374 = sadd.s32 %s372, %s373
      %s375 = smul.addr %s374, 8
      %s376 = scalar_lea.vmem %s2, %s375
      %s377 = sadd.s32 %s21, 1
      %s378 = smul.u32 %s377, 8
      %p379 = scmp.lt.s32.totalorder %s378, 15
      %s380 = scalar_select %p379, %s378, 15
      %s381 = smul.u32 16, %s21
      %p382 = scmp.lt.s32.totalorder %s20, 1
      %s383 = scalar_select %p382, %s20, 1
      %p384 = scmp.lt.s32.totalorder %s381, 31
      %s385 = scalar_select %p384, %s381, 31
      %s386 = smul.addr %s383, 32
      %s387 = sadd.s32 %s385, %s386
      %s388 = smul.addr %s387, 4
      %s389 = scalar_lea.vmem %s5, %s388
      %s390 = smul.u32 16, %s21
      %v392 = vld [vmem:[%s362] sm:$0xff]
      %v393 = vld [vmem:[%s362 + $0x8] sm:$0xff]
      %v394 = vld [vmem:[%s362 + $0x10] sm:$0xff]
      %v395 = vld [vmem:[%s362 + $0x18] sm:$0xff]
      %v396 = vld [vmem:[%s362 + $0x20] sm:$0xff]
      %v397 = vld [vmem:[%s362 + $0x28] sm:$0xff]
      %v398 = vld [vmem:[%s362 + $0x30] sm:$0xff]
      %v399 = vld [vmem:[%s362 + $0x38] sm:$0xff]
      %v400 = vld [vmem:[%s362 + $0x40] sm:$0xff]
      %v401 = vld [vmem:[%s362 + $0x48] sm:$0xff]
      %v402 = vld [vmem:[%s362 + $0x50] sm:$0xff]
      %v403 = vld [vmem:[%s362 + $0x58] sm:$0xff]
      %v404 = vld [vmem:[%s362 + $0x60] sm:$0xff]
      %v405 = vld [vmem:[%s362 + $0x68] sm:$0xff]
      %v406 = vld [vmem:[%s362 + $0x70] sm:$0xff]
      %v407 = vld [vmem:[%s362 + $0x78] sm:$0xff]
      %v408 = vpack.c.bf16 %v393, %v392
      %v409 = vpack.c.bf16 %v395, %v394
      %v410 = vpack.c.bf16 %v397, %v396
      %v411 = vpack.c.bf16 %v399, %v398
      %v412 = vpack.c.bf16 %v401, %v400
      %v413 = vpack.c.bf16 %v403, %v402
      %v414 = vpack.c.bf16 %v405, %v404
      %v415 = vpack.c.bf16 %v407, %v406
      %v416 = vld [vmem:[%s348] sm:$0xff]
      %v417 = vld [vmem:[%s348 + $0x8] sm:$0xff]
      %v418 = vpack.c.bf16 %v417, %v416
      %p419 = scmp.gt.s32.totalorder %s21, 0
      %s420 = scalar_select %p419, 1, 0
      %s421 = scvt.s32.f32 %s420
      %p423 = scmp.ne.f32.partialorder %s421, %s421
      %s424 = sshrl.u32 %s421, 16
      %s425 = sand.u32 %s424, 1
      %s426 = sadd.s32 32767, %s425
      %s427 = sadd.s32 %s421, %s426
      %s428 = sand.u32 %s427, 4294901760
      %s429 = scalar_select %p423, 2143289344, %s428
      %s431 = sshrl.u32 %s429, 16
      %s432 = sshll.u32 %s431, 16
      %s433 = sor.u32 %s431, %s432
      %v434 = vstv %s433
      %v436 = vmul.bf16 %v418, %v434
      %v437 = vld [vmem:[%s376] sm:$0xff]
      %v438 = vld [vmem:[%s376 + $0x8] sm:$0xff]
      %v439 = vpack.c.bf16 %v438, %v437
      %p440 = scmp.lt.s32.totalorder %s21, 1
      %s441 = scalar_select %p440, 1, 0
      %s442 = scvt.s32.f32 %s441
      %p444 = scmp.ne.f32.partialorder %s442, %s442
      %s445 = sshrl.u32 %s442, 16
      %s446 = sand.u32 %s445, 1
      %s447 = sadd.s32 32767, %s446
      %s448 = sadd.s32 %s442, %s447
      %s449 = sand.u32 %s448, 4294901760
      %s450 = scalar_select %p444, 2143289344, %s449
      %s452 = sshrl.u32 %s450, 16
      %s453 = sshll.u32 %s452, 16
      %s454 = sor.u32 %s452, %s453
      %v455 = vstv %s454
      %v457 = vmul.bf16 %v439, %v455
      %v459 = vshrl.u32 %v436, 16
      %v461 = vrot.slane %v459, 7
      %v462 = vshll.u32 %v436, 16
      %v464 = vor.u32 %v461, %v462
      %v466 = vshrl.u32 %v408, 16
      %v468 = vrot.slane %v466, 7
      %v469 = vshll.u32 %v408, 16
      %v471 = vor.u32 %v468, %v469
      %v473 = vshrl.u32 %v409, 16
      %v475 = vrot.slane %v473, 7
      %v476 = vshll.u32 %v409, 16
      %v478 = vor.u32 %v475, %v476
      %v480 = vshrl.u32 %v410, 16
      %v482 = vrot.slane %v480, 7
      %v483 = vshll.u32 %v410, 16
      %v485 = vor.u32 %v482, %v483
      %v487 = vshrl.u32 %v411, 16
      %v489 = vrot.slane %v487, 7
      %v490 = vshll.u32 %v411, 16
      %v492 = vor.u32 %v489, %v490
      %v494 = vshrl.u32 %v412, 16
      %v496 = vrot.slane %v494, 7
      %v497 = vshll.u32 %v412, 16
      %v499 = vor.u32 %v496, %v497
      %v501 = vshrl.u32 %v413, 16
      %v503 = vrot.slane %v501, 7
      %v504 = vshll.u32 %v413, 16
      %v506 = vor.u32 %v503, %v504
      %v508 = vshrl.u32 %v414, 16
      %v510 = vrot.slane %v508, 7
      %v511 = vshll.u32 %v414, 16
      %v513 = vor.u32 %v510, %v511
      %v515 = vshrl.u32 %v415, 16
      %v517 = vrot.slane %v515, 7
      %v518 = vshll.u32 %v415, 16
      %v520 = vor.u32 %v517, %v518
      %v522 = vshrl.u32 %v457, 16
      %v524 = vrot.slane %v522, 7
      %v525 = vshll.u32 %v457, 16
      %v527 = vor.u32 %v524, %v525
      %vm548 = vcmask 1040384
      %vm549 = vsmask.f32 256
      %vm550 = vmand %vm548, %vm549
      %v551 = vsel %vm550, 0, %v464
      %v552 = vsel %vm550, 0, %v471
      %v553 = vsel %vm550, 0, %v478
      %v554 = vsel %vm550, 0, %v485
      %v555 = vsel %vm550, 0, %v492
      %v556 = vsel %vm550, 0, %v499
      %v557 = vsel %vm550, 0, %v506
      %v558 = vsel %vm550, 0, %v513
      %v559 = vsel %vm550, 0, %v520
      %v560 = vsel %vm550, 0, %v527
      %v561 = vsel %vm550, %v461, 0
      %v562 = vsel %vm550, %v468, 0
      %v563 = vsel %vm550, %v475, 0
      %v564 = vsel %vm550, %v482, 0
      %v565 = vsel %vm550, %v489, 0
      %v566 = vsel %vm550, %v496, 0
      %v567 = vsel %vm550, %v503, 0
      %v568 = vsel %vm550, %v510, 0
      %v569 = vsel %vm550, %v517, 0
      %v570 = vsel %vm550, %v524, 0
      %vm571 = vsmask.f32 7424
      %v573 = vshrl.u32 %v551, 16
      %v575 = vshll.u32 %v551, 16
      %v577 = vrot.slane %v575, 1
      %v578 = vor.u32 %v573, %v577
      %v580 = vshll.u32 %v561, 16
      %v582 = vrot.slane %v580, 1
      %v583 = vsel %vm571, %v578, %v582
      %v585 = vshrl.u32 %v552, 16
      %v587 = vshll.u32 %v552, 16
      %v589 = vrot.slane %v587, 1
      %v590 = vor.u32 %v585, %v589
      %v592 = vshll.u32 %v562, 16
      %v594 = vrot.slane %v592, 1
      %v595 = vsel %vm571, %v590, %v594
      %v597 = vshrl.u32 %v553, 16
      %v599 = vshll.u32 %v553, 16
      %v601 = vrot.slane %v599, 1
      %v602 = vor.u32 %v597, %v601
      %v604 = vshll.u32 %v563, 16
      %v606 = vrot.slane %v604, 1
      %v607 = vsel %vm571, %v602, %v606
      %v609 = vshrl.u32 %v554, 16
      %v611 = vshll.u32 %v554, 16
      %v613 = vrot.slane %v611, 1
      %v614 = vor.u32 %v609, %v613
      %v616 = vshll.u32 %v564, 16
      %v618 = vrot.slane %v616, 1
      %v619 = vsel %vm571, %v614, %v618
      %v621 = vshrl.u32 %v555, 16
      %v623 = vshll.u32 %v555, 16
      %v625 = vrot.slane %v623, 1
      %v626 = vor.u32 %v621, %v625
      %v628 = vshll.u32 %v565, 16
      %v630 = vrot.slane %v628, 1
      %v631 = vsel %vm571, %v626, %v630
      %v633 = vshrl.u32 %v556, 16
      %v635 = vshll.u32 %v556, 16
      %v637 = vrot.slane %v635, 1
      %v638 = vor.u32 %v633, %v637
      %v640 = vshll.u32 %v566, 16
      %v642 = vrot.slane %v640, 1
      %v643 = vsel %vm571, %v638, %v642
      %v645 = vshrl.u32 %v557, 16
      %v647 = vshll.u32 %v557, 16
      %v649 = vrot.slane %v647, 1
      %v650 = vor.u32 %v645, %v649
      %v652 = vshll.u32 %v567, 16
      %v654 = vrot.slane %v652, 1
      %v655 = vsel %vm571, %v650, %v654
      %v657 = vshrl.u32 %v558, 16
      %v659 = vshll.u32 %v558, 16
      %v661 = vrot.slane %v659, 1
      %v662 = vor.u32 %v657, %v661
      %v664 = vshll.u32 %v568, 16
      %v666 = vrot.slane %v664, 1
      %v667 = vsel %vm571, %v662, %v666
      %668 = vrot.lane.b32.xlu0 %v583, 4
      %v669 = vpop.permute.xlu0 %668
      %670 = vrot.lane.b32.xlu0 %v595, 4
      %v671 = vpop.permute.xlu0 %670
      %672 = vrot.lane.b32.xlu0 %v607, 4
      %v673 = vpop.permute.xlu0 %672
      %674 = vrot.lane.b32.xlu0 %v619, 4
      %v675 = vpop.permute.xlu0 %674
      %676 = vrot.lane.b32.xlu0 %v631, 4
      %v677 = vpop.permute.xlu0 %676
      %678 = vrot.lane.b32.xlu0 %v643, 4
      %v679 = vpop.permute.xlu0 %678
      %680 = vrot.lane.b32.xlu0 %v655, 4
      %v681 = vpop.permute.xlu0 %680
      %682 = vrot.lane.b32.xlu0 %v667, 4
      %v683 = vpop.permute.xlu0 %682
      %vm700 = vcmask 1046528
      %v701 = vrot.slane %v551, 1
      %v702 = vrot.slane %v561, 1
      %v703 = vsel %vm700, %v701, %v702
      %v704 = vrot.slane %v552, 1
      %v705 = vrot.slane %v562, 1
      %v706 = vsel %vm700, %v704, %v705
      %v707 = vrot.slane %v553, 1
      %v708 = vrot.slane %v563, 1
      %v709 = vsel %vm700, %v707, %v708
      %v710 = vrot.slane %v554, 1
      %v711 = vrot.slane %v564, 1
      %v712 = vsel %vm700, %v710, %v711
      %v713 = vrot.slane %v555, 1
      %v714 = vrot.slane %v565, 1
      %v715 = vsel %vm700, %v713, %v714
      %v716 = vrot.slane %v556, 1
      %v717 = vrot.slane %v566, 1
      %v718 = vsel %vm700, %v716, %v717
      %v719 = vrot.slane %v557, 1
      %v720 = vrot.slane %v567, 1
      %v721 = vsel %vm700, %v719, %v720
      %v722 = vrot.slane %v558, 1
      %v723 = vrot.slane %v568, 1
      %v724 = vsel %vm700, %v722, %v723
      %725 = vrot.lane.b32.xlu0 %v703, 8
      %v726 = vpop.permute.xlu0 %725
      %727 = vrot.lane.b32.xlu0 %v706, 8
      %v728 = vpop.permute.xlu0 %727
      %729 = vrot.lane.b32.xlu0 %v709, 8
      %v730 = vpop.permute.xlu0 %729
      %731 = vrot.lane.b32.xlu0 %v712, 8
      %v732 = vpop.permute.xlu0 %731
      %733 = vrot.lane.b32.xlu0 %v715, 8
      %v734 = vpop.permute.xlu0 %733
      %735 = vrot.lane.b32.xlu0 %v718, 8
      %v736 = vpop.permute.xlu0 %735
      %737 = vrot.lane.b32.xlu0 %v721, 8
      %v738 = vpop.permute.xlu0 %737
      %739 = vrot.lane.b32.xlu0 %v724, 8
      %v740 = vpop.permute.xlu0 %739
      %742 = vrot.lane.b32.xlu0 %v552, 12
      %v743 = vpop.permute.xlu0 %742
      %744 = vrot.lane.b32.xlu0 %v553, 12
      %v745 = vpop.permute.xlu0 %744
      %746 = vrot.lane.b32.xlu0 %v554, 12
      %v747 = vpop.permute.xlu0 %746
      %748 = vrot.lane.b32.xlu0 %v555, 12
      %v749 = vpop.permute.xlu0 %748
      %750 = vrot.lane.b32.xlu0 %v556, 12
      %v751 = vpop.permute.xlu0 %750
      %752 = vrot.lane.b32.xlu0 %v557, 12
      %v753 = vpop.permute.xlu0 %752
      %754 = vrot.lane.b32.xlu0 %v558, 12
      %v755 = vpop.permute.xlu0 %754
      %756 = vrot.lane.b32.xlu0 %v559, 12
      %v757 = vpop.permute.xlu0 %756
      %v759 = vshrl.u32 %v559, 16
      %v761 = vshll.u32 %v559, 16
      %v763 = vrot.slane %v761, 1
      %v764 = vor.u32 %v759, %v763
      %v766 = vshll.u32 %v569, 16
      %v768 = vrot.slane %v766, 1
      %v769 = vsel %vm571, %v764, %v768
      %770 = vrot.lane.b32.xlu0 %v595, 16
      %v771 = vpop.permute.xlu0 %770
      %772 = vrot.lane.b32.xlu0 %v607, 16
      %v773 = vpop.permute.xlu0 %772
      %774 = vrot.lane.b32.xlu0 %v619, 16
      %v775 = vpop.permute.xlu0 %774
      %776 = vrot.lane.b32.xlu0 %v631, 16
      %v777 = vpop.permute.xlu0 %776
      %778 = vrot.lane.b32.xlu0 %v643, 16
      %v779 = vpop.permute.xlu0 %778
      %780 = vrot.lane.b32.xlu0 %v655, 16
      %v781 = vpop.permute.xlu0 %780
      %782 = vrot.lane.b32.xlu0 %v667, 16
      %v783 = vpop.permute.xlu0 %782
      %784 = vrot.lane.b32.xlu0 %v769, 16
      %v785 = vpop.permute.xlu0 %784
      %v787 = vrot.slane %v559, 1
      %v788 = vrot.slane %v569, 1
      %v789 = vsel %vm700, %v787, %v788
      %790 = vrot.lane.b32.xlu0 %v706, 20
      %v791 = vpop.permute.xlu0 %790
      %792 = vrot.lane.b32.xlu0 %v709, 20
      %v793 = vpop.permute.xlu0 %792
      %794 = vrot.lane.b32.xlu0 %v712, 20
      %v795 = vpop.permute.xlu0 %794
      %796 = vrot.lane.b32.xlu0 %v715, 20
      %v797 = vpop.permute.xlu0 %796
      %798 = vrot.lane.b32.xlu0 %v718, 20
      %v799 = vpop.permute.xlu0 %798
      %800 = vrot.lane.b32.xlu0 %v721, 20
      %v801 = vpop.permute.xlu0 %800
      %802 = vrot.lane.b32.xlu0 %v724, 20
      %v803 = vpop.permute.xlu0 %802
      %804 = vrot.lane.b32.xlu0 %v789, 20
      %v805 = vpop.permute.xlu0 %804
      %807 = vrot.lane.b32.xlu0 %v553, 24
      %v808 = vpop.permute.xlu0 %807
      %809 = vrot.lane.b32.xlu0 %v554, 24
      %v810 = vpop.permute.xlu0 %809
      %811 = vrot.lane.b32.xlu0 %v555, 24
      %v812 = vpop.permute.xlu0 %811
      %813 = vrot.lane.b32.xlu0 %v556, 24
      %v814 = vpop.permute.xlu0 %813
      %815 = vrot.lane.b32.xlu0 %v557, 24
      %v816 = vpop.permute.xlu0 %815
      %817 = vrot.lane.b32.xlu0 %v558, 24
      %v818 = vpop.permute.xlu0 %817
      %819 = vrot.lane.b32.xlu0 %v559, 24
      %v820 = vpop.permute.xlu0 %819
      %821 = vrot.lane.b32.xlu0 %v560, 24
      %v822 = vpop.permute.xlu0 %821
      %v824 = vshrl.u32 %v560, 16
      %v826 = vshll.u32 %v560, 16
      %v828 = vrot.slane %v826, 1
      %v829 = vor.u32 %v824, %v828
      %v831 = vshll.u32 %v570, 16
      %v833 = vrot.slane %v831, 1
      %v834 = vsel %vm571, %v829, %v833
      %835 = vrot.lane.b32.xlu0 %v607, 28
      %v836 = vpop.permute.xlu0 %835
      %837 = vrot.lane.b32.xlu0 %v619, 28
      %v838 = vpop.permute.xlu0 %837
      %839 = vrot.lane.b32.xlu0 %v631, 28
      %v840 = vpop.permute.xlu0 %839
      %841 = vrot.lane.b32.xlu0 %v643, 28
      %v842 = vpop.permute.xlu0 %841
      %843 = vrot.lane.b32.xlu0 %v655, 28
      %v844 = vpop.permute.xlu0 %843
      %845 = vrot.lane.b32.xlu0 %v667, 28
      %v846 = vpop.permute.xlu0 %845
      %847 = vrot.lane.b32.xlu0 %v769, 28
      %v848 = vpop.permute.xlu0 %847
      %849 = vrot.lane.b32.xlu0 %v834, 28
      %v850 = vpop.permute.xlu0 %849
      %v852 = vrot.slane %v560, 1
      %v853 = vrot.slane %v570, 1
      %v854 = vsel %vm700, %v852, %v853
      %855 = vrot.lane.b32.xlu0 %v709, 32
      %v856 = vpop.permute.xlu0 %855
      %857 = vrot.lane.b32.xlu0 %v712, 32
      %v858 = vpop.permute.xlu0 %857
      %859 = vrot.lane.b32.xlu0 %v715, 32
      %v860 = vpop.permute.xlu0 %859
      %861 = vrot.lane.b32.xlu0 %v718, 32
      %v862 = vpop.permute.xlu0 %861
      %863 = vrot.lane.b32.xlu0 %v721, 32
      %v864 = vpop.permute.xlu0 %863
      %865 = vrot.lane.b32.xlu0 %v724, 32
      %v866 = vpop.permute.xlu0 %865
      %867 = vrot.lane.b32.xlu0 %v789, 32
      %v868 = vpop.permute.xlu0 %867
      %869 = vrot.lane.b32.xlu0 %v854, 32
      %v870 = vpop.permute.xlu0 %869
      %vm871 = vcmask 31744
      %v873 = vsel %vm871, %v551, %v669
      %v875 = vsel %vm871, %v552, %v671
      %v877 = vsel %vm871, %v553, %v673
      %v879 = vsel %vm871, %v554, %v675
      %v881 = vsel %vm871, %v555, %v677
      %v883 = vsel %vm871, %v556, %v679
      %v885 = vsel %vm871, %v557, %v681
      %v887 = vsel %vm871, %v558, %v683
      %vm888 = vcmask 64512
      %v890 = vsel %vm888, %v873, %v726
      %v892 = vsel %vm888, %v875, %v728
      %v894 = vsel %vm888, %v877, %v730
      %v896 = vsel %vm888, %v879, %v732
      %v898 = vsel %vm888, %v881, %v734
      %v900 = vsel %vm888, %v883, %v736
      %v902 = vsel %vm888, %v885, %v738
      %v904 = vsel %vm888, %v887, %v740
      %vm905 = vcmask 97280
      %v907 = vsel %vm905, %v890, %v743
      %v909 = vsel %vm905, %v892, %v745
      %v911 = vsel %vm905, %v894, %v747
      %v913 = vsel %vm905, %v896, %v749
      %v915 = vsel %vm905, %v898, %v751
      %v917 = vsel %vm905, %v900, %v753
      %v919 = vsel %vm905, %v902, %v755
      %v921 = vsel %vm905, %v904, %v757
      %vm922 = vcmask 130048
      %v924 = vsel %vm922, %v907, %v771
      %v926 = vsel %vm922, %v909, %v773
      %v928 = vsel %vm922, %v911, %v775
      %v930 = vsel %vm922, %v913, %v777
      %v932 = vsel %vm922, %v915, %v779
      %v934 = vsel %vm922, %v917, %v781
      %v936 = vsel %vm922, %v919, %v783
      %v938 = vsel %vm922, %v921, %v785
      %vm939 = vcmask 162816
      %v941 = vsel %vm939, %v924, %v791
      %v943 = vsel %vm939, %v926, %v793
      %v945 = vsel %vm939, %v928, %v795
      %v947 = vsel %vm939, %v930, %v797
      %v949 = vsel %vm939, %v932, %v799
      %v951 = vsel %vm939, %v934, %v801
      %v953 = vsel %vm939, %v936, %v803
      %v955 = vsel %vm939, %v938, %v805
      %vm956 = vcmask 195584
      %v958 = vsel %vm956, %v941, %v808
      %v960 = vsel %vm956, %v943, %v810
      %v962 = vsel %vm956, %v945, %v812
      %v964 = vsel %vm956, %v947, %v814
      %v966 = vsel %vm956, %v949, %v816
      %v968 = vsel %vm956, %v951, %v818
      %v970 = vsel %vm956, %v953, %v820
      %v972 = vsel %vm956, %v955, %v822
      %vm973 = vcmask 228352
      %v975 = vsel %vm973, %v958, %v836
      %v977 = vsel %vm973, %v960, %v838
      %v979 = vsel %vm973, %v962, %v840
      %v981 = vsel %vm973, %v964, %v842
      %v983 = vsel %vm973, %v966, %v844
      %v985 = vsel %vm973, %v968, %v846
      %v987 = vsel %vm973, %v970, %v848
      %v989 = vsel %vm973, %v972, %v850
      %vm990 = vcmask 261120
      %v992 = vsel %vm990, %v975, %v856
      %v994 = vsel %vm990, %v977, %v858
      %v996 = vsel %vm990, %v979, %v860
      %v998 = vsel %vm990, %v981, %v862
      %v1000 = vsel %vm990, %v983, %v864
      %v1002 = vsel %vm990, %v985, %v866
      %v1004 = vsel %vm990, %v987, %v868
      %v1006 = vsel %vm990, %v989, %v870
      %v1007 = vld [vmem:[%s3] sm:$0xf]
      %v1008 = vld [vmem:[%s3 + $0x4] sm:$0xf]
      %v1009 = vld [vmem:[%s3 + $0x8] sm:$0xf]
      %v1010 = vld [vmem:[%s3 + $0xc] sm:$0xf]
      %v1011 = vld [vmem:[%s3 + $0x10] sm:$0x3]
      %v1012 = vld [vmem:[%s4] sm:$0x1]
      %v1014 = vlaneseq
      %v1015 = vshrl.u32 %v1014, 7
      %v1016 = vsub.s32 0, %v1015
      %v1017 = vrot.slane %v1012, %v1016
      %v1024 = vunpack.c.l.b16 %v1007
      %v1025 = vunpack.c.l.b16 %v1008
      %v1026 = vunpack.c.l.b16 %v1009
      %v1027 = vunpack.c.l.b16 %v1010
      %v1028 = vunpack.c.l.b16 %v1011
      %v1029 = vpack.c.b16 %v1025, %v1024
      %v1030 = vpack.c.b16 %v1027, %v1026
      %v1031 = vpack.c.b16 %v1028, %v1028
      %vm1034 = vcmask 293888
      %v1035 = vsel %vm1034, %v992, 0
      %v1037 = vsel %vm1034, %v994, 0
      %v1039 = vsel %vm1034, %v996, 0
      %v1041 = vsel %vm1034, %v998, 0
      %v1043 = vsel %vm1034, %v1000, 0
      %v1045 = vsel %vm1034, %v1002, 0
      %v1047 = vsel %vm1034, %v1004, 0
      %v1049 = vsel %vm1034, %v1006, 0
      %vm1051 = vcmask 1041408
      %v1053 = vsel %vm1051, %v1031, 0
      %1055 = vmatprep.subr.bf16.mxu0 0
      %1056 = vmatpush1.bf16.msra.mxu0 %v1029
      %1057 = vmatprep.subr.bf16.mxu0 0
      %1058 = vmatpush1.bf16.msra.mxu0 %v1030
      %1059 = vmatprep.subr.bf16.mxu0 0
      %1060 = vmatpush1.bf16.msra.mxu0 %v1053
      %1061 = vmatprep.subr.bf16.mxu0 0
      %1062 = vmatpush1.bf16.msra.mxu0 0
      %1063 = vmatprep.subr.bf16.mxu0 0
      %1064 = vmatpush1.bf16.msra.mxu0 0
      %1065 = vmatprep.subr.bf16.mxu0 0
      %1066 = vmatpush1.bf16.msra.mxu0 0
      %1067 = vmatprep.subr.bf16.mxu0 0
      %1068 = vmatpush1.bf16.msra.mxu0 0
      %1069 = vmatprep.subr.bf16.mxu0 0
      %1070 = vmatpush1.bf16.msra.mxu0 0
      %1071 = vmatprep.subr.bf16.mxu0 0
      %1072 = vmatpush1.bf16.msra.mxu0 0
      %1073 = vmatprep.subr.bf16.mxu0 0
      %1074 = vmatpush1.bf16.msra.mxu0 0
      %1075 = vmatprep.subr.bf16.mxu0 0
      %1076 = vmatpush1.bf16.msra.mxu0 0
      %1077 = vmatprep.subr.bf16.mxu0 0
      %1078 = vmatpush1.bf16.msra.mxu0 0
      %1079 = vmatprep.subr.bf16.mxu0 0
      %1080 = vmatpush1.bf16.msra.mxu0 0
      %1081 = vmatprep.subr.bf16.mxu0 0
      %1082 = vmatpush1.bf16.msra.mxu0 0
      %1083 = vmatprep.subr.bf16.mxu0 0
      %1084 = vmatpush1.bf16.msra.mxu0 0
      %1085 = vmatprep.subr.bf16.mxu0 0
      %1086 = vmatpush1.bf16.msra.mxu0 0
      %1087 = vmatprep.mubr.bf16.mxu0 0
      %1088 = vmatmul.mubr.bf16.gmra.mrb[0].mxu0 %v1035
      %v1089 = vpop.f32.mrb[0].mxu0
      %v1090 = vadd.f32 %v1017, %v1089
      %v1091 = vpop.f32.mrb[0].mxu0
      %v1092 = vpop.f32.mrb[0].mxu0
      %v1093 = vadd.f32 %v1017, %v1092
      %v1094 = vpop.f32.mrb[0].mxu0
      %1095 = vmatprep.mubr.bf16.mxu0 0
      %1096 = vmatmul.mubr.bf16.gmra.mrb[0].mxu0 %v1037
      %v1097 = vpop.f32.mrb[0].mxu0
      %v1098 = vadd.f32 %v1017, %v1097
      %v1099 = vpop.f32.mrb[0].mxu0
      %v1100 = vpop.f32.mrb[0].mxu0
      %v1101 = vadd.f32 %v1017, %v1100
      %v1102 = vpop.f32.mrb[0].mxu0
      %1103 = vmatprep.mubr.bf16.mxu0 0
      %1104 = vmatmul.mubr.bf16.gmra.mrb[0].mxu0 %v1039
      %v1105 = vpop.f32.mrb[0].mxu0
      %v1106 = vadd.f32 %v1017, %v1105
      %v1107 = vpop.f32.mrb[0].mxu0
      %v1108 = vpop.f32.mrb[0].mxu0
      %v1109 = vadd.f32 %v1017, %v1108
      %v1110 = vpop.f32.mrb[0].mxu0
      %1111 = vmatprep.mubr.bf16.mxu0 0
      %1112 = vmatmul.mubr.bf16.gmra.mrb[0].mxu0 %v1041
      %v1113 = vpop.f32.mrb[0].mxu0
      %v1114 = vadd.f32 %v1017, %v1113
      %v1115 = vpop.f32.mrb[0].mxu0
      %v1116 = vpop.f32.mrb[0].mxu0
      %v1117 = vadd.f32 %v1017, %v1116
      %v1118 = vpop.f32.mrb[0].mxu0
      %1119 = vmatprep.mubr.bf16.mxu0 0
      %1120 = vmatmul.mubr.bf16.gmra.mrb[0].mxu0 %v1043
      %v1121 = vpop.f32.mrb[0].mxu0
      %v1122 = vadd.f32 %v1017, %v1121
      %v1123 = vpop.f32.mrb[0].mxu0
      %v1124 = vpop.f32.mrb[0].mxu0
      %v1125 = vadd.f32 %v1017, %v1124
      %v1126 = vpop.f32.mrb[0].mxu0
      %1127 = vmatprep.mubr.bf16.mxu0 0
      %1128 = vmatmul.mubr.bf16.gmra.mrb[0].mxu0 %v1045
      %v1129 = vpop.f32.mrb[0].mxu0
      %v1130 = vadd.f32 %v1017, %v1129
      %v1131 = vpop.f32.mrb[0].mxu0
      %v1132 = vpop.f32.mrb[0].mxu0
      %v1133 = vadd.f32 %v1017, %v1132
      %v1134 = vpop.f32.mrb[0].mxu0
      %1135 = vmatprep.mubr.bf16.mxu0 0
      %1136 = vmatmul.mubr.bf16.gmra.mrb[0].mxu0 %v1047
      %v1137 = vpop.f32.mrb[0].mxu0
      %v1138 = vadd.f32 %v1017, %v1137
      %v1139 = vpop.f32.mrb[0].mxu0
      %v1140 = vpop.f32.mrb[0].mxu0
      %v1141 = vadd.f32 %v1017, %v1140
      %v1142 = vpop.f32.mrb[0].mxu0
      %1143 = vmatprep.mubr.bf16.mxu0 0
      %1144 = vmatmul.mubr.bf16.gmra.mrb[0].mxu0 %v1049
      %v1145 = vpop.f32.mrb[0].mxu0
      %v1146 = vadd.f32 %v1017, %v1145
      %v1147 = vpop.f32.mrb[0].mxu0
      %v1148 = vpop.f32.mrb[0].mxu0
      %v1149 = vadd.f32 %v1017, %v1148
      %v1150 = vpop.f32.mrb[0].mxu0
      %1151 = vdwg.mxu0
      %v1152 = vmax.f32 %v1090, 0.0
      %v1153 = vmax.f32 %v1093, 0.0
      %v1154 = vmax.f32 %v1098, 0.0
      %v1155 = vmax.f32 %v1101, 0.0
      %v1156 = vmax.f32 %v1106, 0.0
      %v1157 = vmax.f32 %v1109, 0.0
      %v1158 = vmax.f32 %v1114, 0.0
      %v1159 = vmax.f32 %v1117, 0.0
      %v1160 = vmax.f32 %v1122, 0.0
      %v1161 = vmax.f32 %v1125, 0.0
      %v1162 = vmax.f32 %v1130, 0.0
      %v1163 = vmax.f32 %v1133, 0.0
      %v1164 = vmax.f32 %v1138, 0.0
      %v1165 = vmax.f32 %v1141, 0.0
      %v1166 = vmax.f32 %v1146, 0.0
      %v1167 = vmax.f32 %v1149, 0.0
      %v1168 = vpack.c.bf16 %v1153, %v1152
      %v1169 = vpack.c.bf16 %v1155, %v1154
      %v1170 = vpack.c.bf16 %v1157, %v1156
      %v1171 = vpack.c.bf16 %v1159, %v1158
      %v1172 = vpack.c.bf16 %v1161, %v1160
      %v1173 = vpack.c.bf16 %v1163, %v1162
      %v1174 = vpack.c.bf16 %v1165, %v1164
      %v1175 = vpack.c.bf16 %v1167, %v1166
      %v1184 = vunpack.c.l.b16 %v1168
      %v1185 = vunpack.c.h.b16 %v1168
      %v1186 = vunpack.c.l.b16 %v1169
      %v1187 = vunpack.c.h.b16 %v1169
      %v1188 = vunpack.c.l.b16 %v1170
      %v1189 = vunpack.c.h.b16 %v1170
      %v1190 = vunpack.c.l.b16 %v1171
      %v1191 = vunpack.c.h.b16 %v1171
      %v1192 = vunpack.c.l.b16 %v1172
      %v1193 = vunpack.c.h.b16 %v1172
      %v1194 = vunpack.c.l.b16 %v1173
      %v1195 = vunpack.c.h.b16 %v1173
      %v1196 = vunpack.c.l.b16 %v1174
      %v1197 = vunpack.c.h.b16 %v1174
      %v1198 = vunpack.c.l.b16 %v1175
      %v1199 = vunpack.c.h.b16 %v1175
      %v1200 = vpack.c.b16 %v1184, %v1184
      %v1201 = vpack.c.b16 %v1185, %v1185
      %v1202 = vpack.c.b16 %v1186, %v1186
      %v1203 = vpack.c.b16 %v1187, %v1187
      %v1204 = vpack.c.b16 %v1188, %v1188
      %v1205 = vpack.c.b16 %v1189, %v1189
      %v1206 = vpack.c.b16 %v1190, %v1190
      %v1207 = vpack.c.b16 %v1191, %v1191
      %v1208 = vpack.c.b16 %v1192, %v1192
      %v1209 = vpack.c.b16 %v1193, %v1193
      %v1210 = vpack.c.b16 %v1194, %v1194
      %v1211 = vpack.c.b16 %v1195, %v1195
      %v1212 = vpack.c.b16 %v1196, %v1196
      %v1213 = vpack.c.b16 %v1197, %v1197
      %v1214 = vpack.c.b16 %v1198, %v1198
      %v1215 = vpack.c.b16 %v1199, %v1199
      %vm1232 = vcmask 125952
      %1233 = vst.msk [vmem:[%s389] sm:$0xf] %vm1232, %v1200
      %1234 = vst.msk [vmem:[%s389 + $0x4] sm:$0xf] %vm1232, %v1201
      %1235 = vst.msk [vmem:[%s389 + $0x8] sm:$0xf] %vm1232, %v1202
      %1236 = vst.msk [vmem:[%s389 + $0xc] sm:$0xf] %vm1232, %v1203
      %1237 = vst.msk [vmem:[%s389 + $0x10] sm:$0xf] %vm1232, %v1204
      %1238 = vst.msk [vmem:[%s389 + $0x14] sm:$0xf] %vm1232, %v1205
      %1239 = vst.msk [vmem:[%s389 + $0x18] sm:$0xf] %vm1232, %v1206
      %1240 = vst.msk [vmem:[%s389 + $0x1c] sm:$0xf] %vm1232, %v1207
      %1241 = vst.msk [vmem:[%s389 + $0x20] sm:$0xf] %vm1232, %v1208
      %1242 = vst.msk [vmem:[%s389 + $0x24] sm:$0xf] %vm1232, %v1209
      %1243 = vst.msk [vmem:[%s389 + $0x28] sm:$0xf] %vm1232, %v1210
      %1244 = vst.msk [vmem:[%s389 + $0x2c] sm:$0xf] %vm1232, %v1211
      %1245 = vst.msk [vmem:[%s389 + $0x30] sm:$0xf] %vm1232, %v1212
      %1246 = vst.msk [vmem:[%s389 + $0x34] sm:$0xf] %vm1232, %v1213
      %1247 = vst.msk [vmem:[%s389 + $0x38] sm:$0xf] %vm1232, %v1214
      %1248 = vst.msk [vmem:[%s389 + $0x3c] sm:$0xf] %vm1232, %v1215
      %s1249 = smul.u32 16, %s21
      %p1250 = scmp.lt.s32.totalorder %s20, 1
      %s1251 = scalar_select %p1250, %s20, 1
      %p1252 = scmp.lt.s32.totalorder %s1249, 31
      %s1253 = scalar_select %p1252, %s1249, 31
      %s1254 = smul.addr %s1251, 32
      %s1255 = sadd.s32 %s1253, %s1254
      %s1256 = smul.addr %s1255, 4
      %s1257 = scalar_lea.vmem %s5, %s1256
      // Predicated region
      $region41: #{a_call__.4} parent=39 // pred_check
        %p1258 = pneg %p190
      $region42: #{a_call__.4} parent=39 // pred_check_branch
        %1260 = sbr.rel (%p1258) target = $region44
      $region43: #{a_call__.4} parent=39 // pred_region
        %s1261 = smul.u32 16, %s21
      $region44: #{a_call__.4} parent=39 // pred_fallthru
        _
    $region40: #{a_call__.4} parent=5 // pred_fallthru
      _
    %p1262 = scmp.le.s32.totalorder 2, %s11
    // Predicated region
    $region45: #{a_call__.4} parent=5 // pred_check
      %p1263 = pneg %p1262
    $region46: #{a_call__.4} parent=5 // pred_check_branch
      %1265 = sbr.rel (%p1263) target = $region48
    $region47: #{a_call__.4} parent=5 // pred_region
      %s1266 = ssub.s32 %s11, 2
      // Predicated region
      $region49: #{a_call__.4} parent=47 // pred_check
        %p1267 = pneg %p196
      $region50: #{a_call__.4} parent=47 // pred_check_branch
        %1269 = sbr.rel (%p1267) target = $region52
      $region51: #{a_call__.4} parent=47 // pred_region
        %s1270 = smul.u32 16, %s23
        %p1271 = scmp.lt.s32.totalorder %s22, 1
        %s1272 = scalar_select %p1271, %s22, 1
        %p1273 = scmp.lt.s32.totalorder %s1270, 31
        %s1274 = scalar_select %p1273, %s1270, 31
        %s1275 = smul.addr %s1272, 32
        %s1276 = sadd.s32 %s1274, %s1275
        %s1277 = smul.addr %s1276, 4
        %s1278 = scalar_lea.vmem %s5, %s1277
      $region52: #{a_call__.4} parent=47 // pred_fallthru
        _
    $region48: #{a_call__.4} parent=5 // pred_fallthru
      _
  $region6: #{a_call__.4} parent=0 // loop_footer
    %s15 = sadd.s32 1, %s11
  $region7: #{a_call__.4} parent=0 // loop_footer_branch
    %10 = sbr.rel target = $region3
  $region8: #{a_call__.4} parent=0 // loop_exit
    _

</llo_original>
